<compile_context>
chip_gen: v6e
topology: v6e:2x2x1
jax: 0.10.0
libtpu: 0.0.40
codegen_flags: <defaults>
</compile_context>

<pallas_src>
import functools

import jax
import jax.numpy as jnp
from jax.experimental import pallas as pl
from jax.experimental.pallas import tpu as pltpu

# Tiler geometry for image_dim=64.
EDGE_LENGTH = 18
SPLIT_LENGTH = 21
GAP = SPLIT_LENGTH - EDGE_LENGTH          # 3
NUM_TILES = 9
FEAT = 3 * EDGE_LENGTH * EDGE_LENGTH      # 972
FEAT_PAD = 1024                           # lane-aligned per-tile feature width
SLAB_W = NUM_TILES * FEAT_PAD             # 9216, sample-major slab row width
HIDDEN = 1024                             # fc1 width
PERM_PAD = 128                            # lane-dense logits store
MAX_TM = 512                              # largest batch tile (v5e/v6e want big blocks)


def _cdiv(a, b):
    return -(-a // b)


def _round_up(a, b):
    return _cdiv(a, b) * b


# ----------------------------------------------------------------------------
# Fused kernel (one block of TM samples):
#   z_t = x_t @ w_enc                 per tile t   (bf16 MXU, f32 acc)
#   z   = concat_t(z_t)               sample-major == torch.cat(x_list, 1)
#   h   = relu(z @ w_fc1 + b_fc1')    b_fc1' already contains the folded b_enc
#   y   = h @ w_fc2 + b_fc2
# Everything between the input slab and the final logits stays on-chip.
# ----------------------------------------------------------------------------
def _fused_kernel(x_ref, we_ref, w1_ref, b1_ref, w2_ref, b2_ref, o_ref):
    # TODO(synk): consolidating the 9 encoder matmuls into one
    # (tm*9,1024)@(1024,32) matmul needs a (tm*9,32)->(tm,288) in-kernel
    # reshape whose Mosaic lowering is not guaranteed; keeping the unrolled
    # form fed by zero-cost lane-aligned views of the sample-major block.
    zs = []
    for t in range(NUM_TILES):                               # static unroll
        xt = x_ref[:, t * FEAT_PAD:(t + 1) * FEAT_PAD]       # (TM,1024) bf16 view
        zs.append(jnp.dot(xt, we_ref[...],
                          preferred_element_type=jnp.float32))
    z = jnp.concatenate(zs, axis=-1)                         # (TM, 9*code_dim) f32

    h = jnp.dot(z.astype(w1_ref.dtype), w1_ref[...],
                preferred_element_type=jnp.float32)
    h = jnp.maximum(h + b1_ref[...], 0.0)                    # fc1 + ReLU

    y = jnp.dot(h.astype(w2_ref.dtype), w2_ref[...],
                preferred_element_type=jnp.float32)
    o_ref[...] = (y + b2_ref[...]).astype(o_ref.dtype)


# ----------------------------------------------------------------------------
# Tiler (shuffle=False): 3x3 grid of 18x18 patches, flattened (CHW order),
# zero-padded 972 -> 1024 per tile and laid out sample-major / tile-minor.
# ----------------------------------------------------------------------------
def _extract_tiles(x, n_pad):
    """(N,3,64,64) -> (n_pad, 9*1024) bf16 slab, row m = [tile0 | ... | tile8]."""
    # TODO(synk): patch extraction kept as one XLA fusion; slicing 18x18 NCHW
    # windows + flatten inside the kernel would force heavy cross-(8,128)
    # relayouts in Mosaic for negligible DMA savings at these sizes.
    n = x.shape[0]
    x = x.astype(jnp.bfloat16)          # halve HBM read of the extraction fusion
    off = GAP // 2
    tiles = []
    for j in range(3):
        for k in range(3):
            r = j * SPLIT_LENGTH + off
            c = k * SPLIT_LENGTH + off
            patch = x[:, :, r:r + EDGE_LENGTH, c:c + EDGE_LENGTH]  # (N,3,18,18)
            patch = patch.reshape(n, FEAT)                         # CHW order
            tiles.append(jnp.pad(patch, ((0, 0), (0, FEAT_PAD - FEAT))))
    slab = jnp.concatenate(tiles, axis=1)                          # (N, 9216)
    slab = jnp.pad(slab, ((0, n_pad - n), (0, 0)))
    return slab


def _resident(arr):
    """Full-array block, identical for every grid step (VMEM-resident).

    NOTE: these constant-index blocks are never re-fetched; single-buffering
    them (pipeline_mode=pl.Buffered(1)) would reclaim ~1 MiB VMEM, but that is
    not load-bearing at the chosen tile sizes (<~26 MiB total), so we keep the
    default pipelining for lowering safety.
    """
    nd = arr.ndim
    return pl.BlockSpec(arr.shape, lambda i: (0,) * nd)


# ----------------------------------------------------------------------------
# Parameter init (deterministic, synthetic).  Weights stored bf16 for the MXU,
# biases f32.  w_enc rows / w_fc2+b_fc2 cols are zero-padded for alignment.
# ----------------------------------------------------------------------------
def init_params(key, code_dim=32, num_perms=16):
    k1, k2, k3, k4, k5, k6 = jax.random.split(key, 6)
    w_enc = jax.random.normal(k1, (FEAT, code_dim), jnp.float32) / jnp.sqrt(float(FEAT))
    w_enc = jnp.pad(w_enc, ((0, FEAT_PAD - FEAT), (0, 0)))
    w_fc1 = (jax.random.normal(k2, (NUM_TILES * code_dim, HIDDEN), jnp.float32)
             / jnp.sqrt(float(NUM_TILES * code_dim)))
    w_fc2 = (jax.random.normal(k4, (HIDDEN, num_perms), jnp.float32)
             / jnp.sqrt(float(HIDDEN)))
    w_fc2 = jnp.pad(w_fc2, ((0, 0), (0, PERM_PAD - num_perms)))
    b_fc2 = jnp.pad(jax.random.normal(k5, (1, num_perms), jnp.float32) * 0.01,
                    ((0, 0), (0, PERM_PAD - num_perms)))
    return {
        "w_enc": w_enc.astype(jnp.bfloat16),
        "b_enc": jax.random.normal(k6, (1, code_dim), jnp.float32) * 0.01,
        "w_fc1": w_fc1.astype(jnp.bfloat16),
        "b_fc1": jax.random.normal(k3, (1, HIDDEN), jnp.float32) * 0.01,
        "w_fc2": w_fc2.astype(jnp.bfloat16),
        "b_fc2": b_fc2,
    }


# ----------------------------------------------------------------------------
# JigsawModel.forward (shuffle=False, return_layer=7)
# ----------------------------------------------------------------------------
@functools.partial(jax.jit, static_argnames=("num_perms",))
def jigsaw_forward(x, params, *, num_perms):
    n = x.shape[0]
    code_dim = params["w_enc"].shape[1]

    # Batch tiling: >=2 blocks and an even block count so v7x's two
    # TensorCores (sharded over the "parallel" axis) both stay busy; blocks
    # equalized (avoids up-to-(tm-1)-row padding on unlucky batch sizes) and
    # as large as possible (<=512 rows) for the HBM-bound v5e/v6e path.
    n_blocks = max(2, _cdiv(n, MAX_TM))
    if n_blocks % 2:
        n_blocks += 1
    tm = _round_up(_cdiv(n, n_blocks), 8)
    n_pad = n_blocks * tm

    slab = _extract_tiles(x, n_pad)          # (n_pad, 9216) bf16, sample-major

    # Fold the encoder bias into fc1's bias:
    #   fc1(concat_t(x_t @ We + be)) == concat_t(x_t @ We) @ W1 + (tile9(be) @ W1 + b1)
    b1_eff = params["b_fc1"] + jnp.dot(
        jnp.tile(params["b_enc"], (1, NUM_TILES)),
        params["w_fc1"].astype(jnp.float32))

    flops = int(2 * n_pad * (NUM_TILES * FEAT_PAD * code_dim
                             + NUM_TILES * code_dim * HIDDEN
                             + HIDDEN * PERM_PAD))
    bytes_accessed = int(
        n_pad * SLAB_W * 2                          # input slab (bf16)
        + FEAT_PAD * code_dim * 2                   # w_enc
        + NUM_TILES * code_dim * HIDDEN * 2         # w_fc1
        + HIDDEN * PERM_PAD * 2                     # w_fc2
        + (HIDDEN + PERM_PAD) * 4                   # biases
        + n_pad * PERM_PAD * 4)                     # logits

    logits_padded = pl.pallas_call(
        _fused_kernel,
        out_shape=jax.ShapeDtypeStruct((n_pad, PERM_PAD), jnp.float32),
        grid=(n_blocks,),
        in_specs=[
            pl.BlockSpec((tm, SLAB_W), lambda i: (i, 0)),   # contiguous slab block
            _resident(params["w_enc"]),
            _resident(params["w_fc1"]),
            _resident(b1_eff),
            _resident(params["w_fc2"]),
            _resident(params["b_fc2"]),
        ],
        out_specs=pl.BlockSpec((tm, PERM_PAD), lambda i: (i, 0)),
        compiler_params=pltpu.CompilerParams(
            dimension_semantics=("parallel",),
            vmem_limit_bytes=64 * 1024 * 1024),
        cost_estimate=pl.CostEstimate(
            flops=flops, transcendentals=0, bytes_accessed=bytes_accessed),
    )(slab, params["w_enc"], params["w_fc1"], b1_eff,
      params["w_fc2"], params["b_fc2"])

    return logits_padded[:n, :num_perms]


if __name__ == "__main__":
    key = jax.random.PRNGKey(0)
    kx, kp = jax.random.split(key)

    batch, channels, image_dim = 2, 3, 64
    code_dim, num_perms = 32, 16

    x = jax.random.normal(kx, (batch, channels, image_dim, image_dim),
                          jnp.float32)
    params = init_params(kp, code_dim=code_dim, num_perms=num_perms)

    out = jigsaw_forward(x, params, num_perms=num_perms)
    out = jax.block_until_ready(out)
    assert out.shape == (batch, num_perms), out.shape
    assert bool(jnp.all(jnp.isfinite(out)))
    print("KERNEL_OK")
</pallas_src>

<mosaic_0001>
module attributes {stable_mosaic.version = 11 : i64} {
  func.func @_fused_kernel(%arg0: i32, %arg1: memref<8x9216xbf16, #tpu.memory_space<vmem>>, %arg2: memref<1024x32xbf16, #tpu.memory_space<vmem>>, %arg3: memref<288x1024xbf16, #tpu.memory_space<vmem>>, %arg4: memref<1x1024xf32, #tpu.memory_space<vmem>>, %arg5: memref<1024x128xbf16, #tpu.memory_space<vmem>>, %arg6: memref<1x128xf32, #tpu.memory_space<vmem>>, %arg7: memref<8x128xf32, #tpu.memory_space<vmem>>) attributes {dimension_semantics = [#tpu.dimension_semantics<parallel>], iteration_bounds = array<i64: 2>, scalar_prefetch = 0 : i64, scratch_operands = 0 : i64, tpu.core_type = #tpu.core_type<tc>, window_params = [{transform_indices = @transform_0, window_bounds = array<i64: 8, 9216>}, {pipeline_mode = #tpu.pipeline_mode<synchronous>, transform_indices = @transform_1, window_bounds = array<i64: 1024, 32>}, {pipeline_mode = #tpu.pipeline_mode<synchronous>, transform_indices = @transform_2, window_bounds = array<i64: 288, 1024>}, {pipeline_mode = #tpu.pipeline_mode<synchronous>, transform_indices = @transform_3, window_bounds = array<i64: 1, 1024>}, {pipeline_mode = #tpu.pipeline_mode<synchronous>, transform_indices = @transform_4, window_bounds = array<i64: 1024, 128>}, {pipeline_mode = #tpu.pipeline_mode<synchronous>, transform_indices = @transform_5, window_bounds = array<i64: 1, 128>}, {transform_indices = @transform_6, window_bounds = array<i64: 8, 128>}]} {
    %c0 = arith.constant 0 : index
    %c0_0 = arith.constant 0 : index
    %0 = vector.load %arg1[%c0, %c0_0] : memref<8x9216xbf16, #tpu.memory_space<vmem>>, vector<8x1024xbf16>
    %c0_1 = arith.constant 0 : index
    %c0_2 = arith.constant 0 : index
    %1 = vector.load %arg2[%c0_1, %c0_2] : memref<1024x32xbf16, #tpu.memory_space<vmem>>, vector<1024x32xbf16>
    %cst = arith.constant dense<0.000000e+00> : vector<8x32xf32>
    %2 = tpu.matmul %0, %1, %cst {dimension_numbers = #tpu.dot_dimension_numbers<[1], [0], [0], [1], [0, 0, 1, 1], [], []>} : vector<8x1024xbf16>, vector<1024x32xbf16>, vector<8x32xf32> -> vector<8x32xf32>
    %c0_3 = arith.constant 0 : index
    %c1024 = arith.constant 1024 : index
    %3 = vector.load %arg1[%c0_3, %c1024] : memref<8x9216xbf16, #tpu.memory_space<vmem>>, vector<8x1024xbf16>
    %c0_4 = arith.constant 0 : index
    %c0_5 = arith.constant 0 : index
    %4 = vector.load %arg2[%c0_4, %c0_5] : memref<1024x32xbf16, #tpu.memory_space<vmem>>, vector<1024x32xbf16>
    %cst_6 = arith.constant dense<0.000000e+00> : vector<8x32xf32>
    %5 = tpu.matmul %3, %4, %cst_6 {dimension_numbers = #tpu.dot_dimension_numbers<[1], [0], [0], [1], [0, 0, 1, 1], [], []>} : vector<8x1024xbf16>, vector<1024x32xbf16>, vector<8x32xf32> -> vector<8x32xf32>
    %c0_7 = arith.constant 0 : index
    %c2048 = arith.constant 2048 : index
    %6 = vector.load %arg1[%c0_7, %c2048] : memref<8x9216xbf16, #tpu.memory_space<vmem>>, vector<8x1024xbf16>
    %c0_8 = arith.constant 0 : index
    %c0_9 = arith.constant 0 : index
    %7 = vector.load %arg2[%c0_8, %c0_9] : memref<1024x32xbf16, #tpu.memory_space<vmem>>, vector<1024x32xbf16>
    %cst_10 = arith.constant dense<0.000000e+00> : vector<8x32xf32>
    %8 = tpu.matmul %6, %7, %cst_10 {dimension_numbers = #tpu.dot_dimension_numbers<[1], [0], [0], [1], [0, 0, 1, 1], [], []>} : vector<8x1024xbf16>, vector<1024x32xbf16>, vector<8x32xf32> -> vector<8x32xf32>
    %c0_11 = arith.constant 0 : index
    %c3072 = arith.constant 3072 : index
    %9 = vector.load %arg1[%c0_11, %c3072] : memref<8x9216xbf16, #tpu.memory_space<vmem>>, vector<8x1024xbf16>
    %c0_12 = arith.constant 0 : index
    %c0_13 = arith.constant 0 : index
    %10 = vector.load %arg2[%c0_12, %c0_13] : memref<1024x32xbf16, #tpu.memory_space<vmem>>, vector<1024x32xbf16>
    %cst_14 = arith.constant dense<0.000000e+00> : vector<8x32xf32>
    %11 = tpu.matmul %9, %10, %cst_14 {dimension_numbers = #tpu.dot_dimension_numbers<[1], [0], [0], [1], [0, 0, 1, 1], [], []>} : vector<8x1024xbf16>, vector<1024x32xbf16>, vector<8x32xf32> -> vector<8x32xf32>
    %c0_15 = arith.constant 0 : index
    %c4096 = arith.constant 4096 : index
    %12 = vector.load %arg1[%c0_15, %c4096] : memref<8x9216xbf16, #tpu.memory_space<vmem>>, vector<8x1024xbf16>
    %c0_16 = arith.constant 0 : index
    %c0_17 = arith.constant 0 : index
    %13 = vector.load %arg2[%c0_16, %c0_17] : memref<1024x32xbf16, #tpu.memory_space<vmem>>, vector<1024x32xbf16>
    %cst_18 = arith.constant dense<0.000000e+00> : vector<8x32xf32>
    %14 = tpu.matmul %12, %13, %cst_18 {dimension_numbers = #tpu.dot_dimension_numbers<[1], [0], [0], [1], [0, 0, 1, 1], [], []>} : vector<8x1024xbf16>, vector<1024x32xbf16>, vector<8x32xf32> -> vector<8x32xf32>
    %c0_19 = arith.constant 0 : index
    %c5120 = arith.constant 5120 : index
    %15 = vector.load %arg1[%c0_19, %c5120] : memref<8x9216xbf16, #tpu.memory_space<vmem>>, vector<8x1024xbf16>
    %c0_20 = arith.constant 0 : index
    %c0_21 = arith.constant 0 : index
    %16 = vector.load %arg2[%c0_20, %c0_21] : memref<1024x32xbf16, #tpu.memory_space<vmem>>, vector<1024x32xbf16>
    %cst_22 = arith.constant dense<0.000000e+00> : vector<8x32xf32>
    %17 = tpu.matmul %15, %16, %cst_22 {dimension_numbers = #tpu.dot_dimension_numbers<[1], [0], [0], [1], [0, 0, 1, 1], [], []>} : vector<8x1024xbf16>, vector<1024x32xbf16>, vector<8x32xf32> -> vector<8x32xf32>
    %c0_23 = arith.constant 0 : index
    %c6144 = arith.constant 6144 : index
    %18 = vector.load %arg1[%c0_23, %c6144] : memref<8x9216xbf16, #tpu.memory_space<vmem>>, vector<8x1024xbf16>
    %c0_24 = arith.constant 0 : index
    %c0_25 = arith.constant 0 : index
    %19 = vector.load %arg2[%c0_24, %c0_25] : memref<1024x32xbf16, #tpu.memory_space<vmem>>, vector<1024x32xbf16>
    %cst_26 = arith.constant dense<0.000000e+00> : vector<8x32xf32>
    %20 = tpu.matmul %18, %19, %cst_26 {dimension_numbers = #tpu.dot_dimension_numbers<[1], [0], [0], [1], [0, 0, 1, 1], [], []>} : vector<8x1024xbf16>, vector<1024x32xbf16>, vector<8x32xf32> -> vector<8x32xf32>
    %c0_27 = arith.constant 0 : index
    %c7168 = arith.constant 7168 : index
    %21 = vector.load %arg1[%c0_27, %c7168] : memref<8x9216xbf16, #tpu.memory_space<vmem>>, vector<8x1024xbf16>
    %c0_28 = arith.constant 0 : index
    %c0_29 = arith.constant 0 : index
    %22 = vector.load %arg2[%c0_28, %c0_29] : memref<1024x32xbf16, #tpu.memory_space<vmem>>, vector<1024x32xbf16>
    %cst_30 = arith.constant dense<0.000000e+00> : vector<8x32xf32>
    %23 = tpu.matmul %21, %22, %cst_30 {dimension_numbers = #tpu.dot_dimension_numbers<[1], [0], [0], [1], [0, 0, 1, 1], [], []>} : vector<8x1024xbf16>, vector<1024x32xbf16>, vector<8x32xf32> -> vector<8x32xf32>
    %c0_31 = arith.constant 0 : index
    %c8192 = arith.constant 8192 : index
    %24 = vector.load %arg1[%c0_31, %c8192] : memref<8x9216xbf16, #tpu.memory_space<vmem>>, vector<8x1024xbf16>
    %c0_32 = arith.constant 0 : index
    %c0_33 = arith.constant 0 : index
    %25 = vector.load %arg2[%c0_32, %c0_33] : memref<1024x32xbf16, #tpu.memory_space<vmem>>, vector<1024x32xbf16>
    %cst_34 = arith.constant dense<0.000000e+00> : vector<8x32xf32>
    %26 = tpu.matmul %24, %25, %cst_34 {dimension_numbers = #tpu.dot_dimension_numbers<[1], [0], [0], [1], [0, 0, 1, 1], [], []>} : vector<8x1024xbf16>, vector<1024x32xbf16>, vector<8x32xf32> -> vector<8x32xf32>
    %27 = tpu.concatenate %2, %5, %8, %11, %14, %17, %20, %23, %26 in 1 : vector<8x32xf32>, vector<8x32xf32>, vector<8x32xf32>, vector<8x32xf32>, vector<8x32xf32>, vector<8x32xf32>, vector<8x32xf32>, vector<8x32xf32>, vector<8x32xf32> -> vector<8x288xf32>
    %28 = arith.truncf %27 : vector<8x288xf32> to vector<8x288xbf16>
    %c0_35 = arith.constant 0 : index
    %c0_36 = arith.constant 0 : index
    %29 = vector.load %arg3[%c0_35, %c0_36] : memref<288x1024xbf16, #tpu.memory_space<vmem>>, vector<288x1024xbf16>
    %cst_37 = arith.constant dense<0.000000e+00> : vector<8x1024xf32>
    %30 = tpu.matmul %28, %29, %cst_37 {dimension_numbers = #tpu.dot_dimension_numbers<[1], [0], [0], [1], [0, 0, 1, 1], [], []>} : vector<8x288xbf16>, vector<288x1024xbf16>, vector<8x1024xf32> -> vector<8x1024xf32>
    %c0_38 = arith.constant 0 : index
    %c0_39 = arith.constant 0 : index
    %31 = vector.load %arg4[%c0_38, %c0_39] : memref<1x1024xf32, #tpu.memory_space<vmem>>, vector<1x1024xf32>
    %32 = vector.broadcast %31 : vector<1x1024xf32> to vector<8x1024xf32>
    %33 = arith.addf %30, %32 : vector<8x1024xf32>
    %cst_40 = arith.constant 0.000000e+00 : f32
    %34 = vector.broadcast %cst_40 : f32 to vector<8x1024xf32>
    %35 = arith.maximumf %33, %34 : vector<8x1024xf32>
    %36 = arith.truncf %35 : vector<8x1024xf32> to vector<8x1024xbf16>
    %c0_41 = arith.constant 0 : index
    %c0_42 = arith.constant 0 : index
    %37 = vector.load %arg5[%c0_41, %c0_42] : memref<1024x128xbf16, #tpu.memory_space<vmem>>, vector<1024x128xbf16>
    %cst_43 = arith.constant dense<0.000000e+00> : vector<8x128xf32>
    %38 = tpu.matmul %36, %37, %cst_43 {dimension_numbers = #tpu.dot_dimension_numbers<[1], [0], [0], [1], [0, 0, 1, 1], [], []>} : vector<8x1024xbf16>, vector<1024x128xbf16>, vector<8x128xf32> -> vector<8x128xf32>
    %c0_44 = arith.constant 0 : index
    %c0_45 = arith.constant 0 : index
    %39 = vector.load %arg6[%c0_44, %c0_45] : memref<1x128xf32, #tpu.memory_space<vmem>>, vector<1x128xf32>
    %40 = vector.broadcast %39 : vector<1x128xf32> to vector<8x128xf32>
    %41 = arith.addf %38, %40 : vector<8x128xf32>
    %c0_46 = arith.constant 0 : index
    %c0_47 = arith.constant 0 : index
    %42 = vector.load %arg7[%c0_46, %c0_47] : memref<8x128xf32, #tpu.memory_space<vmem>>, vector<8x128xf32>
    tpu.vector_store %arg7[%c0_46, %c0_47], %41 {strides = array<i32>} : memref<8x128xf32, #tpu.memory_space<vmem>>, vector<8x128xf32>,
    return
  }
  func.func @transform_0(%arg0: i32) -> (i32, i32) {
    %c0_i32 = arith.constant 0 : i32
    %c0_i32_0 = arith.constant 0 : i32
    return %arg0, %c0_i32 : i32, i32
  }
  func.func @transform_1(%arg0: i32) -> (i32, i32) {
    %c0_i32 = arith.constant 0 : i32
    %c0_i32_0 = arith.constant 0 : i32
    %c0_i32_1 = arith.constant 0 : i32
    return %c0_i32, %c0_i32_0 : i32, i32
  }
  func.func @transform_2(%arg0: i32) -> (i32, i32) {
    %c0_i32 = arith.constant 0 : i32
    %c0_i32_0 = arith.constant 0 : i32
    %c0_i32_1 = arith.constant 0 : i32
    return %c0_i32, %c0_i32_0 : i32, i32
  }
  func.func @transform_3(%arg0: i32) -> (i32, i32) {
    %c0_i32 = arith.constant 0 : i32
    %c0_i32_0 = arith.constant 0 : i32
    %c0_i32_1 = arith.constant 0 : i32
    return %c0_i32, %c0_i32_0 : i32, i32
  }
  func.func @transform_4(%arg0: i32) -> (i32, i32) {
    %c0_i32 = arith.constant 0 : i32
    %c0_i32_0 = arith.constant 0 : i32
    %c0_i32_1 = arith.constant 0 : i32
    return %c0_i32, %c0_i32_0 : i32, i32
  }
  func.func @transform_5(%arg0: i32) -> (i32, i32) {
    %c0_i32 = arith.constant 0 : i32
    %c0_i32_0 = arith.constant 0 : i32
    %c0_i32_1 = arith.constant 0 : i32
    return %c0_i32, %c0_i32_0 : i32, i32
  }
  func.func @transform_6(%arg0: i32) -> (i32, i32) {
    %c0_i32 = arith.constant 0 : i32
    %c0_i32_0 = arith.constant 0 : i32
    return %arg0, %c0_i32 : i32, i32
  }
}

</mosaic_0001>

<llo_original>
// kernel: jigsaw_forward.1
$region0: #{jigsaw_forward.1}
  #allocation0 [shape = 'u32[]', space=smem, size = 0x4, offset = 0x4, fixed_abs, tag = 'smem constant byte address 0x4 - core index']
  #allocation1 [shape = 'u32[144,128]{1,0:T(1,128)}', space=vmem, size = 0x12000, scoped, tag = 'internal scratch']
  %s0 = inlined_call_operand.vmem [shape: bf16[16,9216], index: 0, kind: input, shape index: {}]
  %s1 = inlined_call_operand.vmem [shape: bf16[1024,32], index: 1, kind: input, shape index: {}]
  %s2 = inlined_call_operand.vmem [shape: bf16[288,1024], index: 2, kind: input, shape index: {}]
  %s3 = inlined_call_operand.vmem [shape: f32[1,1024], index: 3, kind: input, shape index: {}]
  %s4 = inlined_call_operand.vmem [shape: bf16[1024,128], index: 4, kind: input, shape index: {}]
  %s5 = inlined_call_operand.vmem [shape: f32[1,128], index: 5, kind: input, shape index: {}]
  %s6 = inlined_call_operand.vmem [shape: f32[16,128], index: 6, kind: output, shape index: {}]
  %s7 = sld [smem:[#allocation0]]
  $region57: #{jigsaw_forward.1} parent=0
    _
  %s9 = ssub.s32 1, %s7
  %s10 = scalar_select 0, %s9, %s7
  loop: start=0, step=1, limit=4
  $region2: #{jigsaw_forward.1} parent=0 // loop_pre_header
    _
  $region3: #{jigsaw_forward.1} parent=0 // loop_header
    %s12 = sphi 0, %s16
    %p13 = scmp.ge.s32.totalorder %s12, 4
    %s22 = sphi 0, %s24
    %s25 = sphi 0, %s22
    %s26 = sphi 0, %s25
    %s42 = sphi 0, %s26
    %s46 = sphi 0, %s46
    %s48 = sphi 0, %s46
    %s49 = sphi 0, %s48
    %s63 = sphi 0, %s49
    %s67 = sphi 0, %s67
    %s69 = sphi 0, %s67
    %s70 = sphi 0, %s69
    %s84 = sphi 0, %s70
    %s88 = sphi 0, %s88
    %s90 = sphi 0, %s88
    %s91 = sphi 0, %s90
    %s105 = sphi 0, %s91
    %s109 = sphi 0, %s109
    %s111 = sphi 0, %s109
    %s112 = sphi 0, %s111
    %s126 = sphi 0, %s112
    %s130 = sphi 0, %s130
    %s132 = sphi 0, %s130
    %s133 = sphi 0, %s132
    %s147 = sphi 0, %s133
    %s153 = sphi 0, %s155
    %s156 = sphi 0, %s153
    %s157 = sphi 0, %s156
    %s173 = sphi 0, %s157
  $region4: #{jigsaw_forward.1} parent=0 // loop_header_branch
    %15 = sbr.rel (%p13) target = $region8
  $region5: #{jigsaw_forward.1} parent=0 // loop_body
    %s17 = ssub.s32 %s12, 1
    %s18 = ssub.s32 %s12, 2
    %s19 = sadd.s32 %s12, 1
    %s20 = ssub.s32 %s12, %s19
    %p21 = scmp.eq.s32.totalorder %s20, 0
    %s23 = sadd.s32 %s22, 1
    %s24 = scalar_select %p21, %s22, %s23
    %p27 = pneg %p21
    %p28 = scmp.eq.s32.totalorder %s12, 1
    %p29 = por %p27, %p28
    %p30 = scmp.ne.s32.totalorder %s22, %s25
    %p31 = scmp.eq.s32.totalorder %s12, 0
    %p32 = por %p30, %p31
    %p33 = scmp.ne.s32.totalorder %s22, %s25
    %p34 = scmp.eq.s32.totalorder %s17, 1
    %p35 = por %p33, %p34
    %p36 = scmp.ne.s32.totalorder %s25, %s26
    %p37 = scmp.eq.s32.totalorder %s17, 0
    %p38 = por %p36, %p37
    %p39 = scmp.ne.s32.totalorder %s25, %s26
    %p40 = scmp.eq.s32.totalorder %s18, 1
    %p41 = por %p39, %p40
    %p43 = scmp.ne.s32.totalorder %s26, %s42
    %p44 = scmp.eq.s32.totalorder %s18, 0
    %p45 = por %p43, %p44
    %s47 = sadd.s32 %s46, 1
    %p50 = scmp.eq.s32.totalorder %s12, 1
    %p51 = scmp.ne.s32.totalorder %s46, %s48
    %p52 = scmp.eq.s32.totalorder %s12, 0
    %p53 = por %p51, %p52
    %p54 = scmp.ne.s32.totalorder %s46, %s48
    %p55 = scmp.eq.s32.totalorder %s17, 1
    %p56 = por %p54, %p55
    %p57 = scmp.ne.s32.totalorder %s48, %s49
    %p58 = scmp.eq.s32.totalorder %s17, 0
    %p59 = por %p57, %p58
    %p60 = scmp.ne.s32.totalorder %s48, %s49
    %p61 = scmp.eq.s32.totalorder %s18, 1
    %p62 = por %p60, %p61
    %p64 = scmp.ne.s32.totalorder %s49, %s63
    %p65 = scmp.eq.s32.totalorder %s18, 0
    %p66 = por %p64, %p65
    %s68 = sadd.s32 %s67, 1
    %p71 = scmp.eq.s32.totalorder %s12, 1
    %p72 = scmp.ne.s32.totalorder %s67, %s69
    %p73 = scmp.eq.s32.totalorder %s12, 0
    %p74 = por %p72, %p73
    %p75 = scmp.ne.s32.totalorder %s67, %s69
    %p76 = scmp.eq.s32.totalorder %s17, 1
    %p77 = por %p75, %p76
    %p78 = scmp.ne.s32.totalorder %s69, %s70
    %p79 = scmp.eq.s32.totalorder %s17, 0
    %p80 = por %p78, %p79
    %p81 = scmp.ne.s32.totalorder %s69, %s70
    %p82 = scmp.eq.s32.totalorder %s18, 1
    %p83 = por %p81, %p82
    %p85 = scmp.ne.s32.totalorder %s70, %s84
    %p86 = scmp.eq.s32.totalorder %s18, 0
    %p87 = por %p85, %p86
    %s89 = sadd.s32 %s88, 1
    %p92 = scmp.eq.s32.totalorder %s12, 1
    %p93 = scmp.ne.s32.totalorder %s88, %s90
    %p94 = scmp.eq.s32.totalorder %s12, 0
    %p95 = por %p93, %p94
    %p96 = scmp.ne.s32.totalorder %s88, %s90
    %p97 = scmp.eq.s32.totalorder %s17, 1
    %p98 = por %p96, %p97
    %p99 = scmp.ne.s32.totalorder %s90, %s91
    %p100 = scmp.eq.s32.totalorder %s17, 0
    %p101 = por %p99, %p100
    %p102 = scmp.ne.s32.totalorder %s90, %s91
    %p103 = scmp.eq.s32.totalorder %s18, 1
    %p104 = por %p102, %p103
    %p106 = scmp.ne.s32.totalorder %s91, %s105
    %p107 = scmp.eq.s32.totalorder %s18, 0
    %p108 = por %p106, %p107
    %s110 = sadd.s32 %s109, 1
    %p113 = scmp.eq.s32.totalorder %s12, 1
    %p114 = scmp.ne.s32.totalorder %s109, %s111
    %p115 = scmp.eq.s32.totalorder %s12, 0
    %p116 = por %p114, %p115
    %p117 = scmp.ne.s32.totalorder %s109, %s111
    %p118 = scmp.eq.s32.totalorder %s17, 1
    %p119 = por %p117, %p118
    %p120 = scmp.ne.s32.totalorder %s111, %s112
    %p121 = scmp.eq.s32.totalorder %s17, 0
    %p122 = por %p120, %p121
    %p123 = scmp.ne.s32.totalorder %s111, %s112
    %p124 = scmp.eq.s32.totalorder %s18, 1
    %p125 = por %p123, %p124
    %p127 = scmp.ne.s32.totalorder %s112, %s126
    %p128 = scmp.eq.s32.totalorder %s18, 0
    %p129 = por %p127, %p128
    %s131 = sadd.s32 %s130, 1
    %p134 = scmp.eq.s32.totalorder %s12, 1
    %p135 = scmp.ne.s32.totalorder %s130, %s132
    %p136 = scmp.eq.s32.totalorder %s12, 0
    %p137 = por %p135, %p136
    %p138 = scmp.ne.s32.totalorder %s130, %s132
    %p139 = scmp.eq.s32.totalorder %s17, 1
    %p140 = por %p138, %p139
    %p141 = scmp.ne.s32.totalorder %s132, %s133
    %p142 = scmp.eq.s32.totalorder %s17, 0
    %p143 = por %p141, %p142
    %p144 = scmp.ne.s32.totalorder %s132, %s133
    %p145 = scmp.eq.s32.totalorder %s18, 1
    %p146 = por %p144, %p145
    %p148 = scmp.ne.s32.totalorder %s133, %s147
    %p149 = scmp.eq.s32.totalorder %s18, 0
    %p150 = por %p148, %p149
    %s151 = ssub.s32 %s12, %s19
    %p152 = scmp.eq.s32.totalorder %s151, 0
    %s154 = sadd.s32 %s153, 1
    %s155 = scalar_select %p152, %s153, %s154
    %p158 = pneg %p152
    %p159 = scmp.eq.s32.totalorder %s12, 1
    %p160 = por %p158, %p159
    %p161 = scmp.ne.s32.totalorder %s153, %s156
    %p162 = scmp.eq.s32.totalorder %s12, 0
    %p163 = por %p161, %p162
    %p164 = scmp.ne.s32.totalorder %s153, %s156
    %p165 = scmp.eq.s32.totalorder %s17, 1
    %p166 = por %p164, %p165
    %p167 = scmp.ne.s32.totalorder %s156, %s157
    %p168 = scmp.eq.s32.totalorder %s17, 0
    %p169 = por %p167, %p168
    %p170 = scmp.ne.s32.totalorder %s156, %s157
    %p171 = scmp.eq.s32.totalorder %s18, 1
    %p172 = por %p170, %p171
    %p174 = scmp.ne.s32.totalorder %s157, %s173
    %p175 = scmp.eq.s32.totalorder %s18, 0
    %p176 = por %p174, %p175
    %p177 = scmp.le.s32.totalorder 1, %s12
    %p178 = scmp.lt.s32.totalorder %s12, 3
    %p179 = pnand %p177, %p178
    %p180 = pneg %p179
    // Predicated region
    $region9: #{jigsaw_forward.1} parent=5 // pred_check
      _
    $region10: #{jigsaw_forward.1} parent=5 // pred_check_branch
      %182 = sbr.rel (%p179) target = $region12
    $region11: #{jigsaw_forward.1} parent=5 // pred_region
      %s183 = ssub.s32 %s12, 1
      // Predicated region
      $region13: #{jigsaw_forward.1} parent=11 // pred_check
        %p184 = pneg %p59
      $region14: #{jigsaw_forward.1} parent=11 // pred_check_branch
        %186 = sbr.rel (%p184) target = $region16
      $region15: #{jigsaw_forward.1} parent=11 // pred_region
        _
      $region16: #{jigsaw_forward.1} parent=11 // pred_fallthru
        _
      // Predicated region
      $region17: #{jigsaw_forward.1} parent=11 // pred_check
        %p187 = pneg %p80
      $region18: #{jigsaw_forward.1} parent=11 // pred_check_branch
        %189 = sbr.rel (%p187) target = $region20
      $region19: #{jigsaw_forward.1} parent=11 // pred_region
        _
      $region20: #{jigsaw_forward.1} parent=11 // pred_fallthru
        _
      // Predicated region
      $region21: #{jigsaw_forward.1} parent=11 // pred_check
        %p190 = pneg %p101
      $region22: #{jigsaw_forward.1} parent=11 // pred_check_branch
        %192 = sbr.rel (%p190) target = $region24
      $region23: #{jigsaw_forward.1} parent=11 // pred_region
        _
      $region24: #{jigsaw_forward.1} parent=11 // pred_fallthru
        _
      // Predicated region
      $region25: #{jigsaw_forward.1} parent=11 // pred_check
        %p193 = pneg %p122
      $region26: #{jigsaw_forward.1} parent=11 // pred_check_branch
        %195 = sbr.rel (%p193) target = $region28
      $region27: #{jigsaw_forward.1} parent=11 // pred_region
        _
      $region28: #{jigsaw_forward.1} parent=11 // pred_fallthru
        _
      // Predicated region
      $region29: #{jigsaw_forward.1} parent=11 // pred_check
        %p196 = pneg %p143
      $region30: #{jigsaw_forward.1} parent=11 // pred_check_branch
        %198 = sbr.rel (%p196) target = $region32
      $region31: #{jigsaw_forward.1} parent=11 // pred_region
        _
      $region32: #{jigsaw_forward.1} parent=11 // pred_fallthru
        _
    $region12: #{jigsaw_forward.1} parent=5 // pred_fallthru
      _
    %p199 = scmp.lt.s32.totalorder %s12, 2
    // Predicated region
    $region33: #{jigsaw_forward.1} parent=5 // pred_check
      %p200 = pneg %p199
    $region34: #{jigsaw_forward.1} parent=5 // pred_check_branch
      %202 = sbr.rel (%p200) target = $region36
    $region35: #{jigsaw_forward.1} parent=5 // pred_region
      // Predicated region
      $region37: #{jigsaw_forward.1} parent=35 // pred_check
        %p203 = pneg %p32
      $region38: #{jigsaw_forward.1} parent=35 // pred_check_branch
        %205 = sbr.rel (%p203) target = $region40
      $region39: #{jigsaw_forward.1} parent=35 // pred_region
        %p206 = scmp.lt.s32.totalorder %s12, 1
        %s207 = scalar_select %p206, %s12, 1
        %s208 = smul.addr %s207, 72
        %s209 = smul.addr %s208, 4
        %s210 = scalar_lea.vmem %s0, %s209
      $region40: #{jigsaw_forward.1} parent=35 // pred_fallthru
        _
    $region36: #{jigsaw_forward.1} parent=5 // pred_fallthru
      _
    %p211 = scmp.le.s32.totalorder 1, %s12
    %p212 = scmp.lt.s32.totalorder %s12, 3
    %p213 = pnand %p211, %p212
    %p214 = pneg %p213
    // Predicated region
    $region41: #{jigsaw_forward.1} parent=5 // pred_check
      _
    $region42: #{jigsaw_forward.1} parent=5 // pred_check_branch
      %216 = sbr.rel (%p213) target = $region44
    $region43: #{jigsaw_forward.1} parent=5 // pred_region
      %s217 = ssub.s32 %s12, 1
      %p218 = scmp.lt.s32.totalorder %s17, 1
      %s219 = scalar_select %p218, %s17, 1
      %s220 = smul.addr %s219, 72
      %s221 = smul.addr %s220, 4
      %s222 = scalar_lea.vmem %s0, %s221
      %p223 = pneg %p38
      %p224 = pneg %p35
      %p225 = pneg %p59
      %p226 = pneg %p56
      %p227 = pneg %p80
      %p228 = pneg %p77
      %p229 = pneg %p101
      %p230 = pneg %p98
      %p231 = pneg %p122
      %p232 = pneg %p119
      %p233 = pneg %p143
      %p234 = pneg %p140
      %p235 = pneg %p169
      %p236 = pneg %p166
      %p237 = scmp.lt.s32.totalorder %s17, 1
      %s238 = scalar_select %p237, %s17, 1
      %s239 = smul.addr %s238, 8
      %s240 = scalar_lea.vmem %s6, %s239
      %p241 = scmp.lt.s32.totalorder %s17, 1
      %s242 = scalar_select %p241, %s17, 1
      %s243 = smul.addr %s242, 72
      %s244 = smul.addr %s243, 4
      %s245 = scalar_lea.vmem %s0, %s244
      %p246 = scmp.lt.s32.totalorder %s17, 1
      %s247 = scalar_select %p246, %s17, 1
      %s248 = smul.addr %s247, 8
      %s249 = scalar_lea.vmem %s6, %s248
      %v251 = vld [vmem:[%s245] sm:$0xff]
      %v252 = vld [vmem:[%s245 + $0x8] sm:$0xff]
      %v253 = vld [vmem:[%s245 + $0x10] sm:$0xff]
      %v254 = vld [vmem:[%s245 + $0x18] sm:$0xff]
      %v255 = vld [vmem:[%s1] sm:$0xf]
      %v256 = vld [vmem:[%s1 + $0x4] sm:$0xf]
      %v257 = vld [vmem:[%s1 + $0x8] sm:$0xf]
      %v258 = vld [vmem:[%s1 + $0xc] sm:$0xf]
      %v259 = vld [vmem:[%s1 + $0x10] sm:$0xf]
      %v260 = vld [vmem:[%s1 + $0x14] sm:$0xf]
      %v261 = vld [vmem:[%s1 + $0x18] sm:$0xf]
      %v262 = vld [vmem:[%s1 + $0x1c] sm:$0xf]
      %v263 = vld [vmem:[%s1 + $0x20] sm:$0xf]
      %v264 = vld [vmem:[%s1 + $0x24] sm:$0xf]
      %v265 = vld [vmem:[%s1 + $0x28] sm:$0xf]
      %v266 = vld [vmem:[%s1 + $0x2c] sm:$0xf]
      %v267 = vld [vmem:[%s1 + $0x30] sm:$0xf]
      %v268 = vld [vmem:[%s1 + $0x34] sm:$0xf]
      %v269 = vld [vmem:[%s1 + $0x38] sm:$0xf]
      %v270 = vld [vmem:[%s1 + $0x3c] sm:$0xf]
      %v271 = vld [vmem:[%s1 + $0x40] sm:$0xf]
      %v272 = vld [vmem:[%s1 + $0x44] sm:$0xf]
      %v273 = vld [vmem:[%s1 + $0x48] sm:$0xf]
      %v274 = vld [vmem:[%s1 + $0x4c] sm:$0xf]
      %v275 = vld [vmem:[%s1 + $0x50] sm:$0xf]
      %v276 = vld [vmem:[%s1 + $0x54] sm:$0xf]
      %v277 = vld [vmem:[%s1 + $0x58] sm:$0xf]
      %v278 = vld [vmem:[%s1 + $0x5c] sm:$0xf]
      %v279 = vld [vmem:[%s1 + $0x60] sm:$0xf]
      %v280 = vld [vmem:[%s1 + $0x64] sm:$0xf]
      %v281 = vld [vmem:[%s1 + $0x68] sm:$0xf]
      %v282 = vld [vmem:[%s1 + $0x6c] sm:$0xf]
      %v283 = vld [vmem:[%s1 + $0x70] sm:$0xf]
      %v284 = vld [vmem:[%s1 + $0x74] sm:$0xf]
      %v285 = vld [vmem:[%s1 + $0x78] sm:$0xf]
      %v286 = vld [vmem:[%s1 + $0x7c] sm:$0xf]
      %v287 = vld [vmem:[%s1 + $0x80] sm:$0xf]
      %v288 = vld [vmem:[%s1 + $0x84] sm:$0xf]
      %v289 = vld [vmem:[%s1 + $0x88] sm:$0xf]
      %v290 = vld [vmem:[%s1 + $0x8c] sm:$0xf]
      %v291 = vld [vmem:[%s1 + $0x90] sm:$0xf]
      %v292 = vld [vmem:[%s1 + $0x94] sm:$0xf]
      %v293 = vld [vmem:[%s1 + $0x98] sm:$0xf]
      %v294 = vld [vmem:[%s1 + $0x9c] sm:$0xf]
      %v295 = vld [vmem:[%s1 + $0xa0] sm:$0xf]
      %v296 = vld [vmem:[%s1 + $0xa4] sm:$0xf]
      %v297 = vld [vmem:[%s1 + $0xa8] sm:$0xf]
      %v298 = vld [vmem:[%s1 + $0xac] sm:$0xf]
      %v299 = vld [vmem:[%s1 + $0xb0] sm:$0xf]
      %v300 = vld [vmem:[%s1 + $0xb4] sm:$0xf]
      %v301 = vld [vmem:[%s1 + $0xb8] sm:$0xf]
      %v302 = vld [vmem:[%s1 + $0xbc] sm:$0xf]
      %v303 = vld [vmem:[%s1 + $0xc0] sm:$0xf]
      %v304 = vld [vmem:[%s1 + $0xc4] sm:$0xf]
      %v305 = vld [vmem:[%s1 + $0xc8] sm:$0xf]
      %v306 = vld [vmem:[%s1 + $0xcc] sm:$0xf]
      %v307 = vld [vmem:[%s1 + $0xd0] sm:$0xf]
      %v308 = vld [vmem:[%s1 + $0xd4] sm:$0xf]
      %v309 = vld [vmem:[%s1 + $0xd8] sm:$0xf]
      %v310 = vld [vmem:[%s1 + $0xdc] sm:$0xf]
      %v311 = vld [vmem:[%s1 + $0xe0] sm:$0xf]
      %v312 = vld [vmem:[%s1 + $0xe4] sm:$0xf]
      %v313 = vld [vmem:[%s1 + $0xe8] sm:$0xf]
      %v314 = vld [vmem:[%s1 + $0xec] sm:$0xf]
      %v315 = vld [vmem:[%s1 + $0xf0] sm:$0xf]
      %v316 = vld [vmem:[%s1 + $0xf4] sm:$0xf]
      %v317 = vld [vmem:[%s1 + $0xf8] sm:$0xf]
      %v318 = vld [vmem:[%s1 + $0xfc] sm:$0xf]
      %v319 = vld [vmem:[%s1 + $0x100] sm:$0xf]
      %v320 = vld [vmem:[%s1 + $0x104] sm:$0xf]
      %v321 = vld [vmem:[%s1 + $0x108] sm:$0xf]
      %v322 = vld [vmem:[%s1 + $0x10c] sm:$0xf]
      %v323 = vld [vmem:[%s1 + $0x110] sm:$0xf]
      %v324 = vld [vmem:[%s1 + $0x114] sm:$0xf]
      %v325 = vld [vmem:[%s1 + $0x118] sm:$0xf]
      %v326 = vld [vmem:[%s1 + $0x11c] sm:$0xf]
      %v327 = vld [vmem:[%s1 + $0x120] sm:$0xf]
      %v328 = vld [vmem:[%s1 + $0x124] sm:$0xf]
      %v329 = vld [vmem:[%s1 + $0x128] sm:$0xf]
      %v330 = vld [vmem:[%s1 + $0x12c] sm:$0xf]
      %v331 = vld [vmem:[%s1 + $0x130] sm:$0xf]
      %v332 = vld [vmem:[%s1 + $0x134] sm:$0xf]
      %v333 = vld [vmem:[%s1 + $0x138] sm:$0xf]
      %v334 = vld [vmem:[%s1 + $0x13c] sm:$0xf]
      %v335 = vld [vmem:[%s1 + $0x140] sm:$0xf]
      %v336 = vld [vmem:[%s1 + $0x144] sm:$0xf]
      %v337 = vld [vmem:[%s1 + $0x148] sm:$0xf]
      %v338 = vld [vmem:[%s1 + $0x14c] sm:$0xf]
      %v339 = vld [vmem:[%s1 + $0x150] sm:$0xf]
      %v340 = vld [vmem:[%s1 + $0x154] sm:$0xf]
      %v341 = vld [vmem:[%s1 + $0x158] sm:$0xf]
      %v342 = vld [vmem:[%s1 + $0x15c] sm:$0xf]
      %v343 = vld [vmem:[%s1 + $0x160] sm:$0xf]
      %v344 = vld [vmem:[%s1 + $0x164] sm:$0xf]
      %v345 = vld [vmem:[%s1 + $0x168] sm:$0xf]
      %v346 = vld [vmem:[%s1 + $0x16c] sm:$0xf]
      %v347 = vld [vmem:[%s1 + $0x170] sm:$0xf]
      %v348 = vld [vmem:[%s1 + $0x174] sm:$0xf]
      %v349 = vld [vmem:[%s1 + $0x178] sm:$0xf]
      %v350 = vld [vmem:[%s1 + $0x17c] sm:$0xf]
      %v351 = vld [vmem:[%s1 + $0x180] sm:$0xf]
      %v352 = vld [vmem:[%s1 + $0x184] sm:$0xf]
      %v353 = vld [vmem:[%s1 + $0x188] sm:$0xf]
      %v354 = vld [vmem:[%s1 + $0x18c] sm:$0xf]
      %v355 = vld [vmem:[%s1 + $0x190] sm:$0xf]
      %v356 = vld [vmem:[%s1 + $0x194] sm:$0xf]
      %v357 = vld [vmem:[%s1 + $0x198] sm:$0xf]
      %v358 = vld [vmem:[%s1 + $0x19c] sm:$0xf]
      %v359 = vld [vmem:[%s1 + $0x1a0] sm:$0xf]
      %v360 = vld [vmem:[%s1 + $0x1a4] sm:$0xf]
      %v361 = vld [vmem:[%s1 + $0x1a8] sm:$0xf]
      %v362 = vld [vmem:[%s1 + $0x1ac] sm:$0xf]
      %v363 = vld [vmem:[%s1 + $0x1b0] sm:$0xf]
      %v364 = vld [vmem:[%s1 + $0x1b4] sm:$0xf]
      %v365 = vld [vmem:[%s1 + $0x1b8] sm:$0xf]
      %v366 = vld [vmem:[%s1 + $0x1bc] sm:$0xf]
      %v367 = vld [vmem:[%s1 + $0x1c0] sm:$0xf]
      %v368 = vld [vmem:[%s1 + $0x1c4] sm:$0xf]
      %v369 = vld [vmem:[%s1 + $0x1c8] sm:$0xf]
      %v370 = vld [vmem:[%s1 + $0x1cc] sm:$0xf]
      %v371 = vld [vmem:[%s1 + $0x1d0] sm:$0xf]
      %v372 = vld [vmem:[%s1 + $0x1d4] sm:$0xf]
      %v373 = vld [vmem:[%s1 + $0x1d8] sm:$0xf]
      %v374 = vld [vmem:[%s1 + $0x1dc] sm:$0xf]
      %v375 = vld [vmem:[%s1 + $0x1e0] sm:$0xf]
      %v376 = vld [vmem:[%s1 + $0x1e4] sm:$0xf]
      %v377 = vld [vmem:[%s1 + $0x1e8] sm:$0xf]
      %v378 = vld [vmem:[%s1 + $0x1ec] sm:$0xf]
      %v379 = vld [vmem:[%s1 + $0x1f0] sm:$0xf]
      %v380 = vld [vmem:[%s1 + $0x1f4] sm:$0xf]
      %v381 = vld [vmem:[%s1 + $0x1f8] sm:$0xf]
      %v382 = vld [vmem:[%s1 + $0x1fc] sm:$0xf]
      %v387 = vunpack.c.l.b16 %v251
      %v388 = vunpack.c.h.b16 %v251
      %v389 = vunpack.c.l.b16 %v252
      %v390 = vunpack.c.h.b16 %v252
      %v391 = vunpack.c.l.b16 %v253
      %v392 = vunpack.c.h.b16 %v253
      %v393 = vunpack.c.l.b16 %v254
      %v394 = vunpack.c.h.b16 %v254
      %v395 = vpack.c.b16 %v387, %v387
      %v396 = vpack.c.b16 %v388, %v388
      %v397 = vpack.c.b16 %v389, %v389
      %v398 = vpack.c.b16 %v390, %v390
      %v399 = vpack.c.b16 %v391, %v391
      %v400 = vpack.c.b16 %v392, %v392
      %v401 = vpack.c.b16 %v393, %v393
      %v402 = vpack.c.b16 %v394, %v394
      %v539 = vunpack.c.l.b16 %v255
      %v540 = vunpack.c.l.b16 %v256
      %v541 = vunpack.c.l.b16 %v257
      %v542 = vunpack.c.l.b16 %v258
      %v543 = vunpack.c.l.b16 %v259
      %v544 = vunpack.c.l.b16 %v260
      %v545 = vunpack.c.l.b16 %v261
      %v546 = vunpack.c.l.b16 %v262
      %v547 = vunpack.c.l.b16 %v263
      %v548 = vunpack.c.l.b16 %v264
      %v549 = vunpack.c.l.b16 %v265
      %v550 = vunpack.c.l.b16 %v266
      %v551 = vunpack.c.l.b16 %v267
      %v552 = vunpack.c.l.b16 %v268
      %v553 = vunpack.c.l.b16 %v269
      %v554 = vunpack.c.l.b16 %v270
      %v555 = vunpack.c.l.b16 %v271
      %v556 = vunpack.c.l.b16 %v272
      %v557 = vunpack.c.l.b16 %v273
      %v558 = vunpack.c.l.b16 %v274
      %v559 = vunpack.c.l.b16 %v275
      %v560 = vunpack.c.l.b16 %v276
      %v561 = vunpack.c.l.b16 %v277
      %v562 = vunpack.c.l.b16 %v278
      %v563 = vunpack.c.l.b16 %v279
      %v564 = vunpack.c.l.b16 %v280
      %v565 = vunpack.c.l.b16 %v281
      %v566 = vunpack.c.l.b16 %v282
      %v567 = vunpack.c.l.b16 %v283
      %v568 = vunpack.c.l.b16 %v284
      %v569 = vunpack.c.l.b16 %v285
      %v570 = vunpack.c.l.b16 %v286
      %v571 = vunpack.c.l.b16 %v287
      %v572 = vunpack.c.l.b16 %v288
      %v573 = vunpack.c.l.b16 %v289
      %v574 = vunpack.c.l.b16 %v290
      %v575 = vunpack.c.l.b16 %v291
      %v576 = vunpack.c.l.b16 %v292
      %v577 = vunpack.c.l.b16 %v293
      %v578 = vunpack.c.l.b16 %v294
      %v579 = vunpack.c.l.b16 %v295
      %v580 = vunpack.c.l.b16 %v296
      %v581 = vunpack.c.l.b16 %v297
      %v582 = vunpack.c.l.b16 %v298
      %v583 = vunpack.c.l.b16 %v299
      %v584 = vunpack.c.l.b16 %v300
      %v585 = vunpack.c.l.b16 %v301
      %v586 = vunpack.c.l.b16 %v302
      %v587 = vunpack.c.l.b16 %v303
      %v588 = vunpack.c.l.b16 %v304
      %v589 = vunpack.c.l.b16 %v305
      %v590 = vunpack.c.l.b16 %v306
      %v591 = vunpack.c.l.b16 %v307
      %v592 = vunpack.c.l.b16 %v308
      %v593 = vunpack.c.l.b16 %v309
      %v594 = vunpack.c.l.b16 %v310
      %v595 = vunpack.c.l.b16 %v311
      %v596 = vunpack.c.l.b16 %v312
      %v597 = vunpack.c.l.b16 %v313
      %v598 = vunpack.c.l.b16 %v314
      %v599 = vunpack.c.l.b16 %v315
      %v600 = vunpack.c.l.b16 %v316
      %v601 = vunpack.c.l.b16 %v317
      %v602 = vunpack.c.l.b16 %v318
      %v603 = vunpack.c.l.b16 %v319
      %v604 = vunpack.c.l.b16 %v320
      %v605 = vunpack.c.l.b16 %v321
      %v606 = vunpack.c.l.b16 %v322
      %v607 = vunpack.c.l.b16 %v323
      %v608 = vunpack.c.l.b16 %v324
      %v609 = vunpack.c.l.b16 %v325
      %v610 = vunpack.c.l.b16 %v326
      %v611 = vunpack.c.l.b16 %v327
      %v612 = vunpack.c.l.b16 %v328
      %v613 = vunpack.c.l.b16 %v329
      %v614 = vunpack.c.l.b16 %v330
      %v615 = vunpack.c.l.b16 %v331
      %v616 = vunpack.c.l.b16 %v332
      %v617 = vunpack.c.l.b16 %v333
      %v618 = vunpack.c.l.b16 %v334
      %v619 = vunpack.c.l.b16 %v335
      %v620 = vunpack.c.l.b16 %v336
      %v621 = vunpack.c.l.b16 %v337
      %v622 = vunpack.c.l.b16 %v338
      %v623 = vunpack.c.l.b16 %v339
      %v624 = vunpack.c.l.b16 %v340
      %v625 = vunpack.c.l.b16 %v341
      %v626 = vunpack.c.l.b16 %v342
      %v627 = vunpack.c.l.b16 %v343
      %v628 = vunpack.c.l.b16 %v344
      %v629 = vunpack.c.l.b16 %v345
      %v630 = vunpack.c.l.b16 %v346
      %v631 = vunpack.c.l.b16 %v347
      %v632 = vunpack.c.l.b16 %v348
      %v633 = vunpack.c.l.b16 %v349
      %v634 = vunpack.c.l.b16 %v350
      %v635 = vunpack.c.l.b16 %v351
      %v636 = vunpack.c.l.b16 %v352
      %v637 = vunpack.c.l.b16 %v353
      %v638 = vunpack.c.l.b16 %v354
      %v639 = vunpack.c.l.b16 %v355
      %v640 = vunpack.c.l.b16 %v356
      %v641 = vunpack.c.l.b16 %v357
      %v642 = vunpack.c.l.b16 %v358
      %v643 = vunpack.c.l.b16 %v359
      %v644 = vunpack.c.l.b16 %v360
      %v645 = vunpack.c.l.b16 %v361
      %v646 = vunpack.c.l.b16 %v362
      %v647 = vunpack.c.l.b16 %v363
      %v648 = vunpack.c.l.b16 %v364
      %v649 = vunpack.c.l.b16 %v365
      %v650 = vunpack.c.l.b16 %v366
      %v651 = vunpack.c.l.b16 %v367
      %v652 = vunpack.c.l.b16 %v368
      %v653 = vunpack.c.l.b16 %v369
      %v654 = vunpack.c.l.b16 %v370
      %v655 = vunpack.c.l.b16 %v371
      %v656 = vunpack.c.l.b16 %v372
      %v657 = vunpack.c.l.b16 %v373
      %v658 = vunpack.c.l.b16 %v374
      %v659 = vunpack.c.l.b16 %v375
      %v660 = vunpack.c.l.b16 %v376
      %v661 = vunpack.c.l.b16 %v377
      %v662 = vunpack.c.l.b16 %v378
      %v663 = vunpack.c.l.b16 %v379
      %v664 = vunpack.c.l.b16 %v380
      %v665 = vunpack.c.l.b16 %v381
      %v666 = vunpack.c.l.b16 %v382
      %v667 = vpack.c.b16 %v540, %v539
      %v668 = vpack.c.b16 %v542, %v541
      %v669 = vpack.c.b16 %v544, %v543
      %v670 = vpack.c.b16 %v546, %v545
      %v671 = vpack.c.b16 %v548, %v547
      %v672 = vpack.c.b16 %v550, %v549
      %v673 = vpack.c.b16 %v552, %v551
      %v674 = vpack.c.b16 %v554, %v553
      %v675 = vpack.c.b16 %v556, %v555
      %v676 = vpack.c.b16 %v558, %v557
      %v677 = vpack.c.b16 %v560, %v559
      %v678 = vpack.c.b16 %v562, %v561
      %v679 = vpack.c.b16 %v564, %v563
      %v680 = vpack.c.b16 %v566, %v565
      %v681 = vpack.c.b16 %v568, %v567
      %v682 = vpack.c.b16 %v570, %v569
      %v683 = vpack.c.b16 %v572, %v571
      %v684 = vpack.c.b16 %v574, %v573
      %v685 = vpack.c.b16 %v576, %v575
      %v686 = vpack.c.b16 %v578, %v577
      %v687 = vpack.c.b16 %v580, %v579
      %v688 = vpack.c.b16 %v582, %v581
      %v689 = vpack.c.b16 %v584, %v583
      %v690 = vpack.c.b16 %v586, %v585
      %v691 = vpack.c.b16 %v588, %v587
      %v692 = vpack.c.b16 %v590, %v589
      %v693 = vpack.c.b16 %v592, %v591
      %v694 = vpack.c.b16 %v594, %v593
      %v695 = vpack.c.b16 %v596, %v595
      %v696 = vpack.c.b16 %v598, %v597
      %v697 = vpack.c.b16 %v600, %v599
      %v698 = vpack.c.b16 %v602, %v601
      %v699 = vpack.c.b16 %v604, %v603
      %v700 = vpack.c.b16 %v606, %v605
      %v701 = vpack.c.b16 %v608, %v607
      %v702 = vpack.c.b16 %v610, %v609
      %v703 = vpack.c.b16 %v612, %v611
      %v704 = vpack.c.b16 %v614, %v613
      %v705 = vpack.c.b16 %v616, %v615
      %v706 = vpack.c.b16 %v618, %v617
      %v707 = vpack.c.b16 %v620, %v619
      %v708 = vpack.c.b16 %v622, %v621
      %v709 = vpack.c.b16 %v624, %v623
      %v710 = vpack.c.b16 %v626, %v625
      %v711 = vpack.c.b16 %v628, %v627
      %v712 = vpack.c.b16 %v630, %v629
      %v713 = vpack.c.b16 %v632, %v631
      %v714 = vpack.c.b16 %v634, %v633
      %v715 = vpack.c.b16 %v636, %v635
      %v716 = vpack.c.b16 %v638, %v637
      %v717 = vpack.c.b16 %v640, %v639
      %v718 = vpack.c.b16 %v642, %v641
      %v719 = vpack.c.b16 %v644, %v643
      %v720 = vpack.c.b16 %v646, %v645
      %v721 = vpack.c.b16 %v648, %v647
      %v722 = vpack.c.b16 %v650, %v649
      %v723 = vpack.c.b16 %v652, %v651
      %v724 = vpack.c.b16 %v654, %v653
      %v725 = vpack.c.b16 %v656, %v655
      %v726 = vpack.c.b16 %v658, %v657
      %v727 = vpack.c.b16 %v660, %v659
      %v728 = vpack.c.b16 %v662, %v661
      %v729 = vpack.c.b16 %v664, %v663
      %v730 = vpack.c.b16 %v666, %v665
      %795 = vmatprep.subr.bf16.mxu0 0
      %796 = vmatpush1.bf16.msra.mxu0 %v674
      %797 = vmatprep.subr.bf16.mxu0 0
      %798 = vmatpush1.bf16.msra.mxu0 %v673
      %799 = vmatprep.subr.bf16.mxu0 0
      %800 = vmatpush1.bf16.msra.mxu0 %v672
      %801 = vmatprep.subr.bf16.mxu0 0
      %802 = vmatpush1.bf16.msra.mxu0 %v671
      %803 = vmatprep.subr.bf16.mxu0 0
      %804 = vmatpush1.bf16.msra.mxu0 %v670
      %805 = vmatprep.subr.bf16.mxu0 0
      %806 = vmatpush1.bf16.msra.mxu0 %v669
      %807 = vmatprep.subr.bf16.mxu0 0
      %808 = vmatpush1.bf16.msra.mxu0 %v668
      %809 = vmatprep.subr.bf16.mxu0 0
      %810 = vmatpush1.bf16.msra.mxu0 %v667
      %811 = vmatprep.subr.bf16.mxu0 0
      %812 = vmatpush2.bf16.msra.mxu0 %v682
      %813 = vmatprep.subr.bf16.mxu0 0
      %814 = vmatpush2.bf16.msra.mxu0 %v681
      %815 = vmatprep.subr.bf16.mxu0 0
      %816 = vmatpush2.bf16.msra.mxu0 %v680
      %817 = vmatprep.subr.bf16.mxu0 0
      %818 = vmatpush2.bf16.msra.mxu0 %v679
      %819 = vmatprep.subr.bf16.mxu0 0
      %820 = vmatpush2.bf16.msra.mxu0 %v678
      %821 = vmatprep.subr.bf16.mxu0 0
      %822 = vmatpush2.bf16.msra.mxu0 %v677
      %823 = vmatprep.subr.bf16.mxu0 0
      %824 = vmatpush2.bf16.msra.mxu0 %v676
      %825 = vmatprep.subr.bf16.mxu0 0
      %826 = vmatpush2.bf16.msra.mxu0 %v675
      %827 = vmatprep.mubr.bf16.mxu0 %v396
      %828 = vmatmul.mubr.bf16.gmra.mxu0 %v395
      %v829 = vpop.f32.mrf.mxu0
      %v830 = vadd.f32 0.0, %v829
      %v831 = vpop.f32.mrf.mxu0
      %v832 = vpop.f32.mrf.mxu0
      %v833 = vpop.f32.mrf.mxu0
      %834 = vdwg.mxu0
      %835 = vmatprep.subr.bf16.mxu0 0
      %836 = vmatpush1.bf16.msra.mxu0 %v690
      %837 = vmatprep.subr.bf16.mxu0 0
      %838 = vmatpush1.bf16.msra.mxu0 %v689
      %839 = vmatprep.subr.bf16.mxu0 0
      %840 = vmatpush1.bf16.msra.mxu0 %v688
      %841 = vmatprep.subr.bf16.mxu0 0
      %842 = vmatpush1.bf16.msra.mxu0 %v687
      %843 = vmatprep.subr.bf16.mxu0 0
      %844 = vmatpush1.bf16.msra.mxu0 %v686
      %845 = vmatprep.subr.bf16.mxu0 0
      %846 = vmatpush1.bf16.msra.mxu0 %v685
      %847 = vmatprep.subr.bf16.mxu0 0
      %848 = vmatpush1.bf16.msra.mxu0 %v684
      %849 = vmatprep.subr.bf16.mxu0 0
      %850 = vmatpush1.bf16.msra.mxu0 %v683
      %851 = vmatprep.subr.bf16.mxu0 0
      %852 = vmatpush2.bf16.msra.mxu0 %v698
      %853 = vmatprep.subr.bf16.mxu0 0
      %854 = vmatpush2.bf16.msra.mxu0 %v697
      %855 = vmatprep.subr.bf16.mxu0 0
      %856 = vmatpush2.bf16.msra.mxu0 %v696
      %857 = vmatprep.subr.bf16.mxu0 0
      %858 = vmatpush2.bf16.msra.mxu0 %v695
      %859 = vmatprep.subr.bf16.mxu0 0
      %860 = vmatpush2.bf16.msra.mxu0 %v694
      %861 = vmatprep.subr.bf16.mxu0 0
      %862 = vmatpush2.bf16.msra.mxu0 %v693
      %863 = vmatprep.subr.bf16.mxu0 0
      %864 = vmatpush2.bf16.msra.mxu0 %v692
      %865 = vmatprep.subr.bf16.mxu0 0
      %866 = vmatpush2.bf16.msra.mxu0 %v691
      %867 = vmatprep.mubr.bf16.mxu0 %v398
      %868 = vmatmul.mubr.bf16.gmra.mxu0 %v397
      %v869 = vpop.f32.mrf.mxu0
      %v870 = vadd.f32 %v830, %v869
      %v871 = vpop.f32.mrf.mxu0
      %v872 = vpop.f32.mrf.mxu0
      %v873 = vpop.f32.mrf.mxu0
      %874 = vdwg.mxu0
      %875 = vmatprep.subr.bf16.mxu0 0
      %876 = vmatpush1.bf16.msra.mxu0 %v706
      %877 = vmatprep.subr.bf16.mxu0 0
      %878 = vmatpush1.bf16.msra.mxu0 %v705
      %879 = vmatprep.subr.bf16.mxu0 0
      %880 = vmatpush1.bf16.msra.mxu0 %v704
      %881 = vmatprep.subr.bf16.mxu0 0
      %882 = vmatpush1.bf16.msra.mxu0 %v703
      %883 = vmatprep.subr.bf16.mxu0 0
      %884 = vmatpush1.bf16.msra.mxu0 %v702
      %885 = vmatprep.subr.bf16.mxu0 0
      %886 = vmatpush1.bf16.msra.mxu0 %v701
      %887 = vmatprep.subr.bf16.mxu0 0
      %888 = vmatpush1.bf16.msra.mxu0 %v700
      %889 = vmatprep.subr.bf16.mxu0 0
      %890 = vmatpush1.bf16.msra.mxu0 %v699
      %891 = vmatprep.subr.bf16.mxu0 0
      %892 = vmatpush2.bf16.msra.mxu0 %v714
      %893 = vmatprep.subr.bf16.mxu0 0
      %894 = vmatpush2.bf16.msra.mxu0 %v713
      %895 = vmatprep.subr.bf16.mxu0 0
      %896 = vmatpush2.bf16.msra.mxu0 %v712
      %897 = vmatprep.subr.bf16.mxu0 0
      %898 = vmatpush2.bf16.msra.mxu0 %v711
      %899 = vmatprep.subr.bf16.mxu0 0
      %900 = vmatpush2.bf16.msra.mxu0 %v710
      %901 = vmatprep.subr.bf16.mxu0 0
      %902 = vmatpush2.bf16.msra.mxu0 %v709
      %903 = vmatprep.subr.bf16.mxu0 0
      %904 = vmatpush2.bf16.msra.mxu0 %v708
      %905 = vmatprep.subr.bf16.mxu0 0
      %906 = vmatpush2.bf16.msra.mxu0 %v707
      %907 = vmatprep.mubr.bf16.mxu0 %v400
      %908 = vmatmul.mubr.bf16.gmra.mxu0 %v399
      %v909 = vpop.f32.mrf.mxu0
      %v910 = vadd.f32 %v870, %v909
      %v911 = vpop.f32.mrf.mxu0
      %v912 = vpop.f32.mrf.mxu0
      %v913 = vpop.f32.mrf.mxu0
      %914 = vdwg.mxu0
      %915 = vmatprep.subr.bf16.mxu0 0
      %916 = vmatpush1.bf16.msra.mxu0 %v722
      %917 = vmatprep.subr.bf16.mxu0 0
      %918 = vmatpush1.bf16.msra.mxu0 %v721
      %919 = vmatprep.subr.bf16.mxu0 0
      %920 = vmatpush1.bf16.msra.mxu0 %v720
      %921 = vmatprep.subr.bf16.mxu0 0
      %922 = vmatpush1.bf16.msra.mxu0 %v719
      %923 = vmatprep.subr.bf16.mxu0 0
      %924 = vmatpush1.bf16.msra.mxu0 %v718
      %925 = vmatprep.subr.bf16.mxu0 0
      %926 = vmatpush1.bf16.msra.mxu0 %v717
      %927 = vmatprep.subr.bf16.mxu0 0
      %928 = vmatpush1.bf16.msra.mxu0 %v716
      %929 = vmatprep.subr.bf16.mxu0 0
      %930 = vmatpush1.bf16.msra.mxu0 %v715
      %931 = vmatprep.subr.bf16.mxu0 0
      %932 = vmatpush2.bf16.msra.mxu0 %v730
      %933 = vmatprep.subr.bf16.mxu0 0
      %934 = vmatpush2.bf16.msra.mxu0 %v729
      %935 = vmatprep.subr.bf16.mxu0 0
      %936 = vmatpush2.bf16.msra.mxu0 %v728
      %937 = vmatprep.subr.bf16.mxu0 0
      %938 = vmatpush2.bf16.msra.mxu0 %v727
      %939 = vmatprep.subr.bf16.mxu0 0
      %940 = vmatpush2.bf16.msra.mxu0 %v726
      %941 = vmatprep.subr.bf16.mxu0 0
      %942 = vmatpush2.bf16.msra.mxu0 %v725
      %943 = vmatprep.subr.bf16.mxu0 0
      %944 = vmatpush2.bf16.msra.mxu0 %v724
      %945 = vmatprep.subr.bf16.mxu0 0
      %946 = vmatpush2.bf16.msra.mxu0 %v723
      %947 = vmatprep.mubr.bf16.mxu0 %v402
      %948 = vmatmul.mubr.bf16.gmra.mxu0 %v401
      %v949 = vpop.f32.mrf.mxu0
      %v950 = vadd.f32 %v910, %v949
      %v951 = vpop.f32.mrf.mxu0
      %v952 = vpop.f32.mrf.mxu0
      %v953 = vpop.f32.mrf.mxu0
      %954 = vdwg.mxu0
      %v955 = vld [vmem:[%s245 + $0x20] sm:$0xff]
      %v956 = vld [vmem:[%s245 + $0x28] sm:$0xff]
      %v957 = vld [vmem:[%s245 + $0x30] sm:$0xff]
      %v958 = vld [vmem:[%s245 + $0x38] sm:$0xff]
      %v963 = vunpack.c.l.b16 %v955
      %v964 = vunpack.c.h.b16 %v955
      %v965 = vunpack.c.l.b16 %v956
      %v966 = vunpack.c.h.b16 %v956
      %v967 = vunpack.c.l.b16 %v957
      %v968 = vunpack.c.h.b16 %v957
      %v969 = vunpack.c.l.b16 %v958
      %v970 = vunpack.c.h.b16 %v958
      %v971 = vpack.c.b16 %v963, %v963
      %v972 = vpack.c.b16 %v964, %v964
      %v973 = vpack.c.b16 %v965, %v965
      %v974 = vpack.c.b16 %v966, %v966
      %v975 = vpack.c.b16 %v967, %v967
      %v976 = vpack.c.b16 %v968, %v968
      %v977 = vpack.c.b16 %v969, %v969
      %v978 = vpack.c.b16 %v970, %v970
      %987 = vmatprep.subr.bf16.mxu0 0
      %988 = vmatpush1.bf16.msra.mxu0 %v674
      %989 = vmatprep.subr.bf16.mxu0 0
      %990 = vmatpush1.bf16.msra.mxu0 %v673
      %991 = vmatprep.subr.bf16.mxu0 0
      %992 = vmatpush1.bf16.msra.mxu0 %v672
      %993 = vmatprep.subr.bf16.mxu0 0
      %994 = vmatpush1.bf16.msra.mxu0 %v671
      %995 = vmatprep.subr.bf16.mxu0 0
      %996 = vmatpush1.bf16.msra.mxu0 %v670
      %997 = vmatprep.subr.bf16.mxu0 0
      %998 = vmatpush1.bf16.msra.mxu0 %v669
      %999 = vmatprep.subr.bf16.mxu0 0
      %1000 = vmatpush1.bf16.msra.mxu0 %v668
      %1001 = vmatprep.subr.bf16.mxu0 0
      %1002 = vmatpush1.bf16.msra.mxu0 %v667
      %1003 = vmatprep.subr.bf16.mxu0 0
      %1004 = vmatpush2.bf16.msra.mxu0 %v682
      %1005 = vmatprep.subr.bf16.mxu0 0
      %1006 = vmatpush2.bf16.msra.mxu0 %v681
      %1007 = vmatprep.subr.bf16.mxu0 0
      %1008 = vmatpush2.bf16.msra.mxu0 %v680
      %1009 = vmatprep.subr.bf16.mxu0 0
      %1010 = vmatpush2.bf16.msra.mxu0 %v679
      %1011 = vmatprep.subr.bf16.mxu0 0
      %1012 = vmatpush2.bf16.msra.mxu0 %v678
      %1013 = vmatprep.subr.bf16.mxu0 0
      %1014 = vmatpush2.bf16.msra.mxu0 %v677
      %1015 = vmatprep.subr.bf16.mxu0 0
      %1016 = vmatpush2.bf16.msra.mxu0 %v676
      %1017 = vmatprep.subr.bf16.mxu0 0
      %1018 = vmatpush2.bf16.msra.mxu0 %v675
      %1019 = vmatprep.mubr.bf16.mxu0 %v972
      %1020 = vmatmul.mubr.bf16.gmra.mxu0 %v971
      %v1021 = vpop.f32.mrf.mxu0
      %v1022 = vadd.f32 0.0, %v1021
      %v1023 = vpop.f32.mrf.mxu0
      %v1024 = vpop.f32.mrf.mxu0
      %v1025 = vpop.f32.mrf.mxu0
      %1026 = vdwg.mxu0
      %1027 = vmatprep.subr.bf16.mxu0 0
      %1028 = vmatpush1.bf16.msra.mxu0 %v690
      %1029 = vmatprep.subr.bf16.mxu0 0
      %1030 = vmatpush1.bf16.msra.mxu0 %v689
      %1031 = vmatprep.subr.bf16.mxu0 0
      %1032 = vmatpush1.bf16.msra.mxu0 %v688
      %1033 = vmatprep.subr.bf16.mxu0 0
      %1034 = vmatpush1.bf16.msra.mxu0 %v687
      %1035 = vmatprep.subr.bf16.mxu0 0
      %1036 = vmatpush1.bf16.msra.mxu0 %v686
      %1037 = vmatprep.subr.bf16.mxu0 0
      %1038 = vmatpush1.bf16.msra.mxu0 %v685
      %1039 = vmatprep.subr.bf16.mxu0 0
      %1040 = vmatpush1.bf16.msra.mxu0 %v684
      %1041 = vmatprep.subr.bf16.mxu0 0
      %1042 = vmatpush1.bf16.msra.mxu0 %v683
      %1043 = vmatprep.subr.bf16.mxu0 0
      %1044 = vmatpush2.bf16.msra.mxu0 %v698
      %1045 = vmatprep.subr.bf16.mxu0 0
      %1046 = vmatpush2.bf16.msra.mxu0 %v697
      %1047 = vmatprep.subr.bf16.mxu0 0
      %1048 = vmatpush2.bf16.msra.mxu0 %v696
      %1049 = vmatprep.subr.bf16.mxu0 0
      %1050 = vmatpush2.bf16.msra.mxu0 %v695
      %1051 = vmatprep.subr.bf16.mxu0 0
      %1052 = vmatpush2.bf16.msra.mxu0 %v694
      %1053 = vmatprep.subr.bf16.mxu0 0
      %1054 = vmatpush2.bf16.msra.mxu0 %v693
      %1055 = vmatprep.subr.bf16.mxu0 0
      %1056 = vmatpush2.bf16.msra.mxu0 %v692
      %1057 = vmatprep.subr.bf16.mxu0 0
      %1058 = vmatpush2.bf16.msra.mxu0 %v691
      %1059 = vmatprep.mubr.bf16.mxu0 %v974
      %1060 = vmatmul.mubr.bf16.gmra.mxu0 %v973
      %v1061 = vpop.f32.mrf.mxu0
      %v1062 = vadd.f32 %v1022, %v1061
      %v1063 = vpop.f32.mrf.mxu0
      %v1064 = vpop.f32.mrf.mxu0
      %v1065 = vpop.f32.mrf.mxu0
      %1066 = vdwg.mxu0
      %1067 = vmatprep.subr.bf16.mxu0 0
      %1068 = vmatpush1.bf16.msra.mxu0 %v706
      %1069 = vmatprep.subr.bf16.mxu0 0
      %1070 = vmatpush1.bf16.msra.mxu0 %v705
      %1071 = vmatprep.subr.bf16.mxu0 0
      %1072 = vmatpush1.bf16.msra.mxu0 %v704
      %1073 = vmatprep.subr.bf16.mxu0 0
      %1074 = vmatpush1.bf16.msra.mxu0 %v703
      %1075 = vmatprep.subr.bf16.mxu0 0
      %1076 = vmatpush1.bf16.msra.mxu0 %v702
      %1077 = vmatprep.subr.bf16.mxu0 0
      %1078 = vmatpush1.bf16.msra.mxu0 %v701
      %1079 = vmatprep.subr.bf16.mxu0 0
      %1080 = vmatpush1.bf16.msra.mxu0 %v700
      %1081 = vmatprep.subr.bf16.mxu0 0
      %1082 = vmatpush1.bf16.msra.mxu0 %v699
      %1083 = vmatprep.subr.bf16.mxu0 0
      %1084 = vmatpush2.bf16.msra.mxu0 %v714
      %1085 = vmatprep.subr.bf16.mxu0 0
      %1086 = vmatpush2.bf16.msra.mxu0 %v713
      %1087 = vmatprep.subr.bf16.mxu0 0
      %1088 = vmatpush2.bf16.msra.mxu0 %v712
      %1089 = vmatprep.subr.bf16.mxu0 0
      %1090 = vmatpush2.bf16.msra.mxu0 %v711
      %1091 = vmatprep.subr.bf16.mxu0 0
      %1092 = vmatpush2.bf16.msra.mxu0 %v710
      %1093 = vmatprep.subr.bf16.mxu0 0
      %1094 = vmatpush2.bf16.msra.mxu0 %v709
      %1095 = vmatprep.subr.bf16.mxu0 0
      %1096 = vmatpush2.bf16.msra.mxu0 %v708
      %1097 = vmatprep.subr.bf16.mxu0 0
      %1098 = vmatpush2.bf16.msra.mxu0 %v707
      %1099 = vmatprep.mubr.bf16.mxu0 %v976
      %1100 = vmatmul.mubr.bf16.gmra.mxu0 %v975
      %v1101 = vpop.f32.mrf.mxu0
      %v1102 = vadd.f32 %v1062, %v1101
      %v1103 = vpop.f32.mrf.mxu0
      %v1104 = vpop.f32.mrf.mxu0
      %v1105 = vpop.f32.mrf.mxu0
      %1106 = vdwg.mxu0
      %1107 = vmatprep.subr.bf16.mxu0 0
      %1108 = vmatpush1.bf16.msra.mxu0 %v722
      %1109 = vmatprep.subr.bf16.mxu0 0
      %1110 = vmatpush1.bf16.msra.mxu0 %v721
      %1111 = vmatprep.subr.bf16.mxu0 0
      %1112 = vmatpush1.bf16.msra.mxu0 %v720
      %1113 = vmatprep.subr.bf16.mxu0 0
      %1114 = vmatpush1.bf16.msra.mxu0 %v719
      %1115 = vmatprep.subr.bf16.mxu0 0
      %1116 = vmatpush1.bf16.msra.mxu0 %v718
      %1117 = vmatprep.subr.bf16.mxu0 0
      %1118 = vmatpush1.bf16.msra.mxu0 %v717
      %1119 = vmatprep.subr.bf16.mxu0 0
      %1120 = vmatpush1.bf16.msra.mxu0 %v716
      %1121 = vmatprep.subr.bf16.mxu0 0
      %1122 = vmatpush1.bf16.msra.mxu0 %v715
      %1123 = vmatprep.subr.bf16.mxu0 0
      %1124 = vmatpush2.bf16.msra.mxu0 %v730
      %1125 = vmatprep.subr.bf16.mxu0 0
      %1126 = vmatpush2.bf16.msra.mxu0 %v729
      %1127 = vmatprep.subr.bf16.mxu0 0
      %1128 = vmatpush2.bf16.msra.mxu0 %v728
      %1129 = vmatprep.subr.bf16.mxu0 0
      %1130 = vmatpush2.bf16.msra.mxu0 %v727
      %1131 = vmatprep.subr.bf16.mxu0 0
      %1132 = vmatpush2.bf16.msra.mxu0 %v726
      %1133 = vmatprep.subr.bf16.mxu0 0
      %1134 = vmatpush2.bf16.msra.mxu0 %v725
      %1135 = vmatprep.subr.bf16.mxu0 0
      %1136 = vmatpush2.bf16.msra.mxu0 %v724
      %1137 = vmatprep.subr.bf16.mxu0 0
      %1138 = vmatpush2.bf16.msra.mxu0 %v723
      %1139 = vmatprep.mubr.bf16.mxu0 %v978
      %1140 = vmatmul.mubr.bf16.gmra.mxu0 %v977
      %v1141 = vpop.f32.mrf.mxu0
      %v1142 = vadd.f32 %v1102, %v1141
      %v1143 = vpop.f32.mrf.mxu0
      %v1144 = vpop.f32.mrf.mxu0
      %v1145 = vpop.f32.mrf.mxu0
      %1146 = vdwg.mxu0
      %v1147 = vld [vmem:[%s245 + $0x40] sm:$0xff]
      %v1148 = vld [vmem:[%s245 + $0x48] sm:$0xff]
      %v1149 = vld [vmem:[%s245 + $0x50] sm:$0xff]
      %v1150 = vld [vmem:[%s245 + $0x58] sm:$0xff]
      %v1155 = vunpack.c.l.b16 %v1147
      %v1156 = vunpack.c.h.b16 %v1147
      %v1157 = vunpack.c.l.b16 %v1148
      %v1158 = vunpack.c.h.b16 %v1148
      %v1159 = vunpack.c.l.b16 %v1149
      %v1160 = vunpack.c.h.b16 %v1149
      %v1161 = vunpack.c.l.b16 %v1150
      %v1162 = vunpack.c.h.b16 %v1150
      %v1163 = vpack.c.b16 %v1155, %v1155
      %v1164 = vpack.c.b16 %v1156, %v1156
      %v1165 = vpack.c.b16 %v1157, %v1157
      %v1166 = vpack.c.b16 %v1158, %v1158
      %v1167 = vpack.c.b16 %v1159, %v1159
      %v1168 = vpack.c.b16 %v1160, %v1160
      %v1169 = vpack.c.b16 %v1161, %v1161
      %v1170 = vpack.c.b16 %v1162, %v1162
      %1179 = vmatprep.subr.bf16.mxu0 0
      %1180 = vmatpush1.bf16.msra.mxu0 %v674
      %1181 = vmatprep.subr.bf16.mxu0 0
      %1182 = vmatpush1.bf16.msra.mxu0 %v673
      %1183 = vmatprep.subr.bf16.mxu0 0
      %1184 = vmatpush1.bf16.msra.mxu0 %v672
      %1185 = vmatprep.subr.bf16.mxu0 0
      %1186 = vmatpush1.bf16.msra.mxu0 %v671
      %1187 = vmatprep.subr.bf16.mxu0 0
      %1188 = vmatpush1.bf16.msra.mxu0 %v670
      %1189 = vmatprep.subr.bf16.mxu0 0
      %1190 = vmatpush1.bf16.msra.mxu0 %v669
      %1191 = vmatprep.subr.bf16.mxu0 0
      %1192 = vmatpush1.bf16.msra.mxu0 %v668
      %1193 = vmatprep.subr.bf16.mxu0 0
      %1194 = vmatpush1.bf16.msra.mxu0 %v667
      %1195 = vmatprep.subr.bf16.mxu0 0
      %1196 = vmatpush2.bf16.msra.mxu0 %v682
      %1197 = vmatprep.subr.bf16.mxu0 0
      %1198 = vmatpush2.bf16.msra.mxu0 %v681
      %1199 = vmatprep.subr.bf16.mxu0 0
      %1200 = vmatpush2.bf16.msra.mxu0 %v680
      %1201 = vmatprep.subr.bf16.mxu0 0
      %1202 = vmatpush2.bf16.msra.mxu0 %v679
      %1203 = vmatprep.subr.bf16.mxu0 0
      %1204 = vmatpush2.bf16.msra.mxu0 %v678
      %1205 = vmatprep.subr.bf16.mxu0 0
      %1206 = vmatpush2.bf16.msra.mxu0 %v677
      %1207 = vmatprep.subr.bf16.mxu0 0
      %1208 = vmatpush2.bf16.msra.mxu0 %v676
      %1209 = vmatprep.subr.bf16.mxu0 0
      %1210 = vmatpush2.bf16.msra.mxu0 %v675
      %1211 = vmatprep.mubr.bf16.mxu0 %v1164
      %1212 = vmatmul.mubr.bf16.gmra.mxu0 %v1163
      %v1213 = vpop.f32.mrf.mxu0
      %v1214 = vadd.f32 0.0, %v1213
      %v1215 = vpop.f32.mrf.mxu0
      %v1216 = vpop.f32.mrf.mxu0
      %v1217 = vpop.f32.mrf.mxu0
      %1218 = vdwg.mxu0
      %1219 = vmatprep.subr.bf16.mxu0 0
      %1220 = vmatpush1.bf16.msra.mxu0 %v690
      %1221 = vmatprep.subr.bf16.mxu0 0
      %1222 = vmatpush1.bf16.msra.mxu0 %v689
      %1223 = vmatprep.subr.bf16.mxu0 0
      %1224 = vmatpush1.bf16.msra.mxu0 %v688
      %1225 = vmatprep.subr.bf16.mxu0 0
      %1226 = vmatpush1.bf16.msra.mxu0 %v687
      %1227 = vmatprep.subr.bf16.mxu0 0
      %1228 = vmatpush1.bf16.msra.mxu0 %v686
      %1229 = vmatprep.subr.bf16.mxu0 0
      %1230 = vmatpush1.bf16.msra.mxu0 %v685
      %1231 = vmatprep.subr.bf16.mxu0 0
      %1232 = vmatpush1.bf16.msra.mxu0 %v684
      %1233 = vmatprep.subr.bf16.mxu0 0
      %1234 = vmatpush1.bf16.msra.mxu0 %v683
      %1235 = vmatprep.subr.bf16.mxu0 0
      %1236 = vmatpush2.bf16.msra.mxu0 %v698
      %1237 = vmatprep.subr.bf16.mxu0 0
      %1238 = vmatpush2.bf16.msra.mxu0 %v697
      %1239 = vmatprep.subr.bf16.mxu0 0
      %1240 = vmatpush2.bf16.msra.mxu0 %v696
      %1241 = vmatprep.subr.bf16.mxu0 0
      %1242 = vmatpush2.bf16.msra.mxu0 %v695
      %1243 = vmatprep.subr.bf16.mxu0 0
      %1244 = vmatpush2.bf16.msra.mxu0 %v694
      %1245 = vmatprep.subr.bf16.mxu0 0
      %1246 = vmatpush2.bf16.msra.mxu0 %v693
      %1247 = vmatprep.subr.bf16.mxu0 0
      %1248 = vmatpush2.bf16.msra.mxu0 %v692
      %1249 = vmatprep.subr.bf16.mxu0 0
      %1250 = vmatpush2.bf16.msra.mxu0 %v691
      %1251 = vmatprep.mubr.bf16.mxu0 %v1166
      %1252 = vmatmul.mubr.bf16.gmra.mxu0 %v1165
      %v1253 = vpop.f32.mrf.mxu0
      %v1254 = vadd.f32 %v1214, %v1253
      %v1255 = vpop.f32.mrf.mxu0
      %v1256 = vpop.f32.mrf.mxu0
      %v1257 = vpop.f32.mrf.mxu0
      %1258 = vdwg.mxu0
      %1259 = vmatprep.subr.bf16.mxu0 0
      %1260 = vmatpush1.bf16.msra.mxu0 %v706
      %1261 = vmatprep.subr.bf16.mxu0 0
      %1262 = vmatpush1.bf16.msra.mxu0 %v705
      %1263 = vmatprep.subr.bf16.mxu0 0
      %1264 = vmatpush1.bf16.msra.mxu0 %v704
      %1265 = vmatprep.subr.bf16.mxu0 0
      %1266 = vmatpush1.bf16.msra.mxu0 %v703
      %1267 = vmatprep.subr.bf16.mxu0 0
      %1268 = vmatpush1.bf16.msra.mxu0 %v702
      %1269 = vmatprep.subr.bf16.mxu0 0
      %1270 = vmatpush1.bf16.msra.mxu0 %v701
      %1271 = vmatprep.subr.bf16.mxu0 0
      %1272 = vmatpush1.bf16.msra.mxu0 %v700
      %1273 = vmatprep.subr.bf16.mxu0 0
      %1274 = vmatpush1.bf16.msra.mxu0 %v699
      %1275 = vmatprep.subr.bf16.mxu0 0
      %1276 = vmatpush2.bf16.msra.mxu0 %v714
      %1277 = vmatprep.subr.bf16.mxu0 0
      %1278 = vmatpush2.bf16.msra.mxu0 %v713
      %1279 = vmatprep.subr.bf16.mxu0 0
      %1280 = vmatpush2.bf16.msra.mxu0 %v712
      %1281 = vmatprep.subr.bf16.mxu0 0
      %1282 = vmatpush2.bf16.msra.mxu0 %v711
      %1283 = vmatprep.subr.bf16.mxu0 0
      %1284 = vmatpush2.bf16.msra.mxu0 %v710
      %1285 = vmatprep.subr.bf16.mxu0 0
      %1286 = vmatpush2.bf16.msra.mxu0 %v709
      %1287 = vmatprep.subr.bf16.mxu0 0
      %1288 = vmatpush2.bf16.msra.mxu0 %v708
      %1289 = vmatprep.subr.bf16.mxu0 0
      %1290 = vmatpush2.bf16.msra.mxu0 %v707
      %1291 = vmatprep.mubr.bf16.mxu0 %v1168
      %1292 = vmatmul.mubr.bf16.gmra.mxu0 %v1167
      %v1293 = vpop.f32.mrf.mxu0
      %v1294 = vadd.f32 %v1254, %v1293
      %v1295 = vpop.f32.mrf.mxu0
      %v1296 = vpop.f32.mrf.mxu0
      %v1297 = vpop.f32.mrf.mxu0
      %1298 = vdwg.mxu0
      %1299 = vmatprep.subr.bf16.mxu0 0
      %1300 = vmatpush1.bf16.msra.mxu0 %v722
      %1301 = vmatprep.subr.bf16.mxu0 0
      %1302 = vmatpush1.bf16.msra.mxu0 %v721
      %1303 = vmatprep.subr.bf16.mxu0 0
      %1304 = vmatpush1.bf16.msra.mxu0 %v720
      %1305 = vmatprep.subr.bf16.mxu0 0
      %1306 = vmatpush1.bf16.msra.mxu0 %v719
      %1307 = vmatprep.subr.bf16.mxu0 0
      %1308 = vmatpush1.bf16.msra.mxu0 %v718
      %1309 = vmatprep.subr.bf16.mxu0 0
      %1310 = vmatpush1.bf16.msra.mxu0 %v717
      %1311 = vmatprep.subr.bf16.mxu0 0
      %1312 = vmatpush1.bf16.msra.mxu0 %v716
      %1313 = vmatprep.subr.bf16.mxu0 0
      %1314 = vmatpush1.bf16.msra.mxu0 %v715
      %1315 = vmatprep.subr.bf16.mxu0 0
      %1316 = vmatpush2.bf16.msra.mxu0 %v730
      %1317 = vmatprep.subr.bf16.mxu0 0
      %1318 = vmatpush2.bf16.msra.mxu0 %v729
      %1319 = vmatprep.subr.bf16.mxu0 0
      %1320 = vmatpush2.bf16.msra.mxu0 %v728
      %1321 = vmatprep.subr.bf16.mxu0 0
      %1322 = vmatpush2.bf16.msra.mxu0 %v727
      %1323 = vmatprep.subr.bf16.mxu0 0
      %1324 = vmatpush2.bf16.msra.mxu0 %v726
      %1325 = vmatprep.subr.bf16.mxu0 0
      %1326 = vmatpush2.bf16.msra.mxu0 %v725
      %1327 = vmatprep.subr.bf16.mxu0 0
      %1328 = vmatpush2.bf16.msra.mxu0 %v724
      %1329 = vmatprep.subr.bf16.mxu0 0
      %1330 = vmatpush2.bf16.msra.mxu0 %v723
      %1331 = vmatprep.mubr.bf16.mxu0 %v1170
      %1332 = vmatmul.mubr.bf16.gmra.mxu0 %v1169
      %v1333 = vpop.f32.mrf.mxu0
      %v1334 = vadd.f32 %v1294, %v1333
      %v1335 = vpop.f32.mrf.mxu0
      %v1336 = vpop.f32.mrf.mxu0
      %v1337 = vpop.f32.mrf.mxu0
      %1338 = vdwg.mxu0
      %v1339 = vld [vmem:[%s245 + $0x60] sm:$0xff]
      %v1340 = vld [vmem:[%s245 + $0x68] sm:$0xff]
      %v1341 = vld [vmem:[%s245 + $0x70] sm:$0xff]
      %v1342 = vld [vmem:[%s245 + $0x78] sm:$0xff]
      %v1347 = vunpack.c.l.b16 %v1339
      %v1348 = vunpack.c.h.b16 %v1339
      %v1349 = vunpack.c.l.b16 %v1340
      %v1350 = vunpack.c.h.b16 %v1340
      %v1351 = vunpack.c.l.b16 %v1341
      %v1352 = vunpack.c.h.b16 %v1341
      %v1353 = vunpack.c.l.b16 %v1342
      %v1354 = vunpack.c.h.b16 %v1342
      %v1355 = vpack.c.b16 %v1347, %v1347
      %v1356 = vpack.c.b16 %v1348, %v1348
      %v1357 = vpack.c.b16 %v1349, %v1349
      %v1358 = vpack.c.b16 %v1350, %v1350
      %v1359 = vpack.c.b16 %v1351, %v1351
      %v1360 = vpack.c.b16 %v1352, %v1352
      %v1361 = vpack.c.b16 %v1353, %v1353
      %v1362 = vpack.c.b16 %v1354, %v1354
      %1371 = vmatprep.subr.bf16.mxu0 0
      %1372 = vmatpush1.bf16.msra.mxu0 %v674
      %1373 = vmatprep.subr.bf16.mxu0 0
      %1374 = vmatpush1.bf16.msra.mxu0 %v673
      %1375 = vmatprep.subr.bf16.mxu0 0
      %1376 = vmatpush1.bf16.msra.mxu0 %v672
      %1377 = vmatprep.subr.bf16.mxu0 0
      %1378 = vmatpush1.bf16.msra.mxu0 %v671
      %1379 = vmatprep.subr.bf16.mxu0 0
      %1380 = vmatpush1.bf16.msra.mxu0 %v670
      %1381 = vmatprep.subr.bf16.mxu0 0
      %1382 = vmatpush1.bf16.msra.mxu0 %v669
      %1383 = vmatprep.subr.bf16.mxu0 0
      %1384 = vmatpush1.bf16.msra.mxu0 %v668
      %1385 = vmatprep.subr.bf16.mxu0 0
      %1386 = vmatpush1.bf16.msra.mxu0 %v667
      %1387 = vmatprep.subr.bf16.mxu0 0
      %1388 = vmatpush2.bf16.msra.mxu0 %v682
      %1389 = vmatprep.subr.bf16.mxu0 0
      %1390 = vmatpush2.bf16.msra.mxu0 %v681
      %1391 = vmatprep.subr.bf16.mxu0 0
      %1392 = vmatpush2.bf16.msra.mxu0 %v680
      %1393 = vmatprep.subr.bf16.mxu0 0
      %1394 = vmatpush2.bf16.msra.mxu0 %v679
      %1395 = vmatprep.subr.bf16.mxu0 0
      %1396 = vmatpush2.bf16.msra.mxu0 %v678
      %1397 = vmatprep.subr.bf16.mxu0 0
      %1398 = vmatpush2.bf16.msra.mxu0 %v677
      %1399 = vmatprep.subr.bf16.mxu0 0
      %1400 = vmatpush2.bf16.msra.mxu0 %v676
      %1401 = vmatprep.subr.bf16.mxu0 0
      %1402 = vmatpush2.bf16.msra.mxu0 %v675
      %1403 = vmatprep.mubr.bf16.mxu0 %v1356
      %1404 = vmatmul.mubr.bf16.gmra.mxu0 %v1355
      %v1405 = vpop.f32.mrf.mxu0
      %v1406 = vadd.f32 0.0, %v1405
      %v1407 = vpop.f32.mrf.mxu0
      %v1408 = vpop.f32.mrf.mxu0
      %v1409 = vpop.f32.mrf.mxu0
      %1410 = vdwg.mxu0
      %1411 = vmatprep.subr.bf16.mxu0 0
      %1412 = vmatpush1.bf16.msra.mxu0 %v690
      %1413 = vmatprep.subr.bf16.mxu0 0
      %1414 = vmatpush1.bf16.msra.mxu0 %v689
      %1415 = vmatprep.subr.bf16.mxu0 0
      %1416 = vmatpush1.bf16.msra.mxu0 %v688
      %1417 = vmatprep.subr.bf16.mxu0 0
      %1418 = vmatpush1.bf16.msra.mxu0 %v687
      %1419 = vmatprep.subr.bf16.mxu0 0
      %1420 = vmatpush1.bf16.msra.mxu0 %v686
      %1421 = vmatprep.subr.bf16.mxu0 0
      %1422 = vmatpush1.bf16.msra.mxu0 %v685
      %1423 = vmatprep.subr.bf16.mxu0 0
      %1424 = vmatpush1.bf16.msra.mxu0 %v684
      %1425 = vmatprep.subr.bf16.mxu0 0
      %1426 = vmatpush1.bf16.msra.mxu0 %v683
      %1427 = vmatprep.subr.bf16.mxu0 0
      %1428 = vmatpush2.bf16.msra.mxu0 %v698
      %1429 = vmatprep.subr.bf16.mxu0 0
      %1430 = vmatpush2.bf16.msra.mxu0 %v697
      %1431 = vmatprep.subr.bf16.mxu0 0
      %1432 = vmatpush2.bf16.msra.mxu0 %v696
      %1433 = vmatprep.subr.bf16.mxu0 0
      %1434 = vmatpush2.bf16.msra.mxu0 %v695
      %1435 = vmatprep.subr.bf16.mxu0 0
      %1436 = vmatpush2.bf16.msra.mxu0 %v694
      %1437 = vmatprep.subr.bf16.mxu0 0
      %1438 = vmatpush2.bf16.msra.mxu0 %v693
      %1439 = vmatprep.subr.bf16.mxu0 0
      %1440 = vmatpush2.bf16.msra.mxu0 %v692
      %1441 = vmatprep.subr.bf16.mxu0 0
      %1442 = vmatpush2.bf16.msra.mxu0 %v691
      %1443 = vmatprep.mubr.bf16.mxu0 %v1358
      %1444 = vmatmul.mubr.bf16.gmra.mxu0 %v1357
      %v1445 = vpop.f32.mrf.mxu0
      %v1446 = vadd.f32 %v1406, %v1445
      %v1447 = vpop.f32.mrf.mxu0
      %v1448 = vpop.f32.mrf.mxu0
      %v1449 = vpop.f32.mrf.mxu0
      %1450 = vdwg.mxu0
      %1451 = vmatprep.subr.bf16.mxu0 0
      %1452 = vmatpush1.bf16.msra.mxu0 %v706
      %1453 = vmatprep.subr.bf16.mxu0 0
      %1454 = vmatpush1.bf16.msra.mxu0 %v705
      %1455 = vmatprep.subr.bf16.mxu0 0
      %1456 = vmatpush1.bf16.msra.mxu0 %v704
      %1457 = vmatprep.subr.bf16.mxu0 0
      %1458 = vmatpush1.bf16.msra.mxu0 %v703
      %1459 = vmatprep.subr.bf16.mxu0 0
      %1460 = vmatpush1.bf16.msra.mxu0 %v702
      %1461 = vmatprep.subr.bf16.mxu0 0
      %1462 = vmatpush1.bf16.msra.mxu0 %v701
      %1463 = vmatprep.subr.bf16.mxu0 0
      %1464 = vmatpush1.bf16.msra.mxu0 %v700
      %1465 = vmatprep.subr.bf16.mxu0 0
      %1466 = vmatpush1.bf16.msra.mxu0 %v699
      %1467 = vmatprep.subr.bf16.mxu0 0
      %1468 = vmatpush2.bf16.msra.mxu0 %v714
      %1469 = vmatprep.subr.bf16.mxu0 0
      %1470 = vmatpush2.bf16.msra.mxu0 %v713
      %1471 = vmatprep.subr.bf16.mxu0 0
      %1472 = vmatpush2.bf16.msra.mxu0 %v712
      %1473 = vmatprep.subr.bf16.mxu0 0
      %1474 = vmatpush2.bf16.msra.mxu0 %v711
      %1475 = vmatprep.subr.bf16.mxu0 0
      %1476 = vmatpush2.bf16.msra.mxu0 %v710
      %1477 = vmatprep.subr.bf16.mxu0 0
      %1478 = vmatpush2.bf16.msra.mxu0 %v709
      %1479 = vmatprep.subr.bf16.mxu0 0
      %1480 = vmatpush2.bf16.msra.mxu0 %v708
      %1481 = vmatprep.subr.bf16.mxu0 0
      %1482 = vmatpush2.bf16.msra.mxu0 %v707
      %1483 = vmatprep.mubr.bf16.mxu0 %v1360
      %1484 = vmatmul.mubr.bf16.gmra.mxu0 %v1359
      %v1485 = vpop.f32.mrf.mxu0
      %v1486 = vadd.f32 %v1446, %v1485
      %v1487 = vpop.f32.mrf.mxu0
      %v1488 = vpop.f32.mrf.mxu0
      %v1489 = vpop.f32.mrf.mxu0
      %1490 = vdwg.mxu0
      %1491 = vmatprep.subr.bf16.mxu0 0
      %1492 = vmatpush1.bf16.msra.mxu0 %v722
      %1493 = vmatprep.subr.bf16.mxu0 0
      %1494 = vmatpush1.bf16.msra.mxu0 %v721
      %1495 = vmatprep.subr.bf16.mxu0 0
      %1496 = vmatpush1.bf16.msra.mxu0 %v720
      %1497 = vmatprep.subr.bf16.mxu0 0
      %1498 = vmatpush1.bf16.msra.mxu0 %v719
      %1499 = vmatprep.subr.bf16.mxu0 0
      %1500 = vmatpush1.bf16.msra.mxu0 %v718
      %1501 = vmatprep.subr.bf16.mxu0 0
      %1502 = vmatpush1.bf16.msra.mxu0 %v717
      %1503 = vmatprep.subr.bf16.mxu0 0
      %1504 = vmatpush1.bf16.msra.mxu0 %v716
      %1505 = vmatprep.subr.bf16.mxu0 0
      %1506 = vmatpush1.bf16.msra.mxu0 %v715
      %1507 = vmatprep.subr.bf16.mxu0 0
      %1508 = vmatpush2.bf16.msra.mxu0 %v730
      %1509 = vmatprep.subr.bf16.mxu0 0
      %1510 = vmatpush2.bf16.msra.mxu0 %v729
      %1511 = vmatprep.subr.bf16.mxu0 0
      %1512 = vmatpush2.bf16.msra.mxu0 %v728
      %1513 = vmatprep.subr.bf16.mxu0 0
      %1514 = vmatpush2.bf16.msra.mxu0 %v727
      %1515 = vmatprep.subr.bf16.mxu0 0
      %1516 = vmatpush2.bf16.msra.mxu0 %v726
      %1517 = vmatprep.subr.bf16.mxu0 0
      %1518 = vmatpush2.bf16.msra.mxu0 %v725
      %1519 = vmatprep.subr.bf16.mxu0 0
      %1520 = vmatpush2.bf16.msra.mxu0 %v724
      %1521 = vmatprep.subr.bf16.mxu0 0
      %1522 = vmatpush2.bf16.msra.mxu0 %v723
      %1523 = vmatprep.mubr.bf16.mxu0 %v1362
      %1524 = vmatmul.mubr.bf16.gmra.mxu0 %v1361
      %v1525 = vpop.f32.mrf.mxu0
      %v1526 = vadd.f32 %v1486, %v1525
      %v1527 = vpop.f32.mrf.mxu0
      %v1528 = vpop.f32.mrf.mxu0
      %v1529 = vpop.f32.mrf.mxu0
      %1530 = vdwg.mxu0
      %v1531 = vld [vmem:[%s245 + $0x80] sm:$0xff]
      %v1532 = vld [vmem:[%s245 + $0x88] sm:$0xff]
      %v1533 = vld [vmem:[%s245 + $0x90] sm:$0xff]
      %v1534 = vld [vmem:[%s245 + $0x98] sm:$0xff]
      %v1539 = vunpack.c.l.b16 %v1531
      %v1540 = vunpack.c.h.b16 %v1531
      %v1541 = vunpack.c.l.b16 %v1532
      %v1542 = vunpack.c.h.b16 %v1532
      %v1543 = vunpack.c.l.b16 %v1533
      %v1544 = vunpack.c.h.b16 %v1533
      %v1545 = vunpack.c.l.b16 %v1534
      %v1546 = vunpack.c.h.b16 %v1534
      %v1547 = vpack.c.b16 %v1539, %v1539
      %v1548 = vpack.c.b16 %v1540, %v1540
      %v1549 = vpack.c.b16 %v1541, %v1541
      %v1550 = vpack.c.b16 %v1542, %v1542
      %v1551 = vpack.c.b16 %v1543, %v1543
      %v1552 = vpack.c.b16 %v1544, %v1544
      %v1553 = vpack.c.b16 %v1545, %v1545
      %v1554 = vpack.c.b16 %v1546, %v1546
      %1563 = vmatprep.subr.bf16.mxu0 0
      %1564 = vmatpush1.bf16.msra.mxu0 %v674
      %1565 = vmatprep.subr.bf16.mxu0 0
      %1566 = vmatpush1.bf16.msra.mxu0 %v673
      %1567 = vmatprep.subr.bf16.mxu0 0
      %1568 = vmatpush1.bf16.msra.mxu0 %v672
      %1569 = vmatprep.subr.bf16.mxu0 0
      %1570 = vmatpush1.bf16.msra.mxu0 %v671
      %1571 = vmatprep.subr.bf16.mxu0 0
      %1572 = vmatpush1.bf16.msra.mxu0 %v670
      %1573 = vmatprep.subr.bf16.mxu0 0
      %1574 = vmatpush1.bf16.msra.mxu0 %v669
      %1575 = vmatprep.subr.bf16.mxu0 0
      %1576 = vmatpush1.bf16.msra.mxu0 %v668
      %1577 = vmatprep.subr.bf16.mxu0 0
      %1578 = vmatpush1.bf16.msra.mxu0 %v667
      %1579 = vmatprep.subr.bf16.mxu0 0
      %1580 = vmatpush2.bf16.msra.mxu0 %v682
      %1581 = vmatprep.subr.bf16.mxu0 0
      %1582 = vmatpush2.bf16.msra.mxu0 %v681
      %1583 = vmatprep.subr.bf16.mxu0 0
      %1584 = vmatpush2.bf16.msra.mxu0 %v680
      %1585 = vmatprep.subr.bf16.mxu0 0
      %1586 = vmatpush2.bf16.msra.mxu0 %v679
      %1587 = vmatprep.subr.bf16.mxu0 0
      %1588 = vmatpush2.bf16.msra.mxu0 %v678
      %1589 = vmatprep.subr.bf16.mxu0 0
      %1590 = vmatpush2.bf16.msra.mxu0 %v677
      %1591 = vmatprep.subr.bf16.mxu0 0
      %1592 = vmatpush2.bf16.msra.mxu0 %v676
      %1593 = vmatprep.subr.bf16.mxu0 0
      %1594 = vmatpush2.bf16.msra.mxu0 %v675
      %1595 = vmatprep.mubr.bf16.mxu0 %v1548
      %1596 = vmatmul.mubr.bf16.gmra.mxu0 %v1547
      %v1597 = vpop.f32.mrf.mxu0
      %v1598 = vadd.f32 0.0, %v1597
      %v1599 = vpop.f32.mrf.mxu0
      %v1600 = vpop.f32.mrf.mxu0
      %v1601 = vpop.f32.mrf.mxu0
      %1602 = vdwg.mxu0
      %1603 = vmatprep.subr.bf16.mxu0 0
      %1604 = vmatpush1.bf16.msra.mxu0 %v690
      %1605 = vmatprep.subr.bf16.mxu0 0
      %1606 = vmatpush1.bf16.msra.mxu0 %v689
      %1607 = vmatprep.subr.bf16.mxu0 0
      %1608 = vmatpush1.bf16.msra.mxu0 %v688
      %1609 = vmatprep.subr.bf16.mxu0 0
      %1610 = vmatpush1.bf16.msra.mxu0 %v687
      %1611 = vmatprep.subr.bf16.mxu0 0
      %1612 = vmatpush1.bf16.msra.mxu0 %v686
      %1613 = vmatprep.subr.bf16.mxu0 0
      %1614 = vmatpush1.bf16.msra.mxu0 %v685
      %1615 = vmatprep.subr.bf16.mxu0 0
      %1616 = vmatpush1.bf16.msra.mxu0 %v684
      %1617 = vmatprep.subr.bf16.mxu0 0
      %1618 = vmatpush1.bf16.msra.mxu0 %v683
      %1619 = vmatprep.subr.bf16.mxu0 0
      %1620 = vmatpush2.bf16.msra.mxu0 %v698
      %1621 = vmatprep.subr.bf16.mxu0 0
      %1622 = vmatpush2.bf16.msra.mxu0 %v697
      %1623 = vmatprep.subr.bf16.mxu0 0
      %1624 = vmatpush2.bf16.msra.mxu0 %v696
      %1625 = vmatprep.subr.bf16.mxu0 0
      %1626 = vmatpush2.bf16.msra.mxu0 %v695
      %1627 = vmatprep.subr.bf16.mxu0 0
      %1628 = vmatpush2.bf16.msra.mxu0 %v694
      %1629 = vmatprep.subr.bf16.mxu0 0
      %1630 = vmatpush2.bf16.msra.mxu0 %v693
      %1631 = vmatprep.subr.bf16.mxu0 0
      %1632 = vmatpush2.bf16.msra.mxu0 %v692
      %1633 = vmatprep.subr.bf16.mxu0 0
      %1634 = vmatpush2.bf16.msra.mxu0 %v691
      %1635 = vmatprep.mubr.bf16.mxu0 %v1550
      %1636 = vmatmul.mubr.bf16.gmra.mxu0 %v1549
      %v1637 = vpop.f32.mrf.mxu0
      %v1638 = vadd.f32 %v1598, %v1637
      %v1639 = vpop.f32.mrf.mxu0
      %v1640 = vpop.f32.mrf.mxu0
      %v1641 = vpop.f32.mrf.mxu0
      %1642 = vdwg.mxu0
      %1643 = vmatprep.subr.bf16.mxu0 0
      %1644 = vmatpush1.bf16.msra.mxu0 %v706
      %1645 = vmatprep.subr.bf16.mxu0 0
      %1646 = vmatpush1.bf16.msra.mxu0 %v705
      %1647 = vmatprep.subr.bf16.mxu0 0
      %1648 = vmatpush1.bf16.msra.mxu0 %v704
      %1649 = vmatprep.subr.bf16.mxu0 0
      %1650 = vmatpush1.bf16.msra.mxu0 %v703
      %1651 = vmatprep.subr.bf16.mxu0 0
      %1652 = vmatpush1.bf16.msra.mxu0 %v702
      %1653 = vmatprep.subr.bf16.mxu0 0
      %1654 = vmatpush1.bf16.msra.mxu0 %v701
      %1655 = vmatprep.subr.bf16.mxu0 0
      %1656 = vmatpush1.bf16.msra.mxu0 %v700
      %1657 = vmatprep.subr.bf16.mxu0 0
      %1658 = vmatpush1.bf16.msra.mxu0 %v699
      %1659 = vmatprep.subr.bf16.mxu0 0
      %1660 = vmatpush2.bf16.msra.mxu0 %v714
      %1661 = vmatprep.subr.bf16.mxu0 0
      %1662 = vmatpush2.bf16.msra.mxu0 %v713
      %1663 = vmatprep.subr.bf16.mxu0 0
      %1664 = vmatpush2.bf16.msra.mxu0 %v712
      %1665 = vmatprep.subr.bf16.mxu0 0
      %1666 = vmatpush2.bf16.msra.mxu0 %v711
      %1667 = vmatprep.subr.bf16.mxu0 0
      %1668 = vmatpush2.bf16.msra.mxu0 %v710
      %1669 = vmatprep.subr.bf16.mxu0 0
      %1670 = vmatpush2.bf16.msra.mxu0 %v709
      %1671 = vmatprep.subr.bf16.mxu0 0
      %1672 = vmatpush2.bf16.msra.mxu0 %v708
      %1673 = vmatprep.subr.bf16.mxu0 0
      %1674 = vmatpush2.bf16.msra.mxu0 %v707
      %1675 = vmatprep.mubr.bf16.mxu0 %v1552
      %1676 = vmatmul.mubr.bf16.gmra.mxu0 %v1551
      %v1677 = vpop.f32.mrf.mxu0
      %v1678 = vadd.f32 %v1638, %v1677
      %v1679 = vpop.f32.mrf.mxu0
      %v1680 = vpop.f32.mrf.mxu0
      %v1681 = vpop.f32.mrf.mxu0
      %1682 = vdwg.mxu0
      %1683 = vmatprep.subr.bf16.mxu0 0
      %1684 = vmatpush1.bf16.msra.mxu0 %v722
      %1685 = vmatprep.subr.bf16.mxu0 0
      %1686 = vmatpush1.bf16.msra.mxu0 %v721
      %1687 = vmatprep.subr.bf16.mxu0 0
      %1688 = vmatpush1.bf16.msra.mxu0 %v720
      %1689 = vmatprep.subr.bf16.mxu0 0
      %1690 = vmatpush1.bf16.msra.mxu0 %v719
      %1691 = vmatprep.subr.bf16.mxu0 0
      %1692 = vmatpush1.bf16.msra.mxu0 %v718
      %1693 = vmatprep.subr.bf16.mxu0 0
      %1694 = vmatpush1.bf16.msra.mxu0 %v717
      %1695 = vmatprep.subr.bf16.mxu0 0
      %1696 = vmatpush1.bf16.msra.mxu0 %v716
      %1697 = vmatprep.subr.bf16.mxu0 0
      %1698 = vmatpush1.bf16.msra.mxu0 %v715
      %1699 = vmatprep.subr.bf16.mxu0 0
      %1700 = vmatpush2.bf16.msra.mxu0 %v730
      %1701 = vmatprep.subr.bf16.mxu0 0
      %1702 = vmatpush2.bf16.msra.mxu0 %v729
      %1703 = vmatprep.subr.bf16.mxu0 0
      %1704 = vmatpush2.bf16.msra.mxu0 %v728
      %1705 = vmatprep.subr.bf16.mxu0 0
      %1706 = vmatpush2.bf16.msra.mxu0 %v727
      %1707 = vmatprep.subr.bf16.mxu0 0
      %1708 = vmatpush2.bf16.msra.mxu0 %v726
      %1709 = vmatprep.subr.bf16.mxu0 0
      %1710 = vmatpush2.bf16.msra.mxu0 %v725
      %1711 = vmatprep.subr.bf16.mxu0 0
      %1712 = vmatpush2.bf16.msra.mxu0 %v724
      %1713 = vmatprep.subr.bf16.mxu0 0
      %1714 = vmatpush2.bf16.msra.mxu0 %v723
      %1715 = vmatprep.mubr.bf16.mxu0 %v1554
      %1716 = vmatmul.mubr.bf16.gmra.mxu0 %v1553
      %v1717 = vpop.f32.mrf.mxu0
      %v1718 = vadd.f32 %v1678, %v1717
      %v1719 = vpop.f32.mrf.mxu0
      %v1720 = vpop.f32.mrf.mxu0
      %v1721 = vpop.f32.mrf.mxu0
      %1722 = vdwg.mxu0
      %v1723 = vld [vmem:[%s245 + $0xa0] sm:$0xff]
      %v1724 = vld [vmem:[%s245 + $0xa8] sm:$0xff]
      %v1725 = vld [vmem:[%s245 + $0xb0] sm:$0xff]
      %v1726 = vld [vmem:[%s245 + $0xb8] sm:$0xff]
      %v1731 = vunpack.c.l.b16 %v1723
      %v1732 = vunpack.c.h.b16 %v1723
      %v1733 = vunpack.c.l.b16 %v1724
      %v1734 = vunpack.c.h.b16 %v1724
      %v1735 = vunpack.c.l.b16 %v1725
      %v1736 = vunpack.c.h.b16 %v1725
      %v1737 = vunpack.c.l.b16 %v1726
      %v1738 = vunpack.c.h.b16 %v1726
      %v1739 = vpack.c.b16 %v1731, %v1731
      %v1740 = vpack.c.b16 %v1732, %v1732
      %v1741 = vpack.c.b16 %v1733, %v1733
      %v1742 = vpack.c.b16 %v1734, %v1734
      %v1743 = vpack.c.b16 %v1735, %v1735
      %v1744 = vpack.c.b16 %v1736, %v1736
      %v1745 = vpack.c.b16 %v1737, %v1737
      %v1746 = vpack.c.b16 %v1738, %v1738
      %1755 = vmatprep.subr.bf16.mxu0 0
      %1756 = vmatpush1.bf16.msra.mxu0 %v674
      %1757 = vmatprep.subr.bf16.mxu0 0
      %1758 = vmatpush1.bf16.msra.mxu0 %v673
      %1759 = vmatprep.subr.bf16.mxu0 0
      %1760 = vmatpush1.bf16.msra.mxu0 %v672
      %1761 = vmatprep.subr.bf16.mxu0 0
      %1762 = vmatpush1.bf16.msra.mxu0 %v671
      %1763 = vmatprep.subr.bf16.mxu0 0
      %1764 = vmatpush1.bf16.msra.mxu0 %v670
      %1765 = vmatprep.subr.bf16.mxu0 0
      %1766 = vmatpush1.bf16.msra.mxu0 %v669
      %1767 = vmatprep.subr.bf16.mxu0 0
      %1768 = vmatpush1.bf16.msra.mxu0 %v668
      %1769 = vmatprep.subr.bf16.mxu0 0
      %1770 = vmatpush1.bf16.msra.mxu0 %v667
      %1771 = vmatprep.subr.bf16.mxu0 0
      %1772 = vmatpush2.bf16.msra.mxu0 %v682
      %1773 = vmatprep.subr.bf16.mxu0 0
      %1774 = vmatpush2.bf16.msra.mxu0 %v681
      %1775 = vmatprep.subr.bf16.mxu0 0
      %1776 = vmatpush2.bf16.msra.mxu0 %v680
      %1777 = vmatprep.subr.bf16.mxu0 0
      %1778 = vmatpush2.bf16.msra.mxu0 %v679
      %1779 = vmatprep.subr.bf16.mxu0 0
      %1780 = vmatpush2.bf16.msra.mxu0 %v678
      %1781 = vmatprep.subr.bf16.mxu0 0
      %1782 = vmatpush2.bf16.msra.mxu0 %v677
      %1783 = vmatprep.subr.bf16.mxu0 0
      %1784 = vmatpush2.bf16.msra.mxu0 %v676
      %1785 = vmatprep.subr.bf16.mxu0 0
      %1786 = vmatpush2.bf16.msra.mxu0 %v675
      %1787 = vmatprep.mubr.bf16.mxu0 %v1740
      %1788 = vmatmul.mubr.bf16.gmra.mxu0 %v1739
      %v1789 = vpop.f32.mrf.mxu0
      %v1790 = vadd.f32 0.0, %v1789
      %v1791 = vpop.f32.mrf.mxu0
      %v1792 = vpop.f32.mrf.mxu0
      %v1793 = vpop.f32.mrf.mxu0
      %1794 = vdwg.mxu0
      %1795 = vmatprep.subr.bf16.mxu0 0
      %1796 = vmatpush1.bf16.msra.mxu0 %v690
      %1797 = vmatprep.subr.bf16.mxu0 0
      %1798 = vmatpush1.bf16.msra.mxu0 %v689
      %1799 = vmatprep.subr.bf16.mxu0 0
      %1800 = vmatpush1.bf16.msra.mxu0 %v688
      %1801 = vmatprep.subr.bf16.mxu0 0
      %1802 = vmatpush1.bf16.msra.mxu0 %v687
      %1803 = vmatprep.subr.bf16.mxu0 0
      %1804 = vmatpush1.bf16.msra.mxu0 %v686
      %1805 = vmatprep.subr.bf16.mxu0 0
      %1806 = vmatpush1.bf16.msra.mxu0 %v685
      %1807 = vmatprep.subr.bf16.mxu0 0
      %1808 = vmatpush1.bf16.msra.mxu0 %v684
      %1809 = vmatprep.subr.bf16.mxu0 0
      %1810 = vmatpush1.bf16.msra.mxu0 %v683
      %1811 = vmatprep.subr.bf16.mxu0 0
      %1812 = vmatpush2.bf16.msra.mxu0 %v698
      %1813 = vmatprep.subr.bf16.mxu0 0
      %1814 = vmatpush2.bf16.msra.mxu0 %v697
      %1815 = vmatprep.subr.bf16.mxu0 0
      %1816 = vmatpush2.bf16.msra.mxu0 %v696
      %1817 = vmatprep.subr.bf16.mxu0 0
      %1818 = vmatpush2.bf16.msra.mxu0 %v695
      %1819 = vmatprep.subr.bf16.mxu0 0
      %1820 = vmatpush2.bf16.msra.mxu0 %v694
      %1821 = vmatprep.subr.bf16.mxu0 0
      %1822 = vmatpush2.bf16.msra.mxu0 %v693
      %1823 = vmatprep.subr.bf16.mxu0 0
      %1824 = vmatpush2.bf16.msra.mxu0 %v692
      %1825 = vmatprep.subr.bf16.mxu0 0
      %1826 = vmatpush2.bf16.msra.mxu0 %v691
      %1827 = vmatprep.mubr.bf16.mxu0 %v1742
      %1828 = vmatmul.mubr.bf16.gmra.mxu0 %v1741
      %v1829 = vpop.f32.mrf.mxu0
      %v1830 = vadd.f32 %v1790, %v1829
      %v1831 = vpop.f32.mrf.mxu0
      %v1832 = vpop.f32.mrf.mxu0
      %v1833 = vpop.f32.mrf.mxu0
      %1834 = vdwg.mxu0
      %1835 = vmatprep.subr.bf16.mxu0 0
      %1836 = vmatpush1.bf16.msra.mxu0 %v706
      %1837 = vmatprep.subr.bf16.mxu0 0
      %1838 = vmatpush1.bf16.msra.mxu0 %v705
      %1839 = vmatprep.subr.bf16.mxu0 0
      %1840 = vmatpush1.bf16.msra.mxu0 %v704
      %1841 = vmatprep.subr.bf16.mxu0 0
      %1842 = vmatpush1.bf16.msra.mxu0 %v703
      %1843 = vmatprep.subr.bf16.mxu0 0
      %1844 = vmatpush1.bf16.msra.mxu0 %v702
      %1845 = vmatprep.subr.bf16.mxu0 0
      %1846 = vmatpush1.bf16.msra.mxu0 %v701
      %1847 = vmatprep.subr.bf16.mxu0 0
      %1848 = vmatpush1.bf16.msra.mxu0 %v700
      %1849 = vmatprep.subr.bf16.mxu0 0
      %1850 = vmatpush1.bf16.msra.mxu0 %v699
      %1851 = vmatprep.subr.bf16.mxu0 0
      %1852 = vmatpush2.bf16.msra.mxu0 %v714
      %1853 = vmatprep.subr.bf16.mxu0 0
      %1854 = vmatpush2.bf16.msra.mxu0 %v713
      %1855 = vmatprep.subr.bf16.mxu0 0
      %1856 = vmatpush2.bf16.msra.mxu0 %v712
      %1857 = vmatprep.subr.bf16.mxu0 0
      %1858 = vmatpush2.bf16.msra.mxu0 %v711
      %1859 = vmatprep.subr.bf16.mxu0 0
      %1860 = vmatpush2.bf16.msra.mxu0 %v710
      %1861 = vmatprep.subr.bf16.mxu0 0
      %1862 = vmatpush2.bf16.msra.mxu0 %v709
      %1863 = vmatprep.subr.bf16.mxu0 0
      %1864 = vmatpush2.bf16.msra.mxu0 %v708
      %1865 = vmatprep.subr.bf16.mxu0 0
      %1866 = vmatpush2.bf16.msra.mxu0 %v707
      %1867 = vmatprep.mubr.bf16.mxu0 %v1744
      %1868 = vmatmul.mubr.bf16.gmra.mxu0 %v1743
      %v1869 = vpop.f32.mrf.mxu0
      %v1870 = vadd.f32 %v1830, %v1869
      %v1871 = vpop.f32.mrf.mxu0
      %v1872 = vpop.f32.mrf.mxu0
      %v1873 = vpop.f32.mrf.mxu0
      %1874 = vdwg.mxu0
      %1875 = vmatprep.subr.bf16.mxu0 0
      %1876 = vmatpush1.bf16.msra.mxu0 %v722
      %1877 = vmatprep.subr.bf16.mxu0 0
      %1878 = vmatpush1.bf16.msra.mxu0 %v721
      %1879 = vmatprep.subr.bf16.mxu0 0
      %1880 = vmatpush1.bf16.msra.mxu0 %v720
      %1881 = vmatprep.subr.bf16.mxu0 0
      %1882 = vmatpush1.bf16.msra.mxu0 %v719
      %1883 = vmatprep.subr.bf16.mxu0 0
      %1884 = vmatpush1.bf16.msra.mxu0 %v718
      %1885 = vmatprep.subr.bf16.mxu0 0
      %1886 = vmatpush1.bf16.msra.mxu0 %v717
      %1887 = vmatprep.subr.bf16.mxu0 0
      %1888 = vmatpush1.bf16.msra.mxu0 %v716
      %1889 = vmatprep.subr.bf16.mxu0 0
      %1890 = vmatpush1.bf16.msra.mxu0 %v715
      %1891 = vmatprep.subr.bf16.mxu0 0
      %1892 = vmatpush2.bf16.msra.mxu0 %v730
      %1893 = vmatprep.subr.bf16.mxu0 0
      %1894 = vmatpush2.bf16.msra.mxu0 %v729
      %1895 = vmatprep.subr.bf16.mxu0 0
      %1896 = vmatpush2.bf16.msra.mxu0 %v728
      %1897 = vmatprep.subr.bf16.mxu0 0
      %1898 = vmatpush2.bf16.msra.mxu0 %v727
      %1899 = vmatprep.subr.bf16.mxu0 0
      %1900 = vmatpush2.bf16.msra.mxu0 %v726
      %1901 = vmatprep.subr.bf16.mxu0 0
      %1902 = vmatpush2.bf16.msra.mxu0 %v725
      %1903 = vmatprep.subr.bf16.mxu0 0
      %1904 = vmatpush2.bf16.msra.mxu0 %v724
      %1905 = vmatprep.subr.bf16.mxu0 0
      %1906 = vmatpush2.bf16.msra.mxu0 %v723
      %1907 = vmatprep.mubr.bf16.mxu0 %v1746
      %1908 = vmatmul.mubr.bf16.gmra.mxu0 %v1745
      %v1909 = vpop.f32.mrf.mxu0
      %v1910 = vadd.f32 %v1870, %v1909
      %v1911 = vpop.f32.mrf.mxu0
      %v1912 = vpop.f32.mrf.mxu0
      %v1913 = vpop.f32.mrf.mxu0
      %1914 = vdwg.mxu0
      %v1915 = vld [vmem:[%s245 + $0xc0] sm:$0xff]
      %v1916 = vld [vmem:[%s245 + $0xc8] sm:$0xff]
      %v1917 = vld [vmem:[%s245 + $0xd0] sm:$0xff]
      %v1918 = vld [vmem:[%s245 + $0xd8] sm:$0xff]
      %v1923 = vunpack.c.l.b16 %v1915
      %v1924 = vunpack.c.h.b16 %v1915
      %v1925 = vunpack.c.l.b16 %v1916
      %v1926 = vunpack.c.h.b16 %v1916
      %v1927 = vunpack.c.l.b16 %v1917
      %v1928 = vunpack.c.h.b16 %v1917
      %v1929 = vunpack.c.l.b16 %v1918
      %v1930 = vunpack.c.h.b16 %v1918
      %v1931 = vpack.c.b16 %v1923, %v1923
      %v1932 = vpack.c.b16 %v1924, %v1924
      %v1933 = vpack.c.b16 %v1925, %v1925
      %v1934 = vpack.c.b16 %v1926, %v1926
      %v1935 = vpack.c.b16 %v1927, %v1927
      %v1936 = vpack.c.b16 %v1928, %v1928
      %v1937 = vpack.c.b16 %v1929, %v1929
      %v1938 = vpack.c.b16 %v1930, %v1930
      %1947 = vmatprep.subr.bf16.mxu0 0
      %1948 = vmatpush1.bf16.msra.mxu0 %v674
      %1949 = vmatprep.subr.bf16.mxu0 0
      %1950 = vmatpush1.bf16.msra.mxu0 %v673
      %1951 = vmatprep.subr.bf16.mxu0 0
      %1952 = vmatpush1.bf16.msra.mxu0 %v672
      %1953 = vmatprep.subr.bf16.mxu0 0
      %1954 = vmatpush1.bf16.msra.mxu0 %v671
      %1955 = vmatprep.subr.bf16.mxu0 0
      %1956 = vmatpush1.bf16.msra.mxu0 %v670
      %1957 = vmatprep.subr.bf16.mxu0 0
      %1958 = vmatpush1.bf16.msra.mxu0 %v669
      %1959 = vmatprep.subr.bf16.mxu0 0
      %1960 = vmatpush1.bf16.msra.mxu0 %v668
      %1961 = vmatprep.subr.bf16.mxu0 0
      %1962 = vmatpush1.bf16.msra.mxu0 %v667
      %1963 = vmatprep.subr.bf16.mxu0 0
      %1964 = vmatpush2.bf16.msra.mxu0 %v682
      %1965 = vmatprep.subr.bf16.mxu0 0
      %1966 = vmatpush2.bf16.msra.mxu0 %v681
      %1967 = vmatprep.subr.bf16.mxu0 0
      %1968 = vmatpush2.bf16.msra.mxu0 %v680
      %1969 = vmatprep.subr.bf16.mxu0 0
      %1970 = vmatpush2.bf16.msra.mxu0 %v679
      %1971 = vmatprep.subr.bf16.mxu0 0
      %1972 = vmatpush2.bf16.msra.mxu0 %v678
      %1973 = vmatprep.subr.bf16.mxu0 0
      %1974 = vmatpush2.bf16.msra.mxu0 %v677
      %1975 = vmatprep.subr.bf16.mxu0 0
      %1976 = vmatpush2.bf16.msra.mxu0 %v676
      %1977 = vmatprep.subr.bf16.mxu0 0
      %1978 = vmatpush2.bf16.msra.mxu0 %v675
      %1979 = vmatprep.mubr.bf16.mxu0 %v1932
      %1980 = vmatmul.mubr.bf16.gmra.mxu0 %v1931
      %v1981 = vpop.f32.mrf.mxu0
      %v1982 = vadd.f32 0.0, %v1981
      %v1983 = vpop.f32.mrf.mxu0
      %v1984 = vpop.f32.mrf.mxu0
      %v1985 = vpop.f32.mrf.mxu0
      %1986 = vdwg.mxu0
      %1987 = vmatprep.subr.bf16.mxu0 0
      %1988 = vmatpush1.bf16.msra.mxu0 %v690
      %1989 = vmatprep.subr.bf16.mxu0 0
      %1990 = vmatpush1.bf16.msra.mxu0 %v689
      %1991 = vmatprep.subr.bf16.mxu0 0
      %1992 = vmatpush1.bf16.msra.mxu0 %v688
      %1993 = vmatprep.subr.bf16.mxu0 0
      %1994 = vmatpush1.bf16.msra.mxu0 %v687
      %1995 = vmatprep.subr.bf16.mxu0 0
      %1996 = vmatpush1.bf16.msra.mxu0 %v686
      %1997 = vmatprep.subr.bf16.mxu0 0
      %1998 = vmatpush1.bf16.msra.mxu0 %v685
      %1999 = vmatprep.subr.bf16.mxu0 0
      %2000 = vmatpush1.bf16.msra.mxu0 %v684
      %2001 = vmatprep.subr.bf16.mxu0 0
      %2002 = vmatpush1.bf16.msra.mxu0 %v683
      %2003 = vmatprep.subr.bf16.mxu0 0
      %2004 = vmatpush2.bf16.msra.mxu0 %v698
      %2005 = vmatprep.subr.bf16.mxu0 0
      %2006 = vmatpush2.bf16.msra.mxu0 %v697
      %2007 = vmatprep.subr.bf16.mxu0 0
      %2008 = vmatpush2.bf16.msra.mxu0 %v696
      %2009 = vmatprep.subr.bf16.mxu0 0
      %2010 = vmatpush2.bf16.msra.mxu0 %v695
      %2011 = vmatprep.subr.bf16.mxu0 0
      %2012 = vmatpush2.bf16.msra.mxu0 %v694
      %2013 = vmatprep.subr.bf16.mxu0 0
      %2014 = vmatpush2.bf16.msra.mxu0 %v693
      %2015 = vmatprep.subr.bf16.mxu0 0
      %2016 = vmatpush2.bf16.msra.mxu0 %v692
      %2017 = vmatprep.subr.bf16.mxu0 0
      %2018 = vmatpush2.bf16.msra.mxu0 %v691
      %2019 = vmatprep.mubr.bf16.mxu0 %v1934
      %2020 = vmatmul.mubr.bf16.gmra.mxu0 %v1933
      %v2021 = vpop.f32.mrf.mxu0
      %v2022 = vadd.f32 %v1982, %v2021
      %v2023 = vpop.f32.mrf.mxu0
      %v2024 = vpop.f32.mrf.mxu0
      %v2025 = vpop.f32.mrf.mxu0
      %2026 = vdwg.mxu0
      %2027 = vmatprep.subr.bf16.mxu0 0
      %2028 = vmatpush1.bf16.msra.mxu0 %v706
      %2029 = vmatprep.subr.bf16.mxu0 0
      %2030 = vmatpush1.bf16.msra.mxu0 %v705
      %2031 = vmatprep.subr.bf16.mxu0 0
      %2032 = vmatpush1.bf16.msra.mxu0 %v704
      %2033 = vmatprep.subr.bf16.mxu0 0
      %2034 = vmatpush1.bf16.msra.mxu0 %v703
      %2035 = vmatprep.subr.bf16.mxu0 0
      %2036 = vmatpush1.bf16.msra.mxu0 %v702
      %2037 = vmatprep.subr.bf16.mxu0 0
      %2038 = vmatpush1.bf16.msra.mxu0 %v701
      %2039 = vmatprep.subr.bf16.mxu0 0
      %2040 = vmatpush1.bf16.msra.mxu0 %v700
      %2041 = vmatprep.subr.bf16.mxu0 0
      %2042 = vmatpush1.bf16.msra.mxu0 %v699
      %2043 = vmatprep.subr.bf16.mxu0 0
      %2044 = vmatpush2.bf16.msra.mxu0 %v714
      %2045 = vmatprep.subr.bf16.mxu0 0
      %2046 = vmatpush2.bf16.msra.mxu0 %v713
      %2047 = vmatprep.subr.bf16.mxu0 0
      %2048 = vmatpush2.bf16.msra.mxu0 %v712
      %2049 = vmatprep.subr.bf16.mxu0 0
      %2050 = vmatpush2.bf16.msra.mxu0 %v711
      %2051 = vmatprep.subr.bf16.mxu0 0
      %2052 = vmatpush2.bf16.msra.mxu0 %v710
      %2053 = vmatprep.subr.bf16.mxu0 0
      %2054 = vmatpush2.bf16.msra.mxu0 %v709
      %2055 = vmatprep.subr.bf16.mxu0 0
      %2056 = vmatpush2.bf16.msra.mxu0 %v708
      %2057 = vmatprep.subr.bf16.mxu0 0
      %2058 = vmatpush2.bf16.msra.mxu0 %v707
      %2059 = vmatprep.mubr.bf16.mxu0 %v1936
      %2060 = vmatmul.mubr.bf16.gmra.mxu0 %v1935
      %v2061 = vpop.f32.mrf.mxu0
      %v2062 = vadd.f32 %v2022, %v2061
      %v2063 = vpop.f32.mrf.mxu0
      %v2064 = vpop.f32.mrf.mxu0
      %v2065 = vpop.f32.mrf.mxu0
      %2066 = vdwg.mxu0
      %2067 = vmatprep.subr.bf16.mxu0 0
      %2068 = vmatpush1.bf16.msra.mxu0 %v722
      %2069 = vmatprep.subr.bf16.mxu0 0
      %2070 = vmatpush1.bf16.msra.mxu0 %v721
      %2071 = vmatprep.subr.bf16.mxu0 0
      %2072 = vmatpush1.bf16.msra.mxu0 %v720
      %2073 = vmatprep.subr.bf16.mxu0 0
      %2074 = vmatpush1.bf16.msra.mxu0 %v719
      %2075 = vmatprep.subr.bf16.mxu0 0
      %2076 = vmatpush1.bf16.msra.mxu0 %v718
      %2077 = vmatprep.subr.bf16.mxu0 0
      %2078 = vmatpush1.bf16.msra.mxu0 %v717
      %2079 = vmatprep.subr.bf16.mxu0 0
      %2080 = vmatpush1.bf16.msra.mxu0 %v716
      %2081 = vmatprep.subr.bf16.mxu0 0
      %2082 = vmatpush1.bf16.msra.mxu0 %v715
      %2083 = vmatprep.subr.bf16.mxu0 0
      %2084 = vmatpush2.bf16.msra.mxu0 %v730
      %2085 = vmatprep.subr.bf16.mxu0 0
      %2086 = vmatpush2.bf16.msra.mxu0 %v729
      %2087 = vmatprep.subr.bf16.mxu0 0
      %2088 = vmatpush2.bf16.msra.mxu0 %v728
      %2089 = vmatprep.subr.bf16.mxu0 0
      %2090 = vmatpush2.bf16.msra.mxu0 %v727
      %2091 = vmatprep.subr.bf16.mxu0 0
      %2092 = vmatpush2.bf16.msra.mxu0 %v726
      %2093 = vmatprep.subr.bf16.mxu0 0
      %2094 = vmatpush2.bf16.msra.mxu0 %v725
      %2095 = vmatprep.subr.bf16.mxu0 0
      %2096 = vmatpush2.bf16.msra.mxu0 %v724
      %2097 = vmatprep.subr.bf16.mxu0 0
      %2098 = vmatpush2.bf16.msra.mxu0 %v723
      %2099 = vmatprep.mubr.bf16.mxu0 %v1938
      %2100 = vmatmul.mubr.bf16.gmra.mxu0 %v1937
      %v2101 = vpop.f32.mrf.mxu0
      %v2102 = vadd.f32 %v2062, %v2101
      %v2103 = vpop.f32.mrf.mxu0
      %v2104 = vpop.f32.mrf.mxu0
      %v2105 = vpop.f32.mrf.mxu0
      %2106 = vdwg.mxu0
      %v2107 = vld [vmem:[%s245 + $0xe0] sm:$0xff]
      %v2108 = vld [vmem:[%s245 + $0xe8] sm:$0xff]
      %v2109 = vld [vmem:[%s245 + $0xf0] sm:$0xff]
      %v2110 = vld [vmem:[%s245 + $0xf8] sm:$0xff]
      %v2115 = vunpack.c.l.b16 %v2107
      %v2116 = vunpack.c.h.b16 %v2107
      %v2117 = vunpack.c.l.b16 %v2108
      %v2118 = vunpack.c.h.b16 %v2108
      %v2119 = vunpack.c.l.b16 %v2109
      %v2120 = vunpack.c.h.b16 %v2109
      %v2121 = vunpack.c.l.b16 %v2110
      %v2122 = vunpack.c.h.b16 %v2110
      %v2123 = vpack.c.b16 %v2115, %v2115
      %v2124 = vpack.c.b16 %v2116, %v2116
      %v2125 = vpack.c.b16 %v2117, %v2117
      %v2126 = vpack.c.b16 %v2118, %v2118
      %v2127 = vpack.c.b16 %v2119, %v2119
      %v2128 = vpack.c.b16 %v2120, %v2120
      %v2129 = vpack.c.b16 %v2121, %v2121
      %v2130 = vpack.c.b16 %v2122, %v2122
      %2139 = vmatprep.subr.bf16.mxu0 0
      %2140 = vmatpush1.bf16.msra.mxu0 %v674
      %2141 = vmatprep.subr.bf16.mxu0 0
      %2142 = vmatpush1.bf16.msra.mxu0 %v673
      %2143 = vmatprep.subr.bf16.mxu0 0
      %2144 = vmatpush1.bf16.msra.mxu0 %v672
      %2145 = vmatprep.subr.bf16.mxu0 0
      %2146 = vmatpush1.bf16.msra.mxu0 %v671
      %2147 = vmatprep.subr.bf16.mxu0 0
      %2148 = vmatpush1.bf16.msra.mxu0 %v670
      %2149 = vmatprep.subr.bf16.mxu0 0
      %2150 = vmatpush1.bf16.msra.mxu0 %v669
      %2151 = vmatprep.subr.bf16.mxu0 0
      %2152 = vmatpush1.bf16.msra.mxu0 %v668
      %2153 = vmatprep.subr.bf16.mxu0 0
      %2154 = vmatpush1.bf16.msra.mxu0 %v667
      %2155 = vmatprep.subr.bf16.mxu0 0
      %2156 = vmatpush2.bf16.msra.mxu0 %v682
      %2157 = vmatprep.subr.bf16.mxu0 0
      %2158 = vmatpush2.bf16.msra.mxu0 %v681
      %2159 = vmatprep.subr.bf16.mxu0 0
      %2160 = vmatpush2.bf16.msra.mxu0 %v680
      %2161 = vmatprep.subr.bf16.mxu0 0
      %2162 = vmatpush2.bf16.msra.mxu0 %v679
      %2163 = vmatprep.subr.bf16.mxu0 0
      %2164 = vmatpush2.bf16.msra.mxu0 %v678
      %2165 = vmatprep.subr.bf16.mxu0 0
      %2166 = vmatpush2.bf16.msra.mxu0 %v677
      %2167 = vmatprep.subr.bf16.mxu0 0
      %2168 = vmatpush2.bf16.msra.mxu0 %v676
      %2169 = vmatprep.subr.bf16.mxu0 0
      %2170 = vmatpush2.bf16.msra.mxu0 %v675
      %2171 = vmatprep.mubr.bf16.mxu0 %v2124
      %2172 = vmatmul.mubr.bf16.gmra.mxu0 %v2123
      %v2173 = vpop.f32.mrf.mxu0
      %v2174 = vadd.f32 0.0, %v2173
      %v2175 = vpop.f32.mrf.mxu0
      %v2176 = vpop.f32.mrf.mxu0
      %v2177 = vpop.f32.mrf.mxu0
      %2178 = vdwg.mxu0
      %2179 = vmatprep.subr.bf16.mxu0 0
      %2180 = vmatpush1.bf16.msra.mxu0 %v690
      %2181 = vmatprep.subr.bf16.mxu0 0
      %2182 = vmatpush1.bf16.msra.mxu0 %v689
      %2183 = vmatprep.subr.bf16.mxu0 0
      %2184 = vmatpush1.bf16.msra.mxu0 %v688
      %2185 = vmatprep.subr.bf16.mxu0 0
      %2186 = vmatpush1.bf16.msra.mxu0 %v687
      %2187 = vmatprep.subr.bf16.mxu0 0
      %2188 = vmatpush1.bf16.msra.mxu0 %v686
      %2189 = vmatprep.subr.bf16.mxu0 0
      %2190 = vmatpush1.bf16.msra.mxu0 %v685
      %2191 = vmatprep.subr.bf16.mxu0 0
      %2192 = vmatpush1.bf16.msra.mxu0 %v684
      %2193 = vmatprep.subr.bf16.mxu0 0
      %2194 = vmatpush1.bf16.msra.mxu0 %v683
      %2195 = vmatprep.subr.bf16.mxu0 0
      %2196 = vmatpush2.bf16.msra.mxu0 %v698
      %2197 = vmatprep.subr.bf16.mxu0 0
      %2198 = vmatpush2.bf16.msra.mxu0 %v697
      %2199 = vmatprep.subr.bf16.mxu0 0
      %2200 = vmatpush2.bf16.msra.mxu0 %v696
      %2201 = vmatprep.subr.bf16.mxu0 0
      %2202 = vmatpush2.bf16.msra.mxu0 %v695
      %2203 = vmatprep.subr.bf16.mxu0 0
      %2204 = vmatpush2.bf16.msra.mxu0 %v694
      %2205 = vmatprep.subr.bf16.mxu0 0
      %2206 = vmatpush2.bf16.msra.mxu0 %v693
      %2207 = vmatprep.subr.bf16.mxu0 0
      %2208 = vmatpush2.bf16.msra.mxu0 %v692
      %2209 = vmatprep.subr.bf16.mxu0 0
      %2210 = vmatpush2.bf16.msra.mxu0 %v691
      %2211 = vmatprep.mubr.bf16.mxu0 %v2126
      %2212 = vmatmul.mubr.bf16.gmra.mxu0 %v2125
      %v2213 = vpop.f32.mrf.mxu0
      %v2214 = vadd.f32 %v2174, %v2213
      %v2215 = vpop.f32.mrf.mxu0
      %v2216 = vpop.f32.mrf.mxu0
      %v2217 = vpop.f32.mrf.mxu0
      %2218 = vdwg.mxu0
      %2219 = vmatprep.subr.bf16.mxu0 0
      %2220 = vmatpush1.bf16.msra.mxu0 %v706
      %2221 = vmatprep.subr.bf16.mxu0 0
      %2222 = vmatpush1.bf16.msra.mxu0 %v705
      %2223 = vmatprep.subr.bf16.mxu0 0
      %2224 = vmatpush1.bf16.msra.mxu0 %v704
      %2225 = vmatprep.subr.bf16.mxu0 0
      %2226 = vmatpush1.bf16.msra.mxu0 %v703
      %2227 = vmatprep.subr.bf16.mxu0 0
      %2228 = vmatpush1.bf16.msra.mxu0 %v702
      %2229 = vmatprep.subr.bf16.mxu0 0
      %2230 = vmatpush1.bf16.msra.mxu0 %v701
      %2231 = vmatprep.subr.bf16.mxu0 0
      %2232 = vmatpush1.bf16.msra.mxu0 %v700
      %2233 = vmatprep.subr.bf16.mxu0 0
      %2234 = vmatpush1.bf16.msra.mxu0 %v699
      %2235 = vmatprep.subr.bf16.mxu0 0
      %2236 = vmatpush2.bf16.msra.mxu0 %v714
      %2237 = vmatprep.subr.bf16.mxu0 0
      %2238 = vmatpush2.bf16.msra.mxu0 %v713
      %2239 = vmatprep.subr.bf16.mxu0 0
      %2240 = vmatpush2.bf16.msra.mxu0 %v712
      %2241 = vmatprep.subr.bf16.mxu0 0
      %2242 = vmatpush2.bf16.msra.mxu0 %v711
      %2243 = vmatprep.subr.bf16.mxu0 0
      %2244 = vmatpush2.bf16.msra.mxu0 %v710
      %2245 = vmatprep.subr.bf16.mxu0 0
      %2246 = vmatpush2.bf16.msra.mxu0 %v709
      %2247 = vmatprep.subr.bf16.mxu0 0
      %2248 = vmatpush2.bf16.msra.mxu0 %v708
      %2249 = vmatprep.subr.bf16.mxu0 0
      %2250 = vmatpush2.bf16.msra.mxu0 %v707
      %2251 = vmatprep.mubr.bf16.mxu0 %v2128
      %2252 = vmatmul.mubr.bf16.gmra.mxu0 %v2127
      %v2253 = vpop.f32.mrf.mxu0
      %v2254 = vadd.f32 %v2214, %v2253
      %v2255 = vpop.f32.mrf.mxu0
      %v2256 = vpop.f32.mrf.mxu0
      %v2257 = vpop.f32.mrf.mxu0
      %2258 = vdwg.mxu0
      %2259 = vmatprep.subr.bf16.mxu0 0
      %2260 = vmatpush1.bf16.msra.mxu0 %v722
      %2261 = vmatprep.subr.bf16.mxu0 0
      %2262 = vmatpush1.bf16.msra.mxu0 %v721
      %2263 = vmatprep.subr.bf16.mxu0 0
      %2264 = vmatpush1.bf16.msra.mxu0 %v720
      %2265 = vmatprep.subr.bf16.mxu0 0
      %2266 = vmatpush1.bf16.msra.mxu0 %v719
      %2267 = vmatprep.subr.bf16.mxu0 0
      %2268 = vmatpush1.bf16.msra.mxu0 %v718
      %2269 = vmatprep.subr.bf16.mxu0 0
      %2270 = vmatpush1.bf16.msra.mxu0 %v717
      %2271 = vmatprep.subr.bf16.mxu0 0
      %2272 = vmatpush1.bf16.msra.mxu0 %v716
      %2273 = vmatprep.subr.bf16.mxu0 0
      %2274 = vmatpush1.bf16.msra.mxu0 %v715
      %2275 = vmatprep.subr.bf16.mxu0 0
      %2276 = vmatpush2.bf16.msra.mxu0 %v730
      %2277 = vmatprep.subr.bf16.mxu0 0
      %2278 = vmatpush2.bf16.msra.mxu0 %v729
      %2279 = vmatprep.subr.bf16.mxu0 0
      %2280 = vmatpush2.bf16.msra.mxu0 %v728
      %2281 = vmatprep.subr.bf16.mxu0 0
      %2282 = vmatpush2.bf16.msra.mxu0 %v727
      %2283 = vmatprep.subr.bf16.mxu0 0
      %2284 = vmatpush2.bf16.msra.mxu0 %v726
      %2285 = vmatprep.subr.bf16.mxu0 0
      %2286 = vmatpush2.bf16.msra.mxu0 %v725
      %2287 = vmatprep.subr.bf16.mxu0 0
      %2288 = vmatpush2.bf16.msra.mxu0 %v724
      %2289 = vmatprep.subr.bf16.mxu0 0
      %2290 = vmatpush2.bf16.msra.mxu0 %v723
      %2291 = vmatprep.mubr.bf16.mxu0 %v2130
      %2292 = vmatmul.mubr.bf16.gmra.mxu0 %v2129
      %v2293 = vpop.f32.mrf.mxu0
      %v2294 = vadd.f32 %v2254, %v2293
      %v2295 = vpop.f32.mrf.mxu0
      %v2296 = vpop.f32.mrf.mxu0
      %v2297 = vpop.f32.mrf.mxu0
      %2298 = vdwg.mxu0
      %v2299 = vld [vmem:[%s245 + $0x100] sm:$0xff]
      %v2300 = vld [vmem:[%s245 + $0x108] sm:$0xff]
      %v2301 = vld [vmem:[%s245 + $0x110] sm:$0xff]
      %v2302 = vld [vmem:[%s245 + $0x118] sm:$0xff]
      %v2307 = vunpack.c.l.b16 %v2299
      %v2308 = vunpack.c.h.b16 %v2299
      %v2309 = vunpack.c.l.b16 %v2300
      %v2310 = vunpack.c.h.b16 %v2300
      %v2311 = vunpack.c.l.b16 %v2301
      %v2312 = vunpack.c.h.b16 %v2301
      %v2313 = vunpack.c.l.b16 %v2302
      %v2314 = vunpack.c.h.b16 %v2302
      %v2315 = vpack.c.b16 %v2307, %v2307
      %v2316 = vpack.c.b16 %v2308, %v2308
      %v2317 = vpack.c.b16 %v2309, %v2309
      %v2318 = vpack.c.b16 %v2310, %v2310
      %v2319 = vpack.c.b16 %v2311, %v2311
      %v2320 = vpack.c.b16 %v2312, %v2312
      %v2321 = vpack.c.b16 %v2313, %v2313
      %v2322 = vpack.c.b16 %v2314, %v2314
      %2331 = vmatprep.subr.bf16.mxu0 0
      %2332 = vmatpush1.bf16.msra.mxu0 %v674
      %2333 = vmatprep.subr.bf16.mxu0 0
      %2334 = vmatpush1.bf16.msra.mxu0 %v673
      %2335 = vmatprep.subr.bf16.mxu0 0
      %2336 = vmatpush1.bf16.msra.mxu0 %v672
      %2337 = vmatprep.subr.bf16.mxu0 0
      %2338 = vmatpush1.bf16.msra.mxu0 %v671
      %2339 = vmatprep.subr.bf16.mxu0 0
      %2340 = vmatpush1.bf16.msra.mxu0 %v670
      %2341 = vmatprep.subr.bf16.mxu0 0
      %2342 = vmatpush1.bf16.msra.mxu0 %v669
      %2343 = vmatprep.subr.bf16.mxu0 0
      %2344 = vmatpush1.bf16.msra.mxu0 %v668
      %2345 = vmatprep.subr.bf16.mxu0 0
      %2346 = vmatpush1.bf16.msra.mxu0 %v667
      %2347 = vmatprep.subr.bf16.mxu0 0
      %2348 = vmatpush2.bf16.msra.mxu0 %v682
      %2349 = vmatprep.subr.bf16.mxu0 0
      %2350 = vmatpush2.bf16.msra.mxu0 %v681
      %2351 = vmatprep.subr.bf16.mxu0 0
      %2352 = vmatpush2.bf16.msra.mxu0 %v680
      %2353 = vmatprep.subr.bf16.mxu0 0
      %2354 = vmatpush2.bf16.msra.mxu0 %v679
      %2355 = vmatprep.subr.bf16.mxu0 0
      %2356 = vmatpush2.bf16.msra.mxu0 %v678
      %2357 = vmatprep.subr.bf16.mxu0 0
      %2358 = vmatpush2.bf16.msra.mxu0 %v677
      %2359 = vmatprep.subr.bf16.mxu0 0
      %2360 = vmatpush2.bf16.msra.mxu0 %v676
      %2361 = vmatprep.subr.bf16.mxu0 0
      %2362 = vmatpush2.bf16.msra.mxu0 %v675
      %2363 = vmatprep.mubr.bf16.mxu0 %v2316
      %2364 = vmatmul.mubr.bf16.gmra.mxu0 %v2315
      %v2365 = vpop.f32.mrf.mxu0
      %v2366 = vadd.f32 0.0, %v2365
      %v2367 = vpop.f32.mrf.mxu0
      %v2368 = vpop.f32.mrf.mxu0
      %v2369 = vpop.f32.mrf.mxu0
      %2370 = vdwg.mxu0
      %2371 = vmatprep.subr.bf16.mxu0 0
      %2372 = vmatpush1.bf16.msra.mxu0 %v690
      %2373 = vmatprep.subr.bf16.mxu0 0
      %2374 = vmatpush1.bf16.msra.mxu0 %v689
      %2375 = vmatprep.subr.bf16.mxu0 0
      %2376 = vmatpush1.bf16.msra.mxu0 %v688
      %2377 = vmatprep.subr.bf16.mxu0 0
      %2378 = vmatpush1.bf16.msra.mxu0 %v687
      %2379 = vmatprep.subr.bf16.mxu0 0
      %2380 = vmatpush1.bf16.msra.mxu0 %v686
      %2381 = vmatprep.subr.bf16.mxu0 0
      %2382 = vmatpush1.bf16.msra.mxu0 %v685
      %2383 = vmatprep.subr.bf16.mxu0 0
      %2384 = vmatpush1.bf16.msra.mxu0 %v684
      %2385 = vmatprep.subr.bf16.mxu0 0
      %2386 = vmatpush1.bf16.msra.mxu0 %v683
      %2387 = vmatprep.subr.bf16.mxu0 0
      %2388 = vmatpush2.bf16.msra.mxu0 %v698
      %2389 = vmatprep.subr.bf16.mxu0 0
      %2390 = vmatpush2.bf16.msra.mxu0 %v697
      %2391 = vmatprep.subr.bf16.mxu0 0
      %2392 = vmatpush2.bf16.msra.mxu0 %v696
      %2393 = vmatprep.subr.bf16.mxu0 0
      %2394 = vmatpush2.bf16.msra.mxu0 %v695
      %2395 = vmatprep.subr.bf16.mxu0 0
      %2396 = vmatpush2.bf16.msra.mxu0 %v694
      %2397 = vmatprep.subr.bf16.mxu0 0
      %2398 = vmatpush2.bf16.msra.mxu0 %v693
      %2399 = vmatprep.subr.bf16.mxu0 0
      %2400 = vmatpush2.bf16.msra.mxu0 %v692
      %2401 = vmatprep.subr.bf16.mxu0 0
      %2402 = vmatpush2.bf16.msra.mxu0 %v691
      %2403 = vmatprep.mubr.bf16.mxu0 %v2318
      %2404 = vmatmul.mubr.bf16.gmra.mxu0 %v2317
      %v2405 = vpop.f32.mrf.mxu0
      %v2406 = vadd.f32 %v2366, %v2405
      %v2407 = vpop.f32.mrf.mxu0
      %v2408 = vpop.f32.mrf.mxu0
      %v2409 = vpop.f32.mrf.mxu0
      %2410 = vdwg.mxu0
      %2411 = vmatprep.subr.bf16.mxu0 0
      %2412 = vmatpush1.bf16.msra.mxu0 %v706
      %2413 = vmatprep.subr.bf16.mxu0 0
      %2414 = vmatpush1.bf16.msra.mxu0 %v705
      %2415 = vmatprep.subr.bf16.mxu0 0
      %2416 = vmatpush1.bf16.msra.mxu0 %v704
      %2417 = vmatprep.subr.bf16.mxu0 0
      %2418 = vmatpush1.bf16.msra.mxu0 %v703
      %2419 = vmatprep.subr.bf16.mxu0 0
      %2420 = vmatpush1.bf16.msra.mxu0 %v702
      %2421 = vmatprep.subr.bf16.mxu0 0
      %2422 = vmatpush1.bf16.msra.mxu0 %v701
      %2423 = vmatprep.subr.bf16.mxu0 0
      %2424 = vmatpush1.bf16.msra.mxu0 %v700
      %2425 = vmatprep.subr.bf16.mxu0 0
      %2426 = vmatpush1.bf16.msra.mxu0 %v699
      %2427 = vmatprep.subr.bf16.mxu0 0
      %2428 = vmatpush2.bf16.msra.mxu0 %v714
      %2429 = vmatprep.subr.bf16.mxu0 0
      %2430 = vmatpush2.bf16.msra.mxu0 %v713
      %2431 = vmatprep.subr.bf16.mxu0 0
      %2432 = vmatpush2.bf16.msra.mxu0 %v712
      %2433 = vmatprep.subr.bf16.mxu0 0
      %2434 = vmatpush2.bf16.msra.mxu0 %v711
      %2435 = vmatprep.subr.bf16.mxu0 0
      %2436 = vmatpush2.bf16.msra.mxu0 %v710
      %2437 = vmatprep.subr.bf16.mxu0 0
      %2438 = vmatpush2.bf16.msra.mxu0 %v709
      %2439 = vmatprep.subr.bf16.mxu0 0
      %2440 = vmatpush2.bf16.msra.mxu0 %v708
      %2441 = vmatprep.subr.bf16.mxu0 0
      %2442 = vmatpush2.bf16.msra.mxu0 %v707
      %2443 = vmatprep.mubr.bf16.mxu0 %v2320
      %2444 = vmatmul.mubr.bf16.gmra.mxu0 %v2319
      %v2445 = vpop.f32.mrf.mxu0
      %v2446 = vadd.f32 %v2406, %v2445
      %v2447 = vpop.f32.mrf.mxu0
      %v2448 = vpop.f32.mrf.mxu0
      %v2449 = vpop.f32.mrf.mxu0
      %2450 = vdwg.mxu0
      %2451 = vmatprep.subr.bf16.mxu0 0
      %2452 = vmatpush1.bf16.msra.mxu0 %v722
      %2453 = vmatprep.subr.bf16.mxu0 0
      %2454 = vmatpush1.bf16.msra.mxu0 %v721
      %2455 = vmatprep.subr.bf16.mxu0 0
      %2456 = vmatpush1.bf16.msra.mxu0 %v720
      %2457 = vmatprep.subr.bf16.mxu0 0
      %2458 = vmatpush1.bf16.msra.mxu0 %v719
      %2459 = vmatprep.subr.bf16.mxu0 0
      %2460 = vmatpush1.bf16.msra.mxu0 %v718
      %2461 = vmatprep.subr.bf16.mxu0 0
      %2462 = vmatpush1.bf16.msra.mxu0 %v717
      %2463 = vmatprep.subr.bf16.mxu0 0
      %2464 = vmatpush1.bf16.msra.mxu0 %v716
      %2465 = vmatprep.subr.bf16.mxu0 0
      %2466 = vmatpush1.bf16.msra.mxu0 %v715
      %2467 = vmatprep.subr.bf16.mxu0 0
      %2468 = vmatpush2.bf16.msra.mxu0 %v730
      %2469 = vmatprep.subr.bf16.mxu0 0
      %2470 = vmatpush2.bf16.msra.mxu0 %v729
      %2471 = vmatprep.subr.bf16.mxu0 0
      %2472 = vmatpush2.bf16.msra.mxu0 %v728
      %2473 = vmatprep.subr.bf16.mxu0 0
      %2474 = vmatpush2.bf16.msra.mxu0 %v727
      %2475 = vmatprep.subr.bf16.mxu0 0
      %2476 = vmatpush2.bf16.msra.mxu0 %v726
      %2477 = vmatprep.subr.bf16.mxu0 0
      %2478 = vmatpush2.bf16.msra.mxu0 %v725
      %2479 = vmatprep.subr.bf16.mxu0 0
      %2480 = vmatpush2.bf16.msra.mxu0 %v724
      %2481 = vmatprep.subr.bf16.mxu0 0
      %2482 = vmatpush2.bf16.msra.mxu0 %v723
      %2483 = vmatprep.mubr.bf16.mxu0 %v2322
      %2484 = vmatmul.mubr.bf16.gmra.mxu0 %v2321
      %v2485 = vpop.f32.mrf.mxu0
      %v2486 = vadd.f32 %v2446, %v2485
      %v2487 = vpop.f32.mrf.mxu0
      %v2488 = vpop.f32.mrf.mxu0
      %v2489 = vpop.f32.mrf.mxu0
      %2490 = vdwg.mxu0
      %2492 = vrot.lane.b32.xlu0 %v1142, 32
      %v2493 = vpop.permute.xlu0 %2492
      %2496 = vrot.lane.b32.xlu0 %v1334, 64
      %v2497 = vpop.permute.xlu0 %2496
      %2500 = vrot.lane.b32.xlu0 %v1526, 96
      %v2501 = vpop.permute.xlu0 %2500
      %2504 = vrot.lane.b32.xlu0 %v1910, 32
      %v2505 = vpop.permute.xlu0 %2504
      %2508 = vrot.lane.b32.xlu0 %v2102, 64
      %v2509 = vpop.permute.xlu0 %2508
      %2512 = vrot.lane.b32.xlu0 %v2294, 96
      %v2513 = vpop.permute.xlu0 %2512
      %vm2515 = vcmask 261120
      %v2516 = vsel %vm2515, %v950, %v2493
      %vm2517 = vcmask 523264
      %v2518 = vsel %vm2517, %v2516, %v2497
      %vm2519 = vcmask 785408
      %v2520 = vsel %vm2519, %v2518, %v2501
      %v2521 = vsel %vm2515, %v1718, %v2505
      %v2522 = vsel %vm2517, %v2521, %v2509
      %v2523 = vsel %vm2519, %v2522, %v2513
      %v2524 = vpack.c.bf16 %v2520, %v2520
      %v2525 = vpack.c.bf16 %v2523, %v2523
      %v2526 = vpack.c.bf16 %v2486, %v2486
      %v2527 = vld [vmem:[%s2] sm:$0xff]
      %v2528 = vld [vmem:[%s2 + $0x8] sm:$0xff]
      %v2529 = vld [vmem:[%s2 + $0x10] sm:$0xff]
      %v2530 = vld [vmem:[%s2 + $0x18] sm:$0xff]
      %v2531 = vld [vmem:[%s2 + $0x20] sm:$0xff]
      %v2532 = vld [vmem:[%s2 + $0x28] sm:$0xff]
      %v2533 = vld [vmem:[%s2 + $0x30] sm:$0xff]
      %v2534 = vld [vmem:[%s2 + $0x38] sm:$0xff]
      %v2535 = vld [vmem:[%s2 + $0x40] sm:$0xff]
      %v2536 = vld [vmem:[%s2 + $0x48] sm:$0xff]
      %v2537 = vld [vmem:[%s2 + $0x50] sm:$0xff]
      %v2538 = vld [vmem:[%s2 + $0x58] sm:$0xff]
      %v2539 = vld [vmem:[%s2 + $0x60] sm:$0xff]
      %v2540 = vld [vmem:[%s2 + $0x68] sm:$0xff]
      %v2541 = vld [vmem:[%s2 + $0x70] sm:$0xff]
      %v2542 = vld [vmem:[%s2 + $0x78] sm:$0xff]
      %v2543 = vld [vmem:[%s2 + $0x80] sm:$0xff]
      %v2544 = vld [vmem:[%s2 + $0x88] sm:$0xff]
      %v2545 = vld [vmem:[%s2 + $0x90] sm:$0xff]
      %v2546 = vld [vmem:[%s2 + $0x98] sm:$0xff]
      %v2547 = vld [vmem:[%s2 + $0xa0] sm:$0xff]
      %v2548 = vld [vmem:[%s2 + $0xa8] sm:$0xff]
      %v2549 = vld [vmem:[%s2 + $0xb0] sm:$0xff]
      %v2550 = vld [vmem:[%s2 + $0xb8] sm:$0xff]
      %v2551 = vld [vmem:[%s2 + $0xc0] sm:$0xff]
      %v2552 = vld [vmem:[%s2 + $0xc8] sm:$0xff]
      %v2553 = vld [vmem:[%s2 + $0xd0] sm:$0xff]
      %v2554 = vld [vmem:[%s2 + $0xd8] sm:$0xff]
      %v2555 = vld [vmem:[%s2 + $0xe0] sm:$0xff]
      %v2556 = vld [vmem:[%s2 + $0xe8] sm:$0xff]
      %v2557 = vld [vmem:[%s2 + $0xf0] sm:$0xff]
      %v2558 = vld [vmem:[%s2 + $0xf8] sm:$0xff]
      %v2559 = vld [vmem:[%s2 + $0x100] sm:$0xff]
      %v2560 = vld [vmem:[%s2 + $0x108] sm:$0xff]
      %v2561 = vld [vmem:[%s2 + $0x110] sm:$0xff]
      %v2562 = vld [vmem:[%s2 + $0x118] sm:$0xff]
      %v2563 = vld [vmem:[%s2 + $0x120] sm:$0xff]
      %v2564 = vld [vmem:[%s2 + $0x128] sm:$0xff]
      %v2565 = vld [vmem:[%s2 + $0x130] sm:$0xff]
      %v2566 = vld [vmem:[%s2 + $0x138] sm:$0xff]
      %v2567 = vld [vmem:[%s2 + $0x140] sm:$0xff]
      %v2568 = vld [vmem:[%s2 + $0x148] sm:$0xff]
      %v2569 = vld [vmem:[%s2 + $0x150] sm:$0xff]
      %v2570 = vld [vmem:[%s2 + $0x158] sm:$0xff]
      %v2571 = vld [vmem:[%s2 + $0x160] sm:$0xff]
      %v2572 = vld [vmem:[%s2 + $0x168] sm:$0xff]
      %v2573 = vld [vmem:[%s2 + $0x170] sm:$0xff]
      %v2574 = vld [vmem:[%s2 + $0x178] sm:$0xff]
      %v2575 = vld [vmem:[%s2 + $0x180] sm:$0xff]
      %v2576 = vld [vmem:[%s2 + $0x188] sm:$0xff]
      %v2577 = vld [vmem:[%s2 + $0x190] sm:$0xff]
      %v2578 = vld [vmem:[%s2 + $0x198] sm:$0xff]
      %v2579 = vld [vmem:[%s2 + $0x1a0] sm:$0xff]
      %v2580 = vld [vmem:[%s2 + $0x1a8] sm:$0xff]
      %v2581 = vld [vmem:[%s2 + $0x1b0] sm:$0xff]
      %v2582 = vld [vmem:[%s2 + $0x1b8] sm:$0xff]
      %v2583 = vld [vmem:[%s2 + $0x1c0] sm:$0xff]
      %v2584 = vld [vmem:[%s2 + $0x1c8] sm:$0xff]
      %v2585 = vld [vmem:[%s2 + $0x1d0] sm:$0xff]
      %v2586 = vld [vmem:[%s2 + $0x1d8] sm:$0xff]
      %v2587 = vld [vmem:[%s2 + $0x1e0] sm:$0xff]
      %v2588 = vld [vmem:[%s2 + $0x1e8] sm:$0xff]
      %v2589 = vld [vmem:[%s2 + $0x1f0] sm:$0xff]
      %v2590 = vld [vmem:[%s2 + $0x1f8] sm:$0xff]
      %v2591 = vld [vmem:[%s2 + $0x200] sm:$0xff]
      %v2592 = vld [vmem:[%s2 + $0x208] sm:$0xff]
      %v2593 = vld [vmem:[%s2 + $0x210] sm:$0xff]
      %v2594 = vld [vmem:[%s2 + $0x218] sm:$0xff]
      %v2595 = vld [vmem:[%s2 + $0x220] sm:$0xff]
      %v2596 = vld [vmem:[%s2 + $0x228] sm:$0xff]
      %v2597 = vld [vmem:[%s2 + $0x230] sm:$0xff]
      %v2598 = vld [vmem:[%s2 + $0x238] sm:$0xff]
      %v2599 = vld [vmem:[%s2 + $0x240] sm:$0xff]
      %v2600 = vld [vmem:[%s2 + $0x248] sm:$0xff]
      %v2601 = vld [vmem:[%s2 + $0x250] sm:$0xff]
      %v2602 = vld [vmem:[%s2 + $0x258] sm:$0xff]
      %v2603 = vld [vmem:[%s2 + $0x260] sm:$0xff]
      %v2604 = vld [vmem:[%s2 + $0x268] sm:$0xff]
      %v2605 = vld [vmem:[%s2 + $0x270] sm:$0xff]
      %v2606 = vld [vmem:[%s2 + $0x278] sm:$0xff]
      %v2607 = vld [vmem:[%s2 + $0x280] sm:$0xff]
      %v2608 = vld [vmem:[%s2 + $0x288] sm:$0xff]
      %v2609 = vld [vmem:[%s2 + $0x290] sm:$0xff]
      %v2610 = vld [vmem:[%s2 + $0x298] sm:$0xff]
      %v2611 = vld [vmem:[%s2 + $0x2a0] sm:$0xff]
      %v2612 = vld [vmem:[%s2 + $0x2a8] sm:$0xff]
      %v2613 = vld [vmem:[%s2 + $0x2b0] sm:$0xff]
      %v2614 = vld [vmem:[%s2 + $0x2b8] sm:$0xff]
      %v2615 = vld [vmem:[%s2 + $0x2c0] sm:$0xff]
      %v2616 = vld [vmem:[%s2 + $0x2c8] sm:$0xff]
      %v2617 = vld [vmem:[%s2 + $0x2d0] sm:$0xff]
      %v2618 = vld [vmem:[%s2 + $0x2d8] sm:$0xff]
      %v2619 = vld [vmem:[%s2 + $0x2e0] sm:$0xff]
      %v2620 = vld [vmem:[%s2 + $0x2e8] sm:$0xff]
      %v2621 = vld [vmem:[%s2 + $0x2f0] sm:$0xff]
      %v2622 = vld [vmem:[%s2 + $0x2f8] sm:$0xff]
      %v2623 = vld [vmem:[%s2 + $0x300] sm:$0xff]
      %v2624 = vld [vmem:[%s2 + $0x308] sm:$0xff]
      %v2625 = vld [vmem:[%s2 + $0x310] sm:$0xff]
      %v2626 = vld [vmem:[%s2 + $0x318] sm:$0xff]
      %v2627 = vld [vmem:[%s2 + $0x320] sm:$0xff]
      %v2628 = vld [vmem:[%s2 + $0x328] sm:$0xff]
      %v2629 = vld [vmem:[%s2 + $0x330] sm:$0xff]
      %v2630 = vld [vmem:[%s2 + $0x338] sm:$0xff]
      %v2631 = vld [vmem:[%s2 + $0x340] sm:$0xff]
      %v2632 = vld [vmem:[%s2 + $0x348] sm:$0xff]
      %v2633 = vld [vmem:[%s2 + $0x350] sm:$0xff]
      %v2634 = vld [vmem:[%s2 + $0x358] sm:$0xff]
      %v2635 = vld [vmem:[%s2 + $0x360] sm:$0xff]
      %v2636 = vld [vmem:[%s2 + $0x368] sm:$0xff]
      %v2637 = vld [vmem:[%s2 + $0x370] sm:$0xff]
      %v2638 = vld [vmem:[%s2 + $0x378] sm:$0xff]
      %v2639 = vld [vmem:[%s2 + $0x380] sm:$0xff]
      %v2640 = vld [vmem:[%s2 + $0x388] sm:$0xff]
      %v2641 = vld [vmem:[%s2 + $0x390] sm:$0xff]
      %v2642 = vld [vmem:[%s2 + $0x398] sm:$0xff]
      %v2643 = vld [vmem:[%s2 + $0x3a0] sm:$0xff]
      %v2644 = vld [vmem:[%s2 + $0x3a8] sm:$0xff]
      %v2645 = vld [vmem:[%s2 + $0x3b0] sm:$0xff]
      %v2646 = vld [vmem:[%s2 + $0x3b8] sm:$0xff]
      %v2647 = vld [vmem:[%s2 + $0x3c0] sm:$0xff]
      %v2648 = vld [vmem:[%s2 + $0x3c8] sm:$0xff]
      %v2649 = vld [vmem:[%s2 + $0x3d0] sm:$0xff]
      %v2650 = vld [vmem:[%s2 + $0x3d8] sm:$0xff]
      %v2651 = vld [vmem:[%s2 + $0x3e0] sm:$0xff]
      %v2652 = vld [vmem:[%s2 + $0x3e8] sm:$0xff]
      %v2653 = vld [vmem:[%s2 + $0x3f0] sm:$0xff]
      %v2654 = vld [vmem:[%s2 + $0x3f8] sm:$0xff]
      %v2655 = vld [vmem:[%s2 + $0x400] sm:$0xff]
      %v2656 = vld [vmem:[%s2 + $0x408] sm:$0xff]
      %v2657 = vld [vmem:[%s2 + $0x410] sm:$0xff]
      %v2658 = vld [vmem:[%s2 + $0x418] sm:$0xff]
      %v2659 = vld [vmem:[%s2 + $0x420] sm:$0xff]
      %v2660 = vld [vmem:[%s2 + $0x428] sm:$0xff]
      %v2661 = vld [vmem:[%s2 + $0x430] sm:$0xff]
      %v2662 = vld [vmem:[%s2 + $0x438] sm:$0xff]
      %v2663 = vld [vmem:[%s2 + $0x440] sm:$0xff]
      %v2664 = vld [vmem:[%s2 + $0x448] sm:$0xff]
      %v2665 = vld [vmem:[%s2 + $0x450] sm:$0xff]
      %v2666 = vld [vmem:[%s2 + $0x458] sm:$0xff]
      %v2667 = vld [vmem:[%s2 + $0x460] sm:$0xff]
      %v2668 = vld [vmem:[%s2 + $0x468] sm:$0xff]
      %v2669 = vld [vmem:[%s2 + $0x470] sm:$0xff]
      %v2670 = vld [vmem:[%s2 + $0x478] sm:$0xff]
      %v2671 = vld [vmem:[%s3] sm:$0xff]
      %v2673 = vlaneseq
      %v2674 = vshrl.u32 %v2673, 7
      %v2675 = vsub.s32 0, %v2674
      %v2676 = vrot.slane %v2671, %v2675
      %v2677 = vlaneseq
      %v2678 = vshrl.u32 %v2677, 7
      %v2679 = vsub.s32 1, %v2678
      %v2680 = vrot.slane %v2671, %v2679
      %v2681 = vlaneseq
      %v2682 = vshrl.u32 %v2681, 7
      %v2683 = vsub.s32 2, %v2682
      %v2684 = vrot.slane %v2671, %v2683
      %v2685 = vlaneseq
      %v2686 = vshrl.u32 %v2685, 7
      %v2687 = vsub.s32 3, %v2686
      %v2688 = vrot.slane %v2671, %v2687
      %v2689 = vlaneseq
      %v2690 = vshrl.u32 %v2689, 7
      %v2691 = vsub.s32 4, %v2690
      %v2692 = vrot.slane %v2671, %v2691
      %v2693 = vlaneseq
      %v2694 = vshrl.u32 %v2693, 7
      %v2695 = vsub.s32 5, %v2694
      %v2696 = vrot.slane %v2671, %v2695
      %v2697 = vlaneseq
      %v2698 = vshrl.u32 %v2697, 7
      %v2699 = vsub.s32 6, %v2698
      %v2700 = vrot.slane %v2671, %v2699
      %v2701 = vlaneseq
      %v2702 = vshrl.u32 %v2701, 7
      %v2703 = vsub.s32 7, %v2702
      %v2704 = vrot.slane %v2671, %v2703
      %v2857 = vunpack.c.l.b16 %v2527
      %v2858 = vunpack.c.h.b16 %v2527
      %v2859 = vunpack.c.l.b16 %v2528
      %v2860 = vunpack.c.h.b16 %v2528
      %v2861 = vunpack.c.l.b16 %v2529
      %v2862 = vunpack.c.h.b16 %v2529
      %v2863 = vunpack.c.l.b16 %v2530
      %v2864 = vunpack.c.h.b16 %v2530
      %v2865 = vunpack.c.l.b16 %v2531
      %v2866 = vunpack.c.h.b16 %v2531
      %v2867 = vunpack.c.l.b16 %v2532
      %v2868 = vunpack.c.h.b16 %v2532
      %v2869 = vunpack.c.l.b16 %v2533
      %v2870 = vunpack.c.h.b16 %v2533
      %v2871 = vunpack.c.l.b16 %v2534
      %v2872 = vunpack.c.h.b16 %v2534
      %v2873 = vunpack.c.l.b16 %v2535
      %v2874 = vunpack.c.h.b16 %v2535
      %v2875 = vunpack.c.l.b16 %v2536
      %v2876 = vunpack.c.h.b16 %v2536
      %v2877 = vunpack.c.l.b16 %v2537
      %v2878 = vunpack.c.h.b16 %v2537
      %v2879 = vunpack.c.l.b16 %v2538
      %v2880 = vunpack.c.h.b16 %v2538
      %v2881 = vunpack.c.l.b16 %v2539
      %v2882 = vunpack.c.h.b16 %v2539
      %v2883 = vunpack.c.l.b16 %v2540
      %v2884 = vunpack.c.h.b16 %v2540
      %v2885 = vunpack.c.l.b16 %v2541
      %v2886 = vunpack.c.h.b16 %v2541
      %v2887 = vunpack.c.l.b16 %v2542
      %v2888 = vunpack.c.h.b16 %v2542
      %v2889 = vunpack.c.l.b16 %v2543
      %v2890 = vunpack.c.h.b16 %v2543
      %v2891 = vunpack.c.l.b16 %v2544
      %v2892 = vunpack.c.h.b16 %v2544
      %v2893 = vunpack.c.l.b16 %v2545
      %v2894 = vunpack.c.h.b16 %v2545
      %v2895 = vunpack.c.l.b16 %v2546
      %v2896 = vunpack.c.h.b16 %v2546
      %v2897 = vunpack.c.l.b16 %v2547
      %v2898 = vunpack.c.h.b16 %v2547
      %v2899 = vunpack.c.l.b16 %v2548
      %v2900 = vunpack.c.h.b16 %v2548
      %v2901 = vunpack.c.l.b16 %v2549
      %v2902 = vunpack.c.h.b16 %v2549
      %v2903 = vunpack.c.l.b16 %v2550
      %v2904 = vunpack.c.h.b16 %v2550
      %v2905 = vunpack.c.l.b16 %v2551
      %v2906 = vunpack.c.h.b16 %v2551
      %v2907 = vunpack.c.l.b16 %v2552
      %v2908 = vunpack.c.h.b16 %v2552
      %v2909 = vunpack.c.l.b16 %v2553
      %v2910 = vunpack.c.h.b16 %v2553
      %v2911 = vunpack.c.l.b16 %v2554
      %v2912 = vunpack.c.h.b16 %v2554
      %v2913 = vunpack.c.l.b16 %v2555
      %v2914 = vunpack.c.h.b16 %v2555
      %v2915 = vunpack.c.l.b16 %v2556
      %v2916 = vunpack.c.h.b16 %v2556
      %v2917 = vunpack.c.l.b16 %v2557
      %v2918 = vunpack.c.h.b16 %v2557
      %v2919 = vunpack.c.l.b16 %v2558
      %v2920 = vunpack.c.h.b16 %v2558
      %v2921 = vunpack.c.l.b16 %v2559
      %v2922 = vunpack.c.h.b16 %v2559
      %v2923 = vunpack.c.l.b16 %v2560
      %v2924 = vunpack.c.h.b16 %v2560
      %v2925 = vunpack.c.l.b16 %v2561
      %v2926 = vunpack.c.h.b16 %v2561
      %v2927 = vunpack.c.l.b16 %v2562
      %v2928 = vunpack.c.h.b16 %v2562
      %v2929 = vunpack.c.l.b16 %v2563
      %v2930 = vunpack.c.h.b16 %v2563
      %v2931 = vunpack.c.l.b16 %v2564
      %v2932 = vunpack.c.h.b16 %v2564
      %v2933 = vunpack.c.l.b16 %v2565
      %v2934 = vunpack.c.h.b16 %v2565
      %v2935 = vunpack.c.l.b16 %v2566
      %v2936 = vunpack.c.h.b16 %v2566
      %v2937 = vunpack.c.l.b16 %v2567
      %v2938 = vunpack.c.h.b16 %v2567
      %v2939 = vunpack.c.l.b16 %v2568
      %v2940 = vunpack.c.h.b16 %v2568
      %v2941 = vunpack.c.l.b16 %v2569
      %v2942 = vunpack.c.h.b16 %v2569
      %v2943 = vunpack.c.l.b16 %v2570
      %v2944 = vunpack.c.h.b16 %v2570
      %v2945 = vunpack.c.l.b16 %v2571
      %v2946 = vunpack.c.h.b16 %v2571
      %v2947 = vunpack.c.l.b16 %v2572
      %v2948 = vunpack.c.h.b16 %v2572
      %v2949 = vunpack.c.l.b16 %v2573
      %v2950 = vunpack.c.h.b16 %v2573
      %v2951 = vunpack.c.l.b16 %v2574
      %v2952 = vunpack.c.h.b16 %v2574
      %v2953 = vunpack.c.l.b16 %v2575
      %v2954 = vunpack.c.h.b16 %v2575
      %v2955 = vunpack.c.l.b16 %v2576
      %v2956 = vunpack.c.h.b16 %v2576
      %v2957 = vunpack.c.l.b16 %v2577
      %v2958 = vunpack.c.h.b16 %v2577
      %v2959 = vunpack.c.l.b16 %v2578
      %v2960 = vunpack.c.h.b16 %v2578
      %v2961 = vunpack.c.l.b16 %v2579
      %v2962 = vunpack.c.h.b16 %v2579
      %v2963 = vunpack.c.l.b16 %v2580
      %v2964 = vunpack.c.h.b16 %v2580
      %v2965 = vunpack.c.l.b16 %v2581
      %v2966 = vunpack.c.h.b16 %v2581
      %v2967 = vunpack.c.l.b16 %v2582
      %v2968 = vunpack.c.h.b16 %v2582
      %v2969 = vunpack.c.l.b16 %v2583
      %v2970 = vunpack.c.h.b16 %v2583
      %v2971 = vunpack.c.l.b16 %v2584
      %v2972 = vunpack.c.h.b16 %v2584
      %v2973 = vunpack.c.l.b16 %v2585
      %v2974 = vunpack.c.h.b16 %v2585
      %v2975 = vunpack.c.l.b16 %v2586
      %v2976 = vunpack.c.h.b16 %v2586
      %v2977 = vunpack.c.l.b16 %v2587
      %v2978 = vunpack.c.h.b16 %v2587
      %v2979 = vunpack.c.l.b16 %v2588
      %v2980 = vunpack.c.h.b16 %v2588
      %v2981 = vunpack.c.l.b16 %v2589
      %v2982 = vunpack.c.h.b16 %v2589
      %v2983 = vunpack.c.l.b16 %v2590
      %v2984 = vunpack.c.h.b16 %v2590
      %v2985 = vunpack.c.l.b16 %v2591
      %v2986 = vunpack.c.h.b16 %v2591
      %v2987 = vunpack.c.l.b16 %v2592
      %v2988 = vunpack.c.h.b16 %v2592
      %v2989 = vunpack.c.l.b16 %v2593
      %v2990 = vunpack.c.h.b16 %v2593
      %v2991 = vunpack.c.l.b16 %v2594
      %v2992 = vunpack.c.h.b16 %v2594
      %v2993 = vunpack.c.l.b16 %v2595
      %v2994 = vunpack.c.h.b16 %v2595
      %v2995 = vunpack.c.l.b16 %v2596
      %v2996 = vunpack.c.h.b16 %v2596
      %v2997 = vunpack.c.l.b16 %v2597
      %v2998 = vunpack.c.h.b16 %v2597
      %v2999 = vunpack.c.l.b16 %v2598
      %v3000 = vunpack.c.h.b16 %v2598
      %v3001 = vunpack.c.l.b16 %v2599
      %v3002 = vunpack.c.h.b16 %v2599
      %v3003 = vunpack.c.l.b16 %v2600
      %v3004 = vunpack.c.h.b16 %v2600
      %v3005 = vunpack.c.l.b16 %v2601
      %v3006 = vunpack.c.h.b16 %v2601
      %v3007 = vunpack.c.l.b16 %v2602
      %v3008 = vunpack.c.h.b16 %v2602
      %v3009 = vunpack.c.l.b16 %v2603
      %v3010 = vunpack.c.h.b16 %v2603
      %v3011 = vunpack.c.l.b16 %v2604
      %v3012 = vunpack.c.h.b16 %v2604
      %v3013 = vunpack.c.l.b16 %v2605
      %v3014 = vunpack.c.h.b16 %v2605
      %v3015 = vunpack.c.l.b16 %v2606
      %v3016 = vunpack.c.h.b16 %v2606
      %v3017 = vunpack.c.l.b16 %v2607
      %v3018 = vunpack.c.h.b16 %v2607
      %v3019 = vunpack.c.l.b16 %v2608
      %v3020 = vunpack.c.h.b16 %v2608
      %v3021 = vunpack.c.l.b16 %v2609
      %v3022 = vunpack.c.h.b16 %v2609
      %v3023 = vunpack.c.l.b16 %v2610
      %v3024 = vunpack.c.h.b16 %v2610
      %v3025 = vunpack.c.l.b16 %v2611
      %v3026 = vunpack.c.h.b16 %v2611
      %v3027 = vunpack.c.l.b16 %v2612
      %v3028 = vunpack.c.h.b16 %v2612
      %v3029 = vunpack.c.l.b16 %v2613
      %v3030 = vunpack.c.h.b16 %v2613
      %v3031 = vunpack.c.l.b16 %v2614
      %v3032 = vunpack.c.h.b16 %v2614
      %v3033 = vunpack.c.l.b16 %v2615
      %v3034 = vunpack.c.h.b16 %v2615
      %v3035 = vunpack.c.l.b16 %v2616
      %v3036 = vunpack.c.h.b16 %v2616
      %v3037 = vunpack.c.l.b16 %v2617
      %v3038 = vunpack.c.h.b16 %v2617
      %v3039 = vunpack.c.l.b16 %v2618
      %v3040 = vunpack.c.h.b16 %v2618
      %v3041 = vunpack.c.l.b16 %v2619
      %v3042 = vunpack.c.h.b16 %v2619
      %v3043 = vunpack.c.l.b16 %v2620
      %v3044 = vunpack.c.h.b16 %v2620
      %v3045 = vunpack.c.l.b16 %v2621
      %v3046 = vunpack.c.h.b16 %v2621
      %v3047 = vunpack.c.l.b16 %v2622
      %v3048 = vunpack.c.h.b16 %v2622
      %v3049 = vunpack.c.l.b16 %v2623
      %v3050 = vunpack.c.h.b16 %v2623
      %v3051 = vunpack.c.l.b16 %v2624
      %v3052 = vunpack.c.h.b16 %v2624
      %v3053 = vunpack.c.l.b16 %v2625
      %v3054 = vunpack.c.h.b16 %v2625
      %v3055 = vunpack.c.l.b16 %v2626
      %v3056 = vunpack.c.h.b16 %v2626
      %v3057 = vunpack.c.l.b16 %v2627
      %v3058 = vunpack.c.h.b16 %v2627
      %v3059 = vunpack.c.l.b16 %v2628
      %v3060 = vunpack.c.h.b16 %v2628
      %v3061 = vunpack.c.l.b16 %v2629
      %v3062 = vunpack.c.h.b16 %v2629
      %v3063 = vunpack.c.l.b16 %v2630
      %v3064 = vunpack.c.h.b16 %v2630
      %v3065 = vunpack.c.l.b16 %v2631
      %v3066 = vunpack.c.h.b16 %v2631
      %v3067 = vunpack.c.l.b16 %v2632
      %v3068 = vunpack.c.h.b16 %v2632
      %v3069 = vunpack.c.l.b16 %v2633
      %v3070 = vunpack.c.h.b16 %v2633
      %v3071 = vunpack.c.l.b16 %v2634
      %v3072 = vunpack.c.h.b16 %v2634
      %v3073 = vunpack.c.l.b16 %v2635
      %v3074 = vunpack.c.h.b16 %v2635
      %v3075 = vunpack.c.l.b16 %v2636
      %v3076 = vunpack.c.h.b16 %v2636
      %v3077 = vunpack.c.l.b16 %v2637
      %v3078 = vunpack.c.h.b16 %v2637
      %v3079 = vunpack.c.l.b16 %v2638
      %v3080 = vunpack.c.h.b16 %v2638
      %v3081 = vunpack.c.l.b16 %v2639
      %v3082 = vunpack.c.h.b16 %v2639
      %v3083 = vunpack.c.l.b16 %v2640
      %v3084 = vunpack.c.h.b16 %v2640
      %v3085 = vunpack.c.l.b16 %v2641
      %v3086 = vunpack.c.h.b16 %v2641
      %v3087 = vunpack.c.l.b16 %v2642
      %v3088 = vunpack.c.h.b16 %v2642
      %v3089 = vunpack.c.l.b16 %v2643
      %v3090 = vunpack.c.h.b16 %v2643
      %v3091 = vunpack.c.l.b16 %v2644
      %v3092 = vunpack.c.h.b16 %v2644
      %v3093 = vunpack.c.l.b16 %v2645
      %v3094 = vunpack.c.h.b16 %v2645
      %v3095 = vunpack.c.l.b16 %v2646
      %v3096 = vunpack.c.h.b16 %v2646
      %v3097 = vunpack.c.l.b16 %v2647
      %v3098 = vunpack.c.h.b16 %v2647
      %v3099 = vunpack.c.l.b16 %v2648
      %v3100 = vunpack.c.h.b16 %v2648
      %v3101 = vunpack.c.l.b16 %v2649
      %v3102 = vunpack.c.h.b16 %v2649
      %v3103 = vunpack.c.l.b16 %v2650
      %v3104 = vunpack.c.h.b16 %v2650
      %v3105 = vunpack.c.l.b16 %v2651
      %v3106 = vunpack.c.h.b16 %v2651
      %v3107 = vunpack.c.l.b16 %v2652
      %v3108 = vunpack.c.h.b16 %v2652
      %v3109 = vunpack.c.l.b16 %v2653
      %v3110 = vunpack.c.h.b16 %v2653
      %v3111 = vunpack.c.l.b16 %v2654
      %v3112 = vunpack.c.h.b16 %v2654
      %v3113 = vunpack.c.l.b16 %v2655
      %v3114 = vunpack.c.h.b16 %v2655
      %v3115 = vunpack.c.l.b16 %v2656
      %v3116 = vunpack.c.h.b16 %v2656
      %v3117 = vunpack.c.l.b16 %v2657
      %v3118 = vunpack.c.h.b16 %v2657
      %v3119 = vunpack.c.l.b16 %v2658
      %v3120 = vunpack.c.h.b16 %v2658
      %v3121 = vunpack.c.l.b16 %v2659
      %v3122 = vunpack.c.h.b16 %v2659
      %v3123 = vunpack.c.l.b16 %v2660
      %v3124 = vunpack.c.h.b16 %v2660
      %v3125 = vunpack.c.l.b16 %v2661
      %v3126 = vunpack.c.h.b16 %v2661
      %v3127 = vunpack.c.l.b16 %v2662
      %v3128 = vunpack.c.h.b16 %v2662
      %v3129 = vunpack.c.l.b16 %v2663
      %v3130 = vunpack.c.h.b16 %v2663
      %v3131 = vunpack.c.l.b16 %v2664
      %v3132 = vunpack.c.h.b16 %v2664
      %v3133 = vunpack.c.l.b16 %v2665
      %v3134 = vunpack.c.h.b16 %v2665
      %v3135 = vunpack.c.l.b16 %v2666
      %v3136 = vunpack.c.h.b16 %v2666
      %v3137 = vunpack.c.l.b16 %v2667
      %v3138 = vunpack.c.h.b16 %v2667
      %v3139 = vunpack.c.l.b16 %v2668
      %v3140 = vunpack.c.h.b16 %v2668
      %v3141 = vunpack.c.l.b16 %v2669
      %v3142 = vunpack.c.h.b16 %v2669
      %v3143 = vunpack.c.l.b16 %v2670
      %v3144 = vunpack.c.h.b16 %v2670
      %v3145 = vpack.c.b16 %v2865, %v2857
      %v3146 = vpack.c.b16 %v2866, %v2858
      %v3147 = vpack.c.b16 %v2867, %v2859
      %v3148 = vpack.c.b16 %v2868, %v2860
      %v3149 = vpack.c.b16 %v2869, %v2861
      %v3150 = vpack.c.b16 %v2870, %v2862
      %v3151 = vpack.c.b16 %v2871, %v2863
      %v3152 = vpack.c.b16 %v2872, %v2864
      %v3153 = vpack.c.b16 %v2881, %v2873
      %v3154 = vpack.c.b16 %v2882, %v2874
      %v3155 = vpack.c.b16 %v2883, %v2875
      %v3156 = vpack.c.b16 %v2884, %v2876
      %v3157 = vpack.c.b16 %v2885, %v2877
      %v3158 = vpack.c.b16 %v2886, %v2878
      %v3159 = vpack.c.b16 %v2887, %v2879
      %v3160 = vpack.c.b16 %v2888, %v2880
      %v3161 = vpack.c.b16 %v2897, %v2889
      %v3162 = vpack.c.b16 %v2898, %v2890
      %v3163 = vpack.c.b16 %v2899, %v2891
      %v3164 = vpack.c.b16 %v2900, %v2892
      %v3165 = vpack.c.b16 %v2901, %v2893
      %v3166 = vpack.c.b16 %v2902, %v2894
      %v3167 = vpack.c.b16 %v2903, %v2895
      %v3168 = vpack.c.b16 %v2904, %v2896
      %v3169 = vpack.c.b16 %v2913, %v2905
      %v3170 = vpack.c.b16 %v2914, %v2906
      %v3171 = vpack.c.b16 %v2915, %v2907
      %v3172 = vpack.c.b16 %v2916, %v2908
      %v3173 = vpack.c.b16 %v2917, %v2909
      %v3174 = vpack.c.b16 %v2918, %v2910
      %v3175 = vpack.c.b16 %v2919, %v2911
      %v3176 = vpack.c.b16 %v2920, %v2912
      %v3177 = vpack.c.b16 %v2929, %v2921
      %v3178 = vpack.c.b16 %v2930, %v2922
      %v3179 = vpack.c.b16 %v2931, %v2923
      %v3180 = vpack.c.b16 %v2932, %v2924
      %v3181 = vpack.c.b16 %v2933, %v2925
      %v3182 = vpack.c.b16 %v2934, %v2926
      %v3183 = vpack.c.b16 %v2935, %v2927
      %v3184 = vpack.c.b16 %v2936, %v2928
      %v3185 = vpack.c.b16 %v2945, %v2937
      %v3186 = vpack.c.b16 %v2946, %v2938
      %v3187 = vpack.c.b16 %v2947, %v2939
      %v3188 = vpack.c.b16 %v2948, %v2940
      %v3189 = vpack.c.b16 %v2949, %v2941
      %v3190 = vpack.c.b16 %v2950, %v2942
      %v3191 = vpack.c.b16 %v2951, %v2943
      %v3192 = vpack.c.b16 %v2952, %v2944
      %v3193 = vpack.c.b16 %v2961, %v2953
      %v3194 = vpack.c.b16 %v2962, %v2954
      %v3195 = vpack.c.b16 %v2963, %v2955
      %v3196 = vpack.c.b16 %v2964, %v2956
      %v3197 = vpack.c.b16 %v2965, %v2957
      %v3198 = vpack.c.b16 %v2966, %v2958
      %v3199 = vpack.c.b16 %v2967, %v2959
      %v3200 = vpack.c.b16 %v2968, %v2960
      %v3201 = vpack.c.b16 %v2977, %v2969
      %v3202 = vpack.c.b16 %v2978, %v2970
      %v3203 = vpack.c.b16 %v2979, %v2971
      %v3204 = vpack.c.b16 %v2980, %v2972
      %v3205 = vpack.c.b16 %v2981, %v2973
      %v3206 = vpack.c.b16 %v2982, %v2974
      %v3207 = vpack.c.b16 %v2983, %v2975
      %v3208 = vpack.c.b16 %v2984, %v2976
      %v3209 = vpack.c.b16 %v2993, %v2985
      %v3210 = vpack.c.b16 %v2994, %v2986
      %v3211 = vpack.c.b16 %v2995, %v2987
      %v3212 = vpack.c.b16 %v2996, %v2988
      %v3213 = vpack.c.b16 %v2997, %v2989
      %v3214 = vpack.c.b16 %v2998, %v2990
      %v3215 = vpack.c.b16 %v2999, %v2991
      %v3216 = vpack.c.b16 %v3000, %v2992
      %v3217 = vpack.c.b16 %v3009, %v3001
      %v3218 = vpack.c.b16 %v3010, %v3002
      %v3219 = vpack.c.b16 %v3011, %v3003
      %v3220 = vpack.c.b16 %v3012, %v3004
      %v3221 = vpack.c.b16 %v3013, %v3005
      %v3222 = vpack.c.b16 %v3014, %v3006
      %v3223 = vpack.c.b16 %v3015, %v3007
      %v3224 = vpack.c.b16 %v3016, %v3008
      %v3225 = vpack.c.b16 %v3025, %v3017
      %v3226 = vpack.c.b16 %v3026, %v3018
      %v3227 = vpack.c.b16 %v3027, %v3019
      %v3228 = vpack.c.b16 %v3028, %v3020
      %v3229 = vpack.c.b16 %v3029, %v3021
      %v3230 = vpack.c.b16 %v3030, %v3022
      %v3231 = vpack.c.b16 %v3031, %v3023
      %v3232 = vpack.c.b16 %v3032, %v3024
      %v3233 = vpack.c.b16 %v3041, %v3033
      %v3234 = vpack.c.b16 %v3042, %v3034
      %v3235 = vpack.c.b16 %v3043, %v3035
      %v3236 = vpack.c.b16 %v3044, %v3036
      %v3237 = vpack.c.b16 %v3045, %v3037
      %v3238 = vpack.c.b16 %v3046, %v3038
      %v3239 = vpack.c.b16 %v3047, %v3039
      %v3240 = vpack.c.b16 %v3048, %v3040
      %v3241 = vpack.c.b16 %v3057, %v3049
      %v3242 = vpack.c.b16 %v3058, %v3050
      %v3243 = vpack.c.b16 %v3059, %v3051
      %v3244 = vpack.c.b16 %v3060, %v3052
      %v3245 = vpack.c.b16 %v3061, %v3053
      %v3246 = vpack.c.b16 %v3062, %v3054
      %v3247 = vpack.c.b16 %v3063, %v3055
      %v3248 = vpack.c.b16 %v3064, %v3056
      %v3249 = vpack.c.b16 %v3073, %v3065
      %v3250 = vpack.c.b16 %v3074, %v3066
      %v3251 = vpack.c.b16 %v3075, %v3067
      %v3252 = vpack.c.b16 %v3076, %v3068
      %v3253 = vpack.c.b16 %v3077, %v3069
      %v3254 = vpack.c.b16 %v3078, %v3070
      %v3255 = vpack.c.b16 %v3079, %v3071
      %v3256 = vpack.c.b16 %v3080, %v3072
      %v3257 = vpack.c.b16 %v3089, %v3081
      %v3258 = vpack.c.b16 %v3090, %v3082
      %v3259 = vpack.c.b16 %v3091, %v3083
      %v3260 = vpack.c.b16 %v3092, %v3084
      %v3261 = vpack.c.b16 %v3093, %v3085
      %v3262 = vpack.c.b16 %v3094, %v3086
      %v3263 = vpack.c.b16 %v3095, %v3087
      %v3264 = vpack.c.b16 %v3096, %v3088
      %v3265 = vpack.c.b16 %v3105, %v3097
      %v3266 = vpack.c.b16 %v3106, %v3098
      %v3267 = vpack.c.b16 %v3107, %v3099
      %v3268 = vpack.c.b16 %v3108, %v3100
      %v3269 = vpack.c.b16 %v3109, %v3101
      %v3270 = vpack.c.b16 %v3110, %v3102
      %v3271 = vpack.c.b16 %v3111, %v3103
      %v3272 = vpack.c.b16 %v3112, %v3104
      %v3273 = vpack.c.b16 %v3121, %v3113
      %v3274 = vpack.c.b16 %v3122, %v3114
      %v3275 = vpack.c.b16 %v3123, %v3115
      %v3276 = vpack.c.b16 %v3124, %v3116
      %v3277 = vpack.c.b16 %v3125, %v3117
      %v3278 = vpack.c.b16 %v3126, %v3118
      %v3279 = vpack.c.b16 %v3127, %v3119
      %v3280 = vpack.c.b16 %v3128, %v3120
      %v3281 = vpack.c.b16 %v3137, %v3129
      %v3282 = vpack.c.b16 %v3138, %v3130
      %v3283 = vpack.c.b16 %v3139, %v3131
      %v3284 = vpack.c.b16 %v3140, %v3132
      %v3285 = vpack.c.b16 %v3141, %v3133
      %v3286 = vpack.c.b16 %v3142, %v3134
      %v3287 = vpack.c.b16 %v3143, %v3135
      %v3288 = vpack.c.b16 %v3144, %v3136
      %v3434 = vsel %vm2515, %v2526, 0
      %3436 = vmatprep.subr.bf16.mxu0 %v3202
      %3437 = vmatpush1.bf16.msra.mxu0 %v3201
      %3438 = vmatprep.subr.bf16.mxu0 %v3194
      %3439 = vmatpush1.bf16.msra.mxu0 %v3193
      %3440 = vmatprep.subr.bf16.mxu0 %v3186
      %3441 = vmatpush1.bf16.msra.mxu0 %v3185
      %3442 = vmatprep.subr.bf16.mxu0 %v3178
      %3443 = vmatpush1.bf16.msra.mxu0 %v3177
      %3444 = vmatprep.subr.bf16.mxu0 %v3170
      %3445 = vmatpush1.bf16.msra.mxu0 %v3169
      %3446 = vmatprep.subr.bf16.mxu0 %v3162
      %3447 = vmatpush1.bf16.msra.mxu0 %v3161
      %3448 = vmatprep.subr.bf16.mxu0 %v3154
      %3449 = vmatpush1.bf16.msra.mxu0 %v3153
      %3450 = vmatprep.subr.bf16.mxu0 %v3146
      %3451 = vmatpush1.bf16.msra.mxu0 %v3145
      %3452 = vmatprep.subr.bf16.mxu0 %v3266
      %3453 = vmatpush2.bf16.msra.mxu0 %v3265
      %3454 = vmatprep.subr.bf16.mxu0 %v3258
      %3455 = vmatpush2.bf16.msra.mxu0 %v3257
      %3456 = vmatprep.subr.bf16.mxu0 %v3250
      %3457 = vmatpush2.bf16.msra.mxu0 %v3249
      %3458 = vmatprep.subr.bf16.mxu0 %v3242
      %3459 = vmatpush2.bf16.msra.mxu0 %v3241
      %3460 = vmatprep.subr.bf16.mxu0 %v3234
      %3461 = vmatpush2.bf16.msra.mxu0 %v3233
      %3462 = vmatprep.subr.bf16.mxu0 %v3226
      %3463 = vmatpush2.bf16.msra.mxu0 %v3225
      %3464 = vmatprep.subr.bf16.mxu0 %v3218
      %3465 = vmatpush2.bf16.msra.mxu0 %v3217
      %3466 = vmatprep.subr.bf16.mxu0 %v3210
      %3467 = vmatpush2.bf16.msra.mxu0 %v3209
      %3468 = vmatprep.mubr.bf16.mxu0 %v2525
      %3469 = vmatmul.mubr.bf16.gmra.mxu0 %v2524
      %v3470 = vpop.f32.mrf.mxu0
      %v3471 = vadd.f32 %v2676, %v3470
      %v3472 = vpop.f32.mrf.mxu0
      %v3473 = vadd.f32 %v2680, %v3472
      %v3474 = vpop.f32.mrf.mxu0
      %v3475 = vpop.f32.mrf.mxu0
      %3476 = vdwg.mxu0
      %3477 = vmatprep.subr.bf16.mxu0 0
      %3478 = vmatpush1.bf16.msra.mxu0 0
      %3479 = vmatprep.subr.bf16.mxu0 0
      %3480 = vmatpush1.bf16.msra.mxu0 0
      %3481 = vmatprep.subr.bf16.mxu0 0
      %3482 = vmatpush1.bf16.msra.mxu0 0
      %3483 = vmatprep.subr.bf16.mxu0 0
      %3484 = vmatpush1.bf16.msra.mxu0 0
      %3485 = vmatprep.subr.bf16.mxu0 0
      %3486 = vmatpush1.bf16.msra.mxu0 0
      %3487 = vmatprep.subr.bf16.mxu0 0
      %3488 = vmatpush1.bf16.msra.mxu0 0
      %3489 = vmatprep.subr.bf16.mxu0 %v3282
      %3490 = vmatpush1.bf16.msra.mxu0 %v3281
      %3491 = vmatprep.subr.bf16.mxu0 %v3274
      %3492 = vmatpush1.bf16.msra.mxu0 %v3273
      %3493 = vmatprep.subr.bf16.mxu0 0
      %3494 = vmatpush2.bf16.msra.mxu0 0
      %3495 = vmatprep.subr.bf16.mxu0 0
      %3496 = vmatpush2.bf16.msra.mxu0 0
      %3497 = vmatprep.subr.bf16.mxu0 0
      %3498 = vmatpush2.bf16.msra.mxu0 0
      %3499 = vmatprep.subr.bf16.mxu0 0
      %3500 = vmatpush2.bf16.msra.mxu0 0
      %3501 = vmatprep.subr.bf16.mxu0 0
      %3502 = vmatpush2.bf16.msra.mxu0 0
      %3503 = vmatprep.subr.bf16.mxu0 0
      %3504 = vmatpush2.bf16.msra.mxu0 0
      %3505 = vmatprep.subr.bf16.mxu0 0
      %3506 = vmatpush2.bf16.msra.mxu0 0
      %3507 = vmatprep.subr.bf16.mxu0 0
      %3508 = vmatpush2.bf16.msra.mxu0 0
      %3509 = vmatprep.mubr.bf16.mxu0 0
      %3510 = vmatmul.mubr.bf16.gmra.mxu0 %v3434
      %v3511 = vpop.f32.mrf.mxu0
      %v3512 = vadd.f32 %v3471, %v3511
      %v3513 = vpop.f32.mrf.mxu0
      %v3514 = vadd.f32 %v3473, %v3513
      %v3515 = vpop.f32.mrf.mxu0
      %v3516 = vpop.f32.mrf.mxu0
      %3517 = vdwg.mxu0
      %3518 = vmatprep.subr.bf16.mxu0 %v3204
      %3519 = vmatpush1.bf16.msra.mxu0 %v3203
      %3520 = vmatprep.subr.bf16.mxu0 %v3196
      %3521 = vmatpush1.bf16.msra.mxu0 %v3195
      %3522 = vmatprep.subr.bf16.mxu0 %v3188
      %3523 = vmatpush1.bf16.msra.mxu0 %v3187
      %3524 = vmatprep.subr.bf16.mxu0 %v3180
      %3525 = vmatpush1.bf16.msra.mxu0 %v3179
      %3526 = vmatprep.subr.bf16.mxu0 %v3172
      %3527 = vmatpush1.bf16.msra.mxu0 %v3171
      %3528 = vmatprep.subr.bf16.mxu0 %v3164
      %3529 = vmatpush1.bf16.msra.mxu0 %v3163
      %3530 = vmatprep.subr.bf16.mxu0 %v3156
      %3531 = vmatpush1.bf16.msra.mxu0 %v3155
      %3532 = vmatprep.subr.bf16.mxu0 %v3148
      %3533 = vmatpush1.bf16.msra.mxu0 %v3147
      %3534 = vmatprep.subr.bf16.mxu0 %v3268
      %3535 = vmatpush2.bf16.msra.mxu0 %v3267
      %3536 = vmatprep.subr.bf16.mxu0 %v3260
      %3537 = vmatpush2.bf16.msra.mxu0 %v3259
      %3538 = vmatprep.subr.bf16.mxu0 %v3252
      %3539 = vmatpush2.bf16.msra.mxu0 %v3251
      %3540 = vmatprep.subr.bf16.mxu0 %v3244
      %3541 = vmatpush2.bf16.msra.mxu0 %v3243
      %3542 = vmatprep.subr.bf16.mxu0 %v3236
      %3543 = vmatpush2.bf16.msra.mxu0 %v3235
      %3544 = vmatprep.subr.bf16.mxu0 %v3228
      %3545 = vmatpush2.bf16.msra.mxu0 %v3227
      %3546 = vmatprep.subr.bf16.mxu0 %v3220
      %3547 = vmatpush2.bf16.msra.mxu0 %v3219
      %3548 = vmatprep.subr.bf16.mxu0 %v3212
      %3549 = vmatpush2.bf16.msra.mxu0 %v3211
      %3550 = vmatprep.mubr.bf16.mxu0 %v2525
      %3551 = vmatmul.mubr.bf16.gmra.mxu0 %v2524
      %v3552 = vpop.f32.mrf.mxu0
      %v3553 = vadd.f32 %v2684, %v3552
      %v3554 = vpop.f32.mrf.mxu0
      %v3555 = vadd.f32 %v2688, %v3554
      %v3556 = vpop.f32.mrf.mxu0
      %v3557 = vpop.f32.mrf.mxu0
      %3558 = vdwg.mxu0
      %3559 = vmatprep.subr.bf16.mxu0 0
      %3560 = vmatpush1.bf16.msra.mxu0 0
      %3561 = vmatprep.subr.bf16.mxu0 0
      %3562 = vmatpush1.bf16.msra.mxu0 0
      %3563 = vmatprep.subr.bf16.mxu0 0
      %3564 = vmatpush1.bf16.msra.mxu0 0
      %3565 = vmatprep.subr.bf16.mxu0 0
      %3566 = vmatpush1.bf16.msra.mxu0 0
      %3567 = vmatprep.subr.bf16.mxu0 0
      %3568 = vmatpush1.bf16.msra.mxu0 0
      %3569 = vmatprep.subr.bf16.mxu0 0
      %3570 = vmatpush1.bf16.msra.mxu0 0
      %3571 = vmatprep.subr.bf16.mxu0 %v3284
      %3572 = vmatpush1.bf16.msra.mxu0 %v3283
      %3573 = vmatprep.subr.bf16.mxu0 %v3276
      %3574 = vmatpush1.bf16.msra.mxu0 %v3275
      %3575 = vmatprep.subr.bf16.mxu0 0
      %3576 = vmatpush2.bf16.msra.mxu0 0
      %3577 = vmatprep.subr.bf16.mxu0 0
      %3578 = vmatpush2.bf16.msra.mxu0 0
      %3579 = vmatprep.subr.bf16.mxu0 0
      %3580 = vmatpush2.bf16.msra.mxu0 0
      %3581 = vmatprep.subr.bf16.mxu0 0
      %3582 = vmatpush2.bf16.msra.mxu0 0
      %3583 = vmatprep.subr.bf16.mxu0 0
      %3584 = vmatpush2.bf16.msra.mxu0 0
      %3585 = vmatprep.subr.bf16.mxu0 0
      %3586 = vmatpush2.bf16.msra.mxu0 0
      %3587 = vmatprep.subr.bf16.mxu0 0
      %3588 = vmatpush2.bf16.msra.mxu0 0
      %3589 = vmatprep.subr.bf16.mxu0 0
      %3590 = vmatpush2.bf16.msra.mxu0 0
      %3591 = vmatprep.mubr.bf16.mxu0 0
      %3592 = vmatmul.mubr.bf16.gmra.mxu0 %v3434
      %v3593 = vpop.f32.mrf.mxu0
      %v3594 = vadd.f32 %v3553, %v3593
      %v3595 = vpop.f32.mrf.mxu0
      %v3596 = vadd.f32 %v3555, %v3595
      %v3597 = vpop.f32.mrf.mxu0
      %v3598 = vpop.f32.mrf.mxu0
      %3599 = vdwg.mxu0
      %3600 = vmatprep.subr.bf16.mxu0 %v3206
      %3601 = vmatpush1.bf16.msra.mxu0 %v3205
      %3602 = vmatprep.subr.bf16.mxu0 %v3198
      %3603 = vmatpush1.bf16.msra.mxu0 %v3197
      %3604 = vmatprep.subr.bf16.mxu0 %v3190
      %3605 = vmatpush1.bf16.msra.mxu0 %v3189
      %3606 = vmatprep.subr.bf16.mxu0 %v3182
      %3607 = vmatpush1.bf16.msra.mxu0 %v3181
      %3608 = vmatprep.subr.bf16.mxu0 %v3174
      %3609 = vmatpush1.bf16.msra.mxu0 %v3173
      %3610 = vmatprep.subr.bf16.mxu0 %v3166
      %3611 = vmatpush1.bf16.msra.mxu0 %v3165
      %3612 = vmatprep.subr.bf16.mxu0 %v3158
      %3613 = vmatpush1.bf16.msra.mxu0 %v3157
      %3614 = vmatprep.subr.bf16.mxu0 %v3150
      %3615 = vmatpush1.bf16.msra.mxu0 %v3149
      %3616 = vmatprep.subr.bf16.mxu0 %v3270
      %3617 = vmatpush2.bf16.msra.mxu0 %v3269
      %3618 = vmatprep.subr.bf16.mxu0 %v3262
      %3619 = vmatpush2.bf16.msra.mxu0 %v3261
      %3620 = vmatprep.subr.bf16.mxu0 %v3254
      %3621 = vmatpush2.bf16.msra.mxu0 %v3253
      %3622 = vmatprep.subr.bf16.mxu0 %v3246
      %3623 = vmatpush2.bf16.msra.mxu0 %v3245
      %3624 = vmatprep.subr.bf16.mxu0 %v3238
      %3625 = vmatpush2.bf16.msra.mxu0 %v3237
      %3626 = vmatprep.subr.bf16.mxu0 %v3230
      %3627 = vmatpush2.bf16.msra.mxu0 %v3229
      %3628 = vmatprep.subr.bf16.mxu0 %v3222
      %3629 = vmatpush2.bf16.msra.mxu0 %v3221
      %3630 = vmatprep.subr.bf16.mxu0 %v3214
      %3631 = vmatpush2.bf16.msra.mxu0 %v3213
      %3632 = vmatprep.mubr.bf16.mxu0 %v2525
      %3633 = vmatmul.mubr.bf16.gmra.mxu0 %v2524
      %v3634 = vpop.f32.mrf.mxu0
      %v3635 = vadd.f32 %v2692, %v3634
      %v3636 = vpop.f32.mrf.mxu0
      %v3637 = vadd.f32 %v2696, %v3636
      %v3638 = vpop.f32.mrf.mxu0
      %v3639 = vpop.f32.mrf.mxu0
      %3640 = vdwg.mxu0
      %3641 = vmatprep.subr.bf16.mxu0 0
      %3642 = vmatpush1.bf16.msra.mxu0 0
      %3643 = vmatprep.subr.bf16.mxu0 0
      %3644 = vmatpush1.bf16.msra.mxu0 0
      %3645 = vmatprep.subr.bf16.mxu0 0
      %3646 = vmatpush1.bf16.msra.mxu0 0
      %3647 = vmatprep.subr.bf16.mxu0 0
      %3648 = vmatpush1.bf16.msra.mxu0 0
      %3649 = vmatprep.subr.bf16.mxu0 0
      %3650 = vmatpush1.bf16.msra.mxu0 0
      %3651 = vmatprep.subr.bf16.mxu0 0
      %3652 = vmatpush1.bf16.msra.mxu0 0
      %3653 = vmatprep.subr.bf16.mxu0 %v3286
      %3654 = vmatpush1.bf16.msra.mxu0 %v3285
      %3655 = vmatprep.subr.bf16.mxu0 %v3278
      %3656 = vmatpush1.bf16.msra.mxu0 %v3277
      %3657 = vmatprep.subr.bf16.mxu0 0
      %3658 = vmatpush2.bf16.msra.mxu0 0
      %3659 = vmatprep.subr.bf16.mxu0 0
      %3660 = vmatpush2.bf16.msra.mxu0 0
      %3661 = vmatprep.subr.bf16.mxu0 0
      %3662 = vmatpush2.bf16.msra.mxu0 0
      %3663 = vmatprep.subr.bf16.mxu0 0
      %3664 = vmatpush2.bf16.msra.mxu0 0
      %3665 = vmatprep.subr.bf16.mxu0 0
      %3666 = vmatpush2.bf16.msra.mxu0 0
      %3667 = vmatprep.subr.bf16.mxu0 0
      %3668 = vmatpush2.bf16.msra.mxu0 0
      %3669 = vmatprep.subr.bf16.mxu0 0
      %3670 = vmatpush2.bf16.msra.mxu0 0
      %3671 = vmatprep.subr.bf16.mxu0 0
      %3672 = vmatpush2.bf16.msra.mxu0 0
      %3673 = vmatprep.mubr.bf16.mxu0 0
      %3674 = vmatmul.mubr.bf16.gmra.mxu0 %v3434
      %v3675 = vpop.f32.mrf.mxu0
      %v3676 = vadd.f32 %v3635, %v3675
      %v3677 = vpop.f32.mrf.mxu0
      %v3678 = vadd.f32 %v3637, %v3677
      %v3679 = vpop.f32.mrf.mxu0
      %v3680 = vpop.f32.mrf.mxu0
      %3681 = vdwg.mxu0
      %3682 = vmatprep.subr.bf16.mxu0 %v3208
      %3683 = vmatpush1.bf16.msra.mxu0 %v3207
      %3684 = vmatprep.subr.bf16.mxu0 %v3200
      %3685 = vmatpush1.bf16.msra.mxu0 %v3199
      %3686 = vmatprep.subr.bf16.mxu0 %v3192
      %3687 = vmatpush1.bf16.msra.mxu0 %v3191
      %3688 = vmatprep.subr.bf16.mxu0 %v3184
      %3689 = vmatpush1.bf16.msra.mxu0 %v3183
      %3690 = vmatprep.subr.bf16.mxu0 %v3176
      %3691 = vmatpush1.bf16.msra.mxu0 %v3175
      %3692 = vmatprep.subr.bf16.mxu0 %v3168
      %3693 = vmatpush1.bf16.msra.mxu0 %v3167
      %3694 = vmatprep.subr.bf16.mxu0 %v3160
      %3695 = vmatpush1.bf16.msra.mxu0 %v3159
      %3696 = vmatprep.subr.bf16.mxu0 %v3152
      %3697 = vmatpush1.bf16.msra.mxu0 %v3151
      %3698 = vmatprep.subr.bf16.mxu0 %v3272
      %3699 = vmatpush2.bf16.msra.mxu0 %v3271
      %3700 = vmatprep.subr.bf16.mxu0 %v3264
      %3701 = vmatpush2.bf16.msra.mxu0 %v3263
      %3702 = vmatprep.subr.bf16.mxu0 %v3256
      %3703 = vmatpush2.bf16.msra.mxu0 %v3255
      %3704 = vmatprep.subr.bf16.mxu0 %v3248
      %3705 = vmatpush2.bf16.msra.mxu0 %v3247
      %3706 = vmatprep.subr.bf16.mxu0 %v3240
      %3707 = vmatpush2.bf16.msra.mxu0 %v3239
      %3708 = vmatprep.subr.bf16.mxu0 %v3232
      %3709 = vmatpush2.bf16.msra.mxu0 %v3231
      %3710 = vmatprep.subr.bf16.mxu0 %v3224
      %3711 = vmatpush2.bf16.msra.mxu0 %v3223
      %3712 = vmatprep.subr.bf16.mxu0 %v3216
      %3713 = vmatpush2.bf16.msra.mxu0 %v3215
      %3714 = vmatprep.mubr.bf16.mxu0 %v2525
      %3715 = vmatmul.mubr.bf16.gmra.mxu0 %v2524
      %v3716 = vpop.f32.mrf.mxu0
      %v3717 = vadd.f32 %v2700, %v3716
      %v3718 = vpop.f32.mrf.mxu0
      %v3719 = vadd.f32 %v2704, %v3718
      %v3720 = vpop.f32.mrf.mxu0
      %v3721 = vpop.f32.mrf.mxu0
      %3722 = vdwg.mxu0
      %3723 = vmatprep.subr.bf16.mxu0 0
      %3724 = vmatpush1.bf16.msra.mxu0 0
      %3725 = vmatprep.subr.bf16.mxu0 0
      %3726 = vmatpush1.bf16.msra.mxu0 0
      %3727 = vmatprep.subr.bf16.mxu0 0
      %3728 = vmatpush1.bf16.msra.mxu0 0
      %3729 = vmatprep.subr.bf16.mxu0 0
      %3730 = vmatpush1.bf16.msra.mxu0 0
      %3731 = vmatprep.subr.bf16.mxu0 0
      %3732 = vmatpush1.bf16.msra.mxu0 0
      %3733 = vmatprep.subr.bf16.mxu0 0
      %3734 = vmatpush1.bf16.msra.mxu0 0
      %3735 = vmatprep.subr.bf16.mxu0 %v3288
      %3736 = vmatpush1.bf16.msra.mxu0 %v3287
      %3737 = vmatprep.subr.bf16.mxu0 %v3280
      %3738 = vmatpush1.bf16.msra.mxu0 %v3279
      %3739 = vmatprep.subr.bf16.mxu0 0
      %3740 = vmatpush2.bf16.msra.mxu0 0
      %3741 = vmatprep.subr.bf16.mxu0 0
      %3742 = vmatpush2.bf16.msra.mxu0 0
      %3743 = vmatprep.subr.bf16.mxu0 0
      %3744 = vmatpush2.bf16.msra.mxu0 0
      %3745 = vmatprep.subr.bf16.mxu0 0
      %3746 = vmatpush2.bf16.msra.mxu0 0
      %3747 = vmatprep.subr.bf16.mxu0 0
      %3748 = vmatpush2.bf16.msra.mxu0 0
      %3749 = vmatprep.subr.bf16.mxu0 0
      %3750 = vmatpush2.bf16.msra.mxu0 0
      %3751 = vmatprep.subr.bf16.mxu0 0
      %3752 = vmatpush2.bf16.msra.mxu0 0
      %3753 = vmatprep.subr.bf16.mxu0 0
      %3754 = vmatpush2.bf16.msra.mxu0 0
      %3755 = vmatprep.mubr.bf16.mxu0 0
      %3756 = vmatmul.mubr.bf16.gmra.mxu0 %v3434
      %v3757 = vpop.f32.mrf.mxu0
      %v3758 = vadd.f32 %v3717, %v3757
      %v3759 = vpop.f32.mrf.mxu0
      %v3760 = vadd.f32 %v3719, %v3759
      %v3761 = vpop.f32.mrf.mxu0
      %v3762 = vpop.f32.mrf.mxu0
      %3763 = vdwg.mxu0
      %v3764 = vmax.f32 %v3512, 0.0
      %v3765 = vmax.f32 %v3514, 0.0
      %v3766 = vmax.f32 %v3594, 0.0
      %v3767 = vmax.f32 %v3596, 0.0
      %v3768 = vmax.f32 %v3676, 0.0
      %v3769 = vmax.f32 %v3678, 0.0
      %v3770 = vmax.f32 %v3758, 0.0
      %v3771 = vmax.f32 %v3760, 0.0
      %v3772 = vpack.c.bf16 %v3764, %v3764
      %v3773 = vpack.c.bf16 %v3765, %v3765
      %v3774 = vpack.c.bf16 %v3766, %v3766
      %v3775 = vpack.c.bf16 %v3767, %v3767
      %v3776 = vpack.c.bf16 %v3768, %v3768
      %v3777 = vpack.c.bf16 %v3769, %v3769
      %v3778 = vpack.c.bf16 %v3770, %v3770
      %v3779 = vpack.c.bf16 %v3771, %v3771
      %v3780 = vld [vmem:[%s4] sm:$0xf]
      %v3781 = vld [vmem:[%s4 + $0x4] sm:$0xf]
      %v3782 = vld [vmem:[%s4 + $0x8] sm:$0xf]
      %v3783 = vld [vmem:[%s4 + $0xc] sm:$0xf]
      %v3784 = vld [vmem:[%s4 + $0x10] sm:$0xf]
      %v3785 = vld [vmem:[%s4 + $0x14] sm:$0xf]
      %v3786 = vld [vmem:[%s4 + $0x18] sm:$0xf]
      %v3787 = vld [vmem:[%s4 + $0x1c] sm:$0xf]
      %v3788 = vld [vmem:[%s4 + $0x20] sm:$0xf]
      %v3789 = vld [vmem:[%s4 + $0x24] sm:$0xf]
      %v3790 = vld [vmem:[%s4 + $0x28] sm:$0xf]
      %v3791 = vld [vmem:[%s4 + $0x2c] sm:$0xf]
      %v3792 = vld [vmem:[%s4 + $0x30] sm:$0xf]
      %v3793 = vld [vmem:[%s4 + $0x34] sm:$0xf]
      %v3794 = vld [vmem:[%s4 + $0x38] sm:$0xf]
      %v3795 = vld [vmem:[%s4 + $0x3c] sm:$0xf]
      %v3796 = vld [vmem:[%s4 + $0x40] sm:$0xf]
      %v3797 = vld [vmem:[%s4 + $0x44] sm:$0xf]
      %v3798 = vld [vmem:[%s4 + $0x48] sm:$0xf]
      %v3799 = vld [vmem:[%s4 + $0x4c] sm:$0xf]
      %v3800 = vld [vmem:[%s4 + $0x50] sm:$0xf]
      %v3801 = vld [vmem:[%s4 + $0x54] sm:$0xf]
      %v3802 = vld [vmem:[%s4 + $0x58] sm:$0xf]
      %v3803 = vld [vmem:[%s4 + $0x5c] sm:$0xf]
      %v3804 = vld [vmem:[%s4 + $0x60] sm:$0xf]
      %v3805 = vld [vmem:[%s4 + $0x64] sm:$0xf]
      %v3806 = vld [vmem:[%s4 + $0x68] sm:$0xf]
      %v3807 = vld [vmem:[%s4 + $0x6c] sm:$0xf]
      %v3808 = vld [vmem:[%s4 + $0x70] sm:$0xf]
      %v3809 = vld [vmem:[%s4 + $0x74] sm:$0xf]
      %v3810 = vld [vmem:[%s4 + $0x78] sm:$0xf]
      %v3811 = vld [vmem:[%s4 + $0x7c] sm:$0xf]
      %v3812 = vld [vmem:[%s4 + $0x80] sm:$0xf]
      %v3813 = vld [vmem:[%s4 + $0x84] sm:$0xf]
      %v3814 = vld [vmem:[%s4 + $0x88] sm:$0xf]
      %v3815 = vld [vmem:[%s4 + $0x8c] sm:$0xf]
      %v3816 = vld [vmem:[%s4 + $0x90] sm:$0xf]
      %v3817 = vld [vmem:[%s4 + $0x94] sm:$0xf]
      %v3818 = vld [vmem:[%s4 + $0x98] sm:$0xf]
      %v3819 = vld [vmem:[%s4 + $0x9c] sm:$0xf]
      %v3820 = vld [vmem:[%s4 + $0xa0] sm:$0xf]
      %v3821 = vld [vmem:[%s4 + $0xa4] sm:$0xf]
      %v3822 = vld [vmem:[%s4 + $0xa8] sm:$0xf]
      %v3823 = vld [vmem:[%s4 + $0xac] sm:$0xf]
      %v3824 = vld [vmem:[%s4 + $0xb0] sm:$0xf]
      %v3825 = vld [vmem:[%s4 + $0xb4] sm:$0xf]
      %v3826 = vld [vmem:[%s4 + $0xb8] sm:$0xf]
      %v3827 = vld [vmem:[%s4 + $0xbc] sm:$0xf]
      %v3828 = vld [vmem:[%s4 + $0xc0] sm:$0xf]
      %v3829 = vld [vmem:[%s4 + $0xc4] sm:$0xf]
      %v3830 = vld [vmem:[%s4 + $0xc8] sm:$0xf]
      %v3831 = vld [vmem:[%s4 + $0xcc] sm:$0xf]
      %v3832 = vld [vmem:[%s4 + $0xd0] sm:$0xf]
      %v3833 = vld [vmem:[%s4 + $0xd4] sm:$0xf]
      %v3834 = vld [vmem:[%s4 + $0xd8] sm:$0xf]
      %v3835 = vld [vmem:[%s4 + $0xdc] sm:$0xf]
      %v3836 = vld [vmem:[%s4 + $0xe0] sm:$0xf]
      %v3837 = vld [vmem:[%s4 + $0xe4] sm:$0xf]
      %v3838 = vld [vmem:[%s4 + $0xe8] sm:$0xf]
      %v3839 = vld [vmem:[%s4 + $0xec] sm:$0xf]
      %v3840 = vld [vmem:[%s4 + $0xf0] sm:$0xf]
      %v3841 = vld [vmem:[%s4 + $0xf4] sm:$0xf]
      %v3842 = vld [vmem:[%s4 + $0xf8] sm:$0xf]
      %v3843 = vld [vmem:[%s4 + $0xfc] sm:$0xf]
      %v3844 = vld [vmem:[%s4 + $0x100] sm:$0xf]
      %v3845 = vld [vmem:[%s4 + $0x104] sm:$0xf]
      %v3846 = vld [vmem:[%s4 + $0x108] sm:$0xf]
      %v3847 = vld [vmem:[%s4 + $0x10c] sm:$0xf]
      %v3848 = vld [vmem:[%s4 + $0x110] sm:$0xf]
      %v3849 = vld [vmem:[%s4 + $0x114] sm:$0xf]
      %v3850 = vld [vmem:[%s4 + $0x118] sm:$0xf]
      %v3851 = vld [vmem:[%s4 + $0x11c] sm:$0xf]
      %v3852 = vld [vmem:[%s4 + $0x120] sm:$0xf]
      %v3853 = vld [vmem:[%s4 + $0x124] sm:$0xf]
      %v3854 = vld [vmem:[%s4 + $0x128] sm:$0xf]
      %v3855 = vld [vmem:[%s4 + $0x12c] sm:$0xf]
      %v3856 = vld [vmem:[%s4 + $0x130] sm:$0xf]
      %v3857 = vld [vmem:[%s4 + $0x134] sm:$0xf]
      %v3858 = vld [vmem:[%s4 + $0x138] sm:$0xf]
      %v3859 = vld [vmem:[%s4 + $0x13c] sm:$0xf]
      %v3860 = vld [vmem:[%s4 + $0x140] sm:$0xf]
      %v3861 = vld [vmem:[%s4 + $0x144] sm:$0xf]
      %v3862 = vld [vmem:[%s4 + $0x148] sm:$0xf]
      %v3863 = vld [vmem:[%s4 + $0x14c] sm:$0xf]
      %v3864 = vld [vmem:[%s4 + $0x150] sm:$0xf]
      %v3865 = vld [vmem:[%s4 + $0x154] sm:$0xf]
      %v3866 = vld [vmem:[%s4 + $0x158] sm:$0xf]
      %v3867 = vld [vmem:[%s4 + $0x15c] sm:$0xf]
      %v3868 = vld [vmem:[%s4 + $0x160] sm:$0xf]
      %v3869 = vld [vmem:[%s4 + $0x164] sm:$0xf]
      %v3870 = vld [vmem:[%s4 + $0x168] sm:$0xf]
      %v3871 = vld [vmem:[%s4 + $0x16c] sm:$0xf]
      %v3872 = vld [vmem:[%s4 + $0x170] sm:$0xf]
      %v3873 = vld [vmem:[%s4 + $0x174] sm:$0xf]
      %v3874 = vld [vmem:[%s4 + $0x178] sm:$0xf]
      %v3875 = vld [vmem:[%s4 + $0x17c] sm:$0xf]
      %v3876 = vld [vmem:[%s4 + $0x180] sm:$0xf]
      %v3877 = vld [vmem:[%s4 + $0x184] sm:$0xf]
      %v3878 = vld [vmem:[%s4 + $0x188] sm:$0xf]
      %v3879 = vld [vmem:[%s4 + $0x18c] sm:$0xf]
      %v3880 = vld [vmem:[%s4 + $0x190] sm:$0xf]
      %v3881 = vld [vmem:[%s4 + $0x194] sm:$0xf]
      %v3882 = vld [vmem:[%s4 + $0x198] sm:$0xf]
      %v3883 = vld [vmem:[%s4 + $0x19c] sm:$0xf]
      %v3884 = vld [vmem:[%s4 + $0x1a0] sm:$0xf]
      %v3885 = vld [vmem:[%s4 + $0x1a4] sm:$0xf]
      %v3886 = vld [vmem:[%s4 + $0x1a8] sm:$0xf]
      %v3887 = vld [vmem:[%s4 + $0x1ac] sm:$0xf]
      %v3888 = vld [vmem:[%s4 + $0x1b0] sm:$0xf]
      %v3889 = vld [vmem:[%s4 + $0x1b4] sm:$0xf]
      %v3890 = vld [vmem:[%s4 + $0x1b8] sm:$0xf]
      %v3891 = vld [vmem:[%s4 + $0x1bc] sm:$0xf]
      %v3892 = vld [vmem:[%s4 + $0x1c0] sm:$0xf]
      %v3893 = vld [vmem:[%s4 + $0x1c4] sm:$0xf]
      %v3894 = vld [vmem:[%s4 + $0x1c8] sm:$0xf]
      %v3895 = vld [vmem:[%s4 + $0x1cc] sm:$0xf]
      %v3896 = vld [vmem:[%s4 + $0x1d0] sm:$0xf]
      %v3897 = vld [vmem:[%s4 + $0x1d4] sm:$0xf]
      %v3898 = vld [vmem:[%s4 + $0x1d8] sm:$0xf]
      %v3899 = vld [vmem:[%s4 + $0x1dc] sm:$0xf]
      %v3900 = vld [vmem:[%s4 + $0x1e0] sm:$0xf]
      %v3901 = vld [vmem:[%s4 + $0x1e4] sm:$0xf]
      %v3902 = vld [vmem:[%s4 + $0x1e8] sm:$0xf]
      %v3903 = vld [vmem:[%s4 + $0x1ec] sm:$0xf]
      %v3904 = vld [vmem:[%s4 + $0x1f0] sm:$0xf]
      %v3905 = vld [vmem:[%s4 + $0x1f4] sm:$0xf]
      %v3906 = vld [vmem:[%s4 + $0x1f8] sm:$0xf]
      %v3907 = vld [vmem:[%s4 + $0x1fc] sm:$0xf]
      %v3908 = vld [vmem:[%s5] sm:$0x1]
      %v3910 = vlaneseq
      %v3911 = vshrl.u32 %v3910, 7
      %v3912 = vsub.s32 0, %v3911
      %v3913 = vrot.slane %v3908, %v3912
      %v4043 = vunpack.c.l.b16 %v3780
      %v4044 = vunpack.c.l.b16 %v3781
      %v4045 = vunpack.c.l.b16 %v3782
      %v4046 = vunpack.c.l.b16 %v3783
      %v4047 = vunpack.c.l.b16 %v3784
      %v4048 = vunpack.c.l.b16 %v3785
      %v4049 = vunpack.c.l.b16 %v3786
      %v4050 = vunpack.c.l.b16 %v3787
      %v4051 = vunpack.c.l.b16 %v3788
      %v4052 = vunpack.c.l.b16 %v3789
      %v4053 = vunpack.c.l.b16 %v3790
      %v4054 = vunpack.c.l.b16 %v3791
      %v4055 = vunpack.c.l.b16 %v3792
      %v4056 = vunpack.c.l.b16 %v3793
      %v4057 = vunpack.c.l.b16 %v3794
      %v4058 = vunpack.c.l.b16 %v3795
      %v4059 = vunpack.c.l.b16 %v3796
      %v4060 = vunpack.c.l.b16 %v3797
      %v4061 = vunpack.c.l.b16 %v3798
      %v4062 = vunpack.c.l.b16 %v3799
      %v4063 = vunpack.c.l.b16 %v3800
      %v4064 = vunpack.c.l.b16 %v3801
      %v4065 = vunpack.c.l.b16 %v3802
      %v4066 = vunpack.c.l.b16 %v3803
      %v4067 = vunpack.c.l.b16 %v3804
      %v4068 = vunpack.c.l.b16 %v3805
      %v4069 = vunpack.c.l.b16 %v3806
      %v4070 = vunpack.c.l.b16 %v3807
      %v4071 = vunpack.c.l.b16 %v3808
      %v4072 = vunpack.c.l.b16 %v3809
      %v4073 = vunpack.c.l.b16 %v3810
      %v4074 = vunpack.c.l.b16 %v3811
      %v4075 = vunpack.c.l.b16 %v3812
      %v4076 = vunpack.c.l.b16 %v3813
      %v4077 = vunpack.c.l.b16 %v3814
      %v4078 = vunpack.c.l.b16 %v3815
      %v4079 = vunpack.c.l.b16 %v3816
      %v4080 = vunpack.c.l.b16 %v3817
      %v4081 = vunpack.c.l.b16 %v3818
      %v4082 = vunpack.c.l.b16 %v3819
      %v4083 = vunpack.c.l.b16 %v3820
      %v4084 = vunpack.c.l.b16 %v3821
      %v4085 = vunpack.c.l.b16 %v3822
      %v4086 = vunpack.c.l.b16 %v3823
      %v4087 = vunpack.c.l.b16 %v3824
      %v4088 = vunpack.c.l.b16 %v3825
      %v4089 = vunpack.c.l.b16 %v3826
      %v4090 = vunpack.c.l.b16 %v3827
      %v4091 = vunpack.c.l.b16 %v3828
      %v4092 = vunpack.c.l.b16 %v3829
      %v4093 = vunpack.c.l.b16 %v3830
      %v4094 = vunpack.c.l.b16 %v3831
      %v4095 = vunpack.c.l.b16 %v3832
      %v4096 = vunpack.c.l.b16 %v3833
      %v4097 = vunpack.c.l.b16 %v3834
      %v4098 = vunpack.c.l.b16 %v3835
      %v4099 = vunpack.c.l.b16 %v3836
      %v4100 = vunpack.c.l.b16 %v3837
      %v4101 = vunpack.c.l.b16 %v3838
      %v4102 = vunpack.c.l.b16 %v3839
      %v4103 = vunpack.c.l.b16 %v3840
      %v4104 = vunpack.c.l.b16 %v3841
      %v4105 = vunpack.c.l.b16 %v3842
      %v4106 = vunpack.c.l.b16 %v3843
      %v4107 = vunpack.c.l.b16 %v3844
      %v4108 = vunpack.c.l.b16 %v3845
      %v4109 = vunpack.c.l.b16 %v3846
      %v4110 = vunpack.c.l.b16 %v3847
      %v4111 = vunpack.c.l.b16 %v3848
      %v4112 = vunpack.c.l.b16 %v3849
      %v4113 = vunpack.c.l.b16 %v3850
      %v4114 = vunpack.c.l.b16 %v3851
      %v4115 = vunpack.c.l.b16 %v3852
      %v4116 = vunpack.c.l.b16 %v3853
      %v4117 = vunpack.c.l.b16 %v3854
      %v4118 = vunpack.c.l.b16 %v3855
      %v4119 = vunpack.c.l.b16 %v3856
      %v4120 = vunpack.c.l.b16 %v3857
      %v4121 = vunpack.c.l.b16 %v3858
      %v4122 = vunpack.c.l.b16 %v3859
      %v4123 = vunpack.c.l.b16 %v3860
      %v4124 = vunpack.c.l.b16 %v3861
      %v4125 = vunpack.c.l.b16 %v3862
      %v4126 = vunpack.c.l.b16 %v3863
      %v4127 = vunpack.c.l.b16 %v3864
      %v4128 = vunpack.c.l.b16 %v3865
      %v4129 = vunpack.c.l.b16 %v3866
      %v4130 = vunpack.c.l.b16 %v3867
      %v4131 = vunpack.c.l.b16 %v3868
      %v4132 = vunpack.c.l.b16 %v3869
      %v4133 = vunpack.c.l.b16 %v3870
      %v4134 = vunpack.c.l.b16 %v3871
      %v4135 = vunpack.c.l.b16 %v3872
      %v4136 = vunpack.c.l.b16 %v3873
      %v4137 = vunpack.c.l.b16 %v3874
      %v4138 = vunpack.c.l.b16 %v3875
      %v4139 = vunpack.c.l.b16 %v3876
      %v4140 = vunpack.c.l.b16 %v3877
      %v4141 = vunpack.c.l.b16 %v3878
      %v4142 = vunpack.c.l.b16 %v3879
      %v4143 = vunpack.c.l.b16 %v3880
      %v4144 = vunpack.c.l.b16 %v3881
      %v4145 = vunpack.c.l.b16 %v3882
      %v4146 = vunpack.c.l.b16 %v3883
      %v4147 = vunpack.c.l.b16 %v3884
      %v4148 = vunpack.c.l.b16 %v3885
      %v4149 = vunpack.c.l.b16 %v3886
      %v4150 = vunpack.c.l.b16 %v3887
      %v4151 = vunpack.c.l.b16 %v3888
      %v4152 = vunpack.c.l.b16 %v3889
      %v4153 = vunpack.c.l.b16 %v3890
      %v4154 = vunpack.c.l.b16 %v3891
      %v4155 = vunpack.c.l.b16 %v3892
      %v4156 = vunpack.c.l.b16 %v3893
      %v4157 = vunpack.c.l.b16 %v3894
      %v4158 = vunpack.c.l.b16 %v3895
      %v4159 = vunpack.c.l.b16 %v3896
      %v4160 = vunpack.c.l.b16 %v3897
      %v4161 = vunpack.c.l.b16 %v3898
      %v4162 = vunpack.c.l.b16 %v3899
      %v4163 = vunpack.c.l.b16 %v3900
      %v4164 = vunpack.c.l.b16 %v3901
      %v4165 = vunpack.c.l.b16 %v3902
      %v4166 = vunpack.c.l.b16 %v3903
      %v4167 = vunpack.c.l.b16 %v3904
      %v4168 = vunpack.c.l.b16 %v3905
      %v4169 = vunpack.c.l.b16 %v3906
      %v4170 = vunpack.c.l.b16 %v3907
      %v4171 = vpack.c.b16 %v4044, %v4043
      %v4172 = vpack.c.b16 %v4046, %v4045
      %v4173 = vpack.c.b16 %v4048, %v4047
      %v4174 = vpack.c.b16 %v4050, %v4049
      %v4175 = vpack.c.b16 %v4052, %v4051
      %v4176 = vpack.c.b16 %v4054, %v4053
      %v4177 = vpack.c.b16 %v4056, %v4055
      %v4178 = vpack.c.b16 %v4058, %v4057
      %v4179 = vpack.c.b16 %v4060, %v4059
      %v4180 = vpack.c.b16 %v4062, %v4061
      %v4181 = vpack.c.b16 %v4064, %v4063
      %v4182 = vpack.c.b16 %v4066, %v4065
      %v4183 = vpack.c.b16 %v4068, %v4067
      %v4184 = vpack.c.b16 %v4070, %v4069
      %v4185 = vpack.c.b16 %v4072, %v4071
      %v4186 = vpack.c.b16 %v4074, %v4073
      %v4187 = vpack.c.b16 %v4076, %v4075
      %v4188 = vpack.c.b16 %v4078, %v4077
      %v4189 = vpack.c.b16 %v4080, %v4079
      %v4190 = vpack.c.b16 %v4082, %v4081
      %v4191 = vpack.c.b16 %v4084, %v4083
      %v4192 = vpack.c.b16 %v4086, %v4085
      %v4193 = vpack.c.b16 %v4088, %v4087
      %v4194 = vpack.c.b16 %v4090, %v4089
      %v4195 = vpack.c.b16 %v4092, %v4091
      %v4196 = vpack.c.b16 %v4094, %v4093
      %v4197 = vpack.c.b16 %v4096, %v4095
      %v4198 = vpack.c.b16 %v4098, %v4097
      %v4199 = vpack.c.b16 %v4100, %v4099
      %v4200 = vpack.c.b16 %v4102, %v4101
      %v4201 = vpack.c.b16 %v4104, %v4103
      %v4202 = vpack.c.b16 %v4106, %v4105
      %v4203 = vpack.c.b16 %v4108, %v4107
      %v4204 = vpack.c.b16 %v4110, %v4109
      %v4205 = vpack.c.b16 %v4112, %v4111
      %v4206 = vpack.c.b16 %v4114, %v4113
      %v4207 = vpack.c.b16 %v4116, %v4115
      %v4208 = vpack.c.b16 %v4118, %v4117
      %v4209 = vpack.c.b16 %v4120, %v4119
      %v4210 = vpack.c.b16 %v4122, %v4121
      %v4211 = vpack.c.b16 %v4124, %v4123
      %v4212 = vpack.c.b16 %v4126, %v4125
      %v4213 = vpack.c.b16 %v4128, %v4127
      %v4214 = vpack.c.b16 %v4130, %v4129
      %v4215 = vpack.c.b16 %v4132, %v4131
      %v4216 = vpack.c.b16 %v4134, %v4133
      %v4217 = vpack.c.b16 %v4136, %v4135
      %v4218 = vpack.c.b16 %v4138, %v4137
      %v4219 = vpack.c.b16 %v4140, %v4139
      %v4220 = vpack.c.b16 %v4142, %v4141
      %v4221 = vpack.c.b16 %v4144, %v4143
      %v4222 = vpack.c.b16 %v4146, %v4145
      %v4223 = vpack.c.b16 %v4148, %v4147
      %v4224 = vpack.c.b16 %v4150, %v4149
      %v4225 = vpack.c.b16 %v4152, %v4151
      %v4226 = vpack.c.b16 %v4154, %v4153
      %v4227 = vpack.c.b16 %v4156, %v4155
      %v4228 = vpack.c.b16 %v4158, %v4157
      %v4229 = vpack.c.b16 %v4160, %v4159
      %v4230 = vpack.c.b16 %v4162, %v4161
      %v4231 = vpack.c.b16 %v4164, %v4163
      %v4232 = vpack.c.b16 %v4166, %v4165
      %v4233 = vpack.c.b16 %v4168, %v4167
      %v4234 = vpack.c.b16 %v4170, %v4169
      %4299 = vmatprep.subr.bf16.mxu0 0
      %4300 = vmatpush1.bf16.msra.mxu0 %v4178
      %4301 = vmatprep.subr.bf16.mxu0 0
      %4302 = vmatpush1.bf16.msra.mxu0 %v4177
      %4303 = vmatprep.subr.bf16.mxu0 0
      %4304 = vmatpush1.bf16.msra.mxu0 %v4176
      %4305 = vmatprep.subr.bf16.mxu0 0
      %4306 = vmatpush1.bf16.msra.mxu0 %v4175
      %4307 = vmatprep.subr.bf16.mxu0 0
      %4308 = vmatpush1.bf16.msra.mxu0 %v4174
      %4309 = vmatprep.subr.bf16.mxu0 0
      %4310 = vmatpush1.bf16.msra.mxu0 %v4173
      %4311 = vmatprep.subr.bf16.mxu0 0
      %4312 = vmatpush1.bf16.msra.mxu0 %v4172
      %4313 = vmatprep.subr.bf16.mxu0 0
      %4314 = vmatpush1.bf16.msra.mxu0 %v4171
      %4315 = vmatprep.subr.bf16.mxu0 0
      %4316 = vmatpush2.bf16.msra.mxu0 %v4186
      %4317 = vmatprep.subr.bf16.mxu0 0
      %4318 = vmatpush2.bf16.msra.mxu0 %v4185
      %4319 = vmatprep.subr.bf16.mxu0 0
      %4320 = vmatpush2.bf16.msra.mxu0 %v4184
      %4321 = vmatprep.subr.bf16.mxu0 0
      %4322 = vmatpush2.bf16.msra.mxu0 %v4183
      %4323 = vmatprep.subr.bf16.mxu0 0
      %4324 = vmatpush2.bf16.msra.mxu0 %v4182
      %4325 = vmatprep.subr.bf16.mxu0 0
      %4326 = vmatpush2.bf16.msra.mxu0 %v4181
      %4327 = vmatprep.subr.bf16.mxu0 0
      %4328 = vmatpush2.bf16.msra.mxu0 %v4180
      %4329 = vmatprep.subr.bf16.mxu0 0
      %4330 = vmatpush2.bf16.msra.mxu0 %v4179
      %4331 = vmatprep.mubr.bf16.mxu0 %v3773
      %4332 = vmatmul.mubr.bf16.gmra.mxu0 %v3772
      %v4333 = vpop.f32.mrf.mxu0
      %v4334 = vadd.f32 %v3913, %v4333
      %v4335 = vpop.f32.mrf.mxu0
      %v4336 = vpop.f32.mrf.mxu0
      %v4337 = vpop.f32.mrf.mxu0
      %4338 = vdwg.mxu0
      %4339 = vmatprep.subr.bf16.mxu0 0
      %4340 = vmatpush1.bf16.msra.mxu0 %v4194
      %4341 = vmatprep.subr.bf16.mxu0 0
      %4342 = vmatpush1.bf16.msra.mxu0 %v4193
      %4343 = vmatprep.subr.bf16.mxu0 0
      %4344 = vmatpush1.bf16.msra.mxu0 %v4192
      %4345 = vmatprep.subr.bf16.mxu0 0
      %4346 = vmatpush1.bf16.msra.mxu0 %v4191
      %4347 = vmatprep.subr.bf16.mxu0 0
      %4348 = vmatpush1.bf16.msra.mxu0 %v4190
      %4349 = vmatprep.subr.bf16.mxu0 0
      %4350 = vmatpush1.bf16.msra.mxu0 %v4189
      %4351 = vmatprep.subr.bf16.mxu0 0
      %4352 = vmatpush1.bf16.msra.mxu0 %v4188
      %4353 = vmatprep.subr.bf16.mxu0 0
      %4354 = vmatpush1.bf16.msra.mxu0 %v4187
      %4355 = vmatprep.subr.bf16.mxu0 0
      %4356 = vmatpush2.bf16.msra.mxu0 %v4202
      %4357 = vmatprep.subr.bf16.mxu0 0
      %4358 = vmatpush2.bf16.msra.mxu0 %v4201
      %4359 = vmatprep.subr.bf16.mxu0 0
      %4360 = vmatpush2.bf16.msra.mxu0 %v4200
      %4361 = vmatprep.subr.bf16.mxu0 0
      %4362 = vmatpush2.bf16.msra.mxu0 %v4199
      %4363 = vmatprep.subr.bf16.mxu0 0
      %4364 = vmatpush2.bf16.msra.mxu0 %v4198
      %4365 = vmatprep.subr.bf16.mxu0 0
      %4366 = vmatpush2.bf16.msra.mxu0 %v4197
      %4367 = vmatprep.subr.bf16.mxu0 0
      %4368 = vmatpush2.bf16.msra.mxu0 %v4196
      %4369 = vmatprep.subr.bf16.mxu0 0
      %4370 = vmatpush2.bf16.msra.mxu0 %v4195
      %4371 = vmatprep.mubr.bf16.mxu0 %v3775
      %4372 = vmatmul.mubr.bf16.gmra.mxu0 %v3774
      %v4373 = vpop.f32.mrf.mxu0
      %v4374 = vadd.f32 %v4334, %v4373
      %v4375 = vpop.f32.mrf.mxu0
      %v4376 = vpop.f32.mrf.mxu0
      %v4377 = vpop.f32.mrf.mxu0
      %4378 = vdwg.mxu0
      %4379 = vmatprep.subr.bf16.mxu0 0
      %4380 = vmatpush1.bf16.msra.mxu0 %v4210
      %4381 = vmatprep.subr.bf16.mxu0 0
      %4382 = vmatpush1.bf16.msra.mxu0 %v4209
      %4383 = vmatprep.subr.bf16.mxu0 0
      %4384 = vmatpush1.bf16.msra.mxu0 %v4208
      %4385 = vmatprep.subr.bf16.mxu0 0
      %4386 = vmatpush1.bf16.msra.mxu0 %v4207
      %4387 = vmatprep.subr.bf16.mxu0 0
      %4388 = vmatpush1.bf16.msra.mxu0 %v4206
      %4389 = vmatprep.subr.bf16.mxu0 0
      %4390 = vmatpush1.bf16.msra.mxu0 %v4205
      %4391 = vmatprep.subr.bf16.mxu0 0
      %4392 = vmatpush1.bf16.msra.mxu0 %v4204
      %4393 = vmatprep.subr.bf16.mxu0 0
      %4394 = vmatpush1.bf16.msra.mxu0 %v4203
      %4395 = vmatprep.subr.bf16.mxu0 0
      %4396 = vmatpush2.bf16.msra.mxu0 %v4218
      %4397 = vmatprep.subr.bf16.mxu0 0
      %4398 = vmatpush2.bf16.msra.mxu0 %v4217
      %4399 = vmatprep.subr.bf16.mxu0 0
      %4400 = vmatpush2.bf16.msra.mxu0 %v4216
      %4401 = vmatprep.subr.bf16.mxu0 0
      %4402 = vmatpush2.bf16.msra.mxu0 %v4215
      %4403 = vmatprep.subr.bf16.mxu0 0
      %4404 = vmatpush2.bf16.msra.mxu0 %v4214
      %4405 = vmatprep.subr.bf16.mxu0 0
      %4406 = vmatpush2.bf16.msra.mxu0 %v4213
      %4407 = vmatprep.subr.bf16.mxu0 0
      %4408 = vmatpush2.bf16.msra.mxu0 %v4212
      %4409 = vmatprep.subr.bf16.mxu0 0
      %4410 = vmatpush2.bf16.msra.mxu0 %v4211
      %4411 = vmatprep.mubr.bf16.mxu0 %v3777
      %4412 = vmatmul.mubr.bf16.gmra.mxu0 %v3776
      %v4413 = vpop.f32.mrf.mxu0
      %v4414 = vadd.f32 %v4374, %v4413
      %v4415 = vpop.f32.mrf.mxu0
      %v4416 = vpop.f32.mrf.mxu0
      %v4417 = vpop.f32.mrf.mxu0
      %4418 = vdwg.mxu0
      %4419 = vmatprep.subr.bf16.mxu0 0
      %4420 = vmatpush1.bf16.msra.mxu0 %v4226
      %4421 = vmatprep.subr.bf16.mxu0 0
      %4422 = vmatpush1.bf16.msra.mxu0 %v4225
      %4423 = vmatprep.subr.bf16.mxu0 0
      %4424 = vmatpush1.bf16.msra.mxu0 %v4224
      %4425 = vmatprep.subr.bf16.mxu0 0
      %4426 = vmatpush1.bf16.msra.mxu0 %v4223
      %4427 = vmatprep.subr.bf16.mxu0 0
      %4428 = vmatpush1.bf16.msra.mxu0 %v4222
      %4429 = vmatprep.subr.bf16.mxu0 0
      %4430 = vmatpush1.bf16.msra.mxu0 %v4221
      %4431 = vmatprep.subr.bf16.mxu0 0
      %4432 = vmatpush1.bf16.msra.mxu0 %v4220
      %4433 = vmatprep.subr.bf16.mxu0 0
      %4434 = vmatpush1.bf16.msra.mxu0 %v4219
      %4435 = vmatprep.subr.bf16.mxu0 0
      %4436 = vmatpush2.bf16.msra.mxu0 %v4234
      %4437 = vmatprep.subr.bf16.mxu0 0
      %4438 = vmatpush2.bf16.msra.mxu0 %v4233
      %4439 = vmatprep.subr.bf16.mxu0 0
      %4440 = vmatpush2.bf16.msra.mxu0 %v4232
      %4441 = vmatprep.subr.bf16.mxu0 0
      %4442 = vmatpush2.bf16.msra.mxu0 %v4231
      %4443 = vmatprep.subr.bf16.mxu0 0
      %4444 = vmatpush2.bf16.msra.mxu0 %v4230
      %4445 = vmatprep.subr.bf16.mxu0 0
      %4446 = vmatpush2.bf16.msra.mxu0 %v4229
      %4447 = vmatprep.subr.bf16.mxu0 0
      %4448 = vmatpush2.bf16.msra.mxu0 %v4228
      %4449 = vmatprep.subr.bf16.mxu0 0
      %4450 = vmatpush2.bf16.msra.mxu0 %v4227
      %4451 = vmatprep.mubr.bf16.mxu0 %v3779
      %4452 = vmatmul.mubr.bf16.gmra.mxu0 %v3778
      %v4453 = vpop.f32.mrf.mxu0
      %v4454 = vadd.f32 %v4414, %v4453
      %v4455 = vpop.f32.mrf.mxu0
      %v4456 = vpop.f32.mrf.mxu0
      %v4457 = vpop.f32.mrf.mxu0
      %4458 = vdwg.mxu0
      %4459 = vst [vmem:[%s249] sm:$0xff] %v4454
      %p4460 = scmp.lt.s32.totalorder %s17, 1
      %s4461 = scalar_select %p4460, %s17, 1
      %s4462 = smul.addr %s4461, 8
      %s4463 = scalar_lea.vmem %s6, %s4462
      // Predicated region
      $region45: #{jigsaw_forward.1} parent=43 // pred_check
        %p4464 = pneg %p166
      $region46: #{jigsaw_forward.1} parent=43 // pred_check_branch
        %4466 = sbr.rel (%p4464) target = $region48
      $region47: #{jigsaw_forward.1} parent=43 // pred_region
        _
      $region48: #{jigsaw_forward.1} parent=43 // pred_fallthru
        _
    $region44: #{jigsaw_forward.1} parent=5 // pred_fallthru
      _
    %p4467 = scmp.le.s32.totalorder 2, %s12
    // Predicated region
    $region49: #{jigsaw_forward.1} parent=5 // pred_check
      %p4468 = pneg %p4467
    $region50: #{jigsaw_forward.1} parent=5 // pred_check_branch
      %4470 = sbr.rel (%p4468) target = $region52
    $region51: #{jigsaw_forward.1} parent=5 // pred_region
      %s4471 = ssub.s32 %s12, 2
      // Predicated region
      $region53: #{jigsaw_forward.1} parent=51 // pred_check
        %p4472 = pneg %p172
      $region54: #{jigsaw_forward.1} parent=51 // pred_check_branch
        %4474 = sbr.rel (%p4472) target = $region56
      $region55: #{jigsaw_forward.1} parent=51 // pred_region
        %p4475 = scmp.lt.s32.totalorder %s18, 1
        %s4476 = scalar_select %p4475, %s18, 1
        %s4477 = smul.addr %s4476, 8
        %s4478 = scalar_lea.vmem %s6, %s4477
      $region56: #{jigsaw_forward.1} parent=51 // pred_fallthru
        _
    $region52: #{jigsaw_forward.1} parent=5 // pred_fallthru
      _
  $region6: #{jigsaw_forward.1} parent=0 // loop_footer
    %s16 = sadd.s32 1, %s12
  $region7: #{jigsaw_forward.1} parent=0 // loop_footer_branch
    %11 = sbr.rel target = $region3
  $region8: #{jigsaw_forward.1} parent=0 // loop_exit
    _

</llo_original>
